<compile_context>
chip_gen: v7x
topology: tpu7x:2x2x1
jax: 0.10.0
libtpu: 0.0.40
codegen_flags: <defaults>
</compile_context>

<pallas_src>
import functools

import jax
import jax.numpy as jnp
from jax import lax
from jax.experimental import pallas as pl
from jax.experimental.pallas import tpu as pltpu


def _round_up(x, m):
    return ((x + m - 1) // m) * m


def _pick_images_per_block(n):
    """Largest divisor of n that is <= min(8, ceil(n/2)) (keeps >=2 grid steps when n>=2)."""
    cap = max(1, min(8, (n + 1) // 2))
    nb = 1
    for d in range(1, cap + 1):
        if n % d == 0:
            nb = d
    return nb


def _conv4x4s2_kernel(x_ref, w_ref, b_ref, o_ref, *, m_acc, w2, apply_lrelu, neg_slope):
    """Conv2d(k=4, s=2, p=1) + bias (+ LeakyReLU) for one block of images.

    x_ref: (R, 4*Cin)        bf16  flat space-to-depth rows (per-image row stride = W2)
    w_ref: (4, 4*Cin, CoutP) bf16  tap-group weights, group g = gh*2 + gw
    b_ref: (1, CoutP)        f32
    o_ref: (M_acc, CoutP)    bf16  flat output rows (row m -> (oh, ow) = (m//W2, m%W2))
    """
    acc = None
    for g, off in enumerate((0, 1, w2, w2 + 1)):          # (gh, gw) in {0,1}^2
        lhs = x_ref[pl.ds(off, m_acc), :]                  # (M_acc, 4*Cin) bf16
        part = jnp.dot(lhs, w_ref[g], preferred_element_type=jnp.float32)
        acc = part if acc is None else acc + part
    acc = acc + b_ref[...]                                 # f32 epilogue
    if apply_lrelu:
        acc = jnp.where(acc >= 0, acc, neg_slope * acc)
    o_ref[...] = acc.astype(o_ref.dtype)                   # single lane-dense store


def _space_to_depth_flat(x_nhwc, m_img):
    """Zero-pad H/W by 1, fold the 2x2 stride phase into channels, flatten rows (bf16).

    Per-image row i*W2+j holds input pixel (2i+ph-1, 2j+pw-1) at channel (ph*2+pw)*C+c
    (zeros outside the image); rows padded to m_img so tap-offset slices stay in bounds.
    """
    N, H, W, C = x_nhwc.shape
    H2, W2 = H // 2 + 1, W // 2 + 1
    xp = jnp.pad(x_nhwc.astype(jnp.bfloat16), ((0, 0), (1, 1), (1, 1), (0, 0)))
    xf = xp.reshape(N, H2, 2, W2, 2, C).transpose(0, 1, 3, 2, 4, 5)
    xf = xf.reshape(N, H2 * W2, 4 * C)
    xf = jnp.pad(xf, ((0, 0), (0, m_img - H2 * W2), (0, 0)))
    return xf.reshape(N * m_img, 4 * C)


def _weight_to_groups(w_oihw):
    """(Cout, Cin, 4, 4) -> (4, 4*Cin, Cout); group g = gh*2+gw, row = (ph*2+pw)*Cin+c."""
    Cout, Cin, _, _ = w_oihw.shape
    wt = jnp.transpose(w_oihw, (2, 3, 1, 0))               # (kh, kw, cin, cout)
    wt = wt.reshape(2, 2, 2, 2, Cin, Cout)                 # (gh, ph, gw, pw, c, o)
    wt = jnp.transpose(wt, (0, 2, 1, 3, 4, 5))             # (gh, gw, ph, pw, c, o)
    return wt.reshape(4, 4 * Cin, Cout)


def conv4x4_s2_lrelu(x_nhwc, w_oihw, bias, *, apply_lrelu, neg_slope=0.2):
    """Conv2d(k=4, s=2, p=1) + bias (+ LeakyReLU) as one Pallas TPU kernel call."""
    N, H, W, Cin = x_nhwc.shape
    Cout = w_oihw.shape[0]
    assert H % 2 == 0 and W % 2 == 0, (H, W)
    Ho, Wo = H // 2, W // 2
    H2, W2 = Ho + 1, Wo + 1

    tail = _round_up(W2 + 1, 8)             # per-image tail so tap offsets stay in range
    m_img = _round_up(Ho * W2 + tail, 8)    # rows per image (>= H2*W2, multiple of 8)
    nb = _pick_images_per_block(N)          # images folded into one grid step / matmul M
    n_blocks = N // nb
    rows = nb * m_img                       # input rows per grid step
    m_acc = rows - tail                     # matmul M / stored rows per grid step
    cout_p = _round_up(Cout, 128)           # lane-dense output stores

    x_flat = _space_to_depth_flat(x_nhwc, m_img)           # (N*m_img, 4*Cin) bf16
    wt = _weight_to_groups(w_oihw)                          # (4, 4*Cin, Cout)
    b = bias
    if cout_p != Cout:
        wt = jnp.pad(wt, ((0, 0), (0, 0), (0, cout_p - Cout)))
        b = jnp.pad(bias, (0, cout_p - Cout))
    wt = wt.astype(jnp.bfloat16)                            # bf16 MXU operands
    b = b.reshape(1, cout_p).astype(jnp.float32)

    kernel = functools.partial(_conv4x4s2_kernel, m_acc=m_acc, w2=W2,
                               apply_lrelu=apply_lrelu, neg_slope=neg_slope)
    flops = 2 * n_blocks * m_acc * 4 * (4 * Cin) * cout_p
    bytes_accessed = (N * m_img * 4 * Cin * 2 + 4 * 4 * Cin * cout_p * 2
                      + cout_p * 4 + n_blocks * m_acc * cout_p * 2)

    out = pl.pallas_call(
        kernel,
        out_shape=jax.ShapeDtypeStruct((n_blocks, m_acc, cout_p), jnp.bfloat16),
        grid=(n_blocks,),
        in_specs=[
            # one block of images' flat space-to-depth rows per grid step
            pl.BlockSpec((rows, 4 * Cin), lambda i: (i, 0)),
            # weights / bias: constant index_map -> fetched once, VMEM-resident
            pl.BlockSpec((4, 4 * Cin, cout_p), lambda i: (0, 0, 0)),
            pl.BlockSpec((1, cout_p), lambda i: (0, 0)),
        ],
        out_specs=pl.BlockSpec((None, m_acc, cout_p), lambda i: (i, 0, 0)),
        compiler_params=pltpu.CompilerParams(
            dimension_semantics=("parallel",),              # batch blocks across TCs
            vmem_limit_bytes=32 * 1024 * 1024,
        ),
        cost_estimate=pl.CostEstimate(flops=flops, transcendentals=0,
                                      bytes_accessed=bytes_accessed),
    )(x_flat, wt, b)

    # (n_blocks, m_acc, cout_p) -> (N, Ho, Wo, Cout): restore per-image row slabs, drop
    # the halo column (ow == Wo), the padded channels and the tail rows.
    out = jnp.pad(out, ((0, 0), (0, tail), (0, 0)))         # (n_blocks, rows, cout_p)
    out = out.reshape(N, m_img, cout_p)[:, :Ho * W2, :Cout]
    out = out.reshape(N, Ho, W2, Cout)[:, :, :Wo, :]
    return out                                              # bf16 NHWC


@jax.jit
def latent_discriminator_forward(params, x_nchw):
    x = jnp.transpose(x_nchw, (0, 2, 3, 1))                 # NCHW -> NHWC
    n = len(params)
    for i, (w, b) in enumerate(params):
        x = conv4x4_s2_lrelu(x, w, b, apply_lrelu=(i < n - 1))
    return jnp.transpose(x, (0, 3, 1, 2)).astype(jnp.float32)   # NHWC -> NCHW


class LatentDiscriminatorPallas:
    """JAX/Pallas port of Latent_Discriminator."""

    def __init__(self, num_classes, ndf=64, key=None):
        if key is None:
            key = jax.random.PRNGKey(0)
        chans = [num_classes, ndf, ndf * 2, ndf * 4, ndf * 8, 1]
        self.params = []
        for i in range(5):
            key, wk, bk = jax.random.split(key, 3)
            cin, cout = chans[i], chans[i + 1]
            fan_in = cin * 4 * 4
            bound = 1.0 / (fan_in ** 0.5)   # deterministic, PyTorch-like uniform init
            w = jax.random.uniform(wk, (cout, cin, 4, 4), jnp.float32, -bound, bound)
            b = jax.random.uniform(bk, (cout,), jnp.float32, -bound, bound)
            self.params.append((w, b))

    def __call__(self, x_nchw):
        return latent_discriminator_forward(self.params, x_nchw)


def reference_forward(x_nchw, params):
    """Pure-JAX (XLA conv, f32) reference for correctness."""
    x = x_nchw
    for i, (w, b) in enumerate(params):
        x = lax.conv_general_dilated(
            x, w, window_strides=(2, 2), padding=((1, 1), (1, 1)),
            dimension_numbers=("NCHW", "OIHW", "NCHW"))
        x = x + b.reshape(1, -1, 1, 1)
        if i < 4:
            x = jnp.where(x >= 0, x, 0.2 * x)
    return x


if __name__ == "__main__":
    num_classes, ndf = 4, 16
    batch, spatial = 2, 32  # 32 -> 16 -> 8 -> 4 -> 2 -> 1 under five stride-2 convs

    key = jax.random.PRNGKey(0)
    key, xk = jax.random.split(key)
    x = jax.random.normal(xk, (batch, num_classes, spatial, spatial), jnp.float32)

    model = LatentDiscriminatorPallas(num_classes, ndf=ndf, key=key)

    out = jax.block_until_ready(model(x))
    assert out.shape == (batch, 1, 1, 1), out.shape

    ref = jax.block_until_ready(reference_forward(x, model.params))
    max_err = float(jnp.max(jnp.abs(out - ref)))
    # bf16 activations + bf16 MXU operands (f32 accumulation) over 5 stacked layers
    # -> compare against the f32 reference loosely.
    assert jnp.allclose(out, ref, rtol=1e-1, atol=5e-2), max_err

    print("KERNEL_OK")
</pallas_src>

<mosaic_0001>
module attributes {stable_mosaic.version = 11 : i64} {
  func.func @_conv4x4s2_kernel(%arg0: i32, %arg1: memref<296x16xbf16, #tpu.memory_space<vmem>>, %arg2: memref<4x16x128xbf16, #tpu.memory_space<vmem>>, %arg3: memref<1x128xf32, #tpu.memory_space<vmem>>, %arg4: memref<1x272x128xbf16, #tpu.memory_space<vmem>>) attributes {dimension_semantics = [#tpu.dimension_semantics<parallel>], iteration_bounds = array<i64: 2>, scalar_prefetch = 0 : i64, scratch_operands = 0 : i64, tpu.core_type = #tpu.core_type<tc>, window_params = [{transform_indices = @transform_0, window_bounds = array<i64: 296, 16>}, {pipeline_mode = #tpu.pipeline_mode<synchronous>, transform_indices = @transform_1, window_bounds = array<i64: 4, 16, 128>}, {pipeline_mode = #tpu.pipeline_mode<synchronous>, transform_indices = @transform_2, window_bounds = array<i64: 1, 128>}, {transform_indices = @transform_3, window_bounds = array<i64: 1, 272, 128>}]} {
    %c0 = arith.constant 0 : index
    %c0_0 = arith.constant 0 : index
    %0 = vector.load %arg1[%c0, %c0_0] : memref<296x16xbf16, #tpu.memory_space<vmem>>, vector<272x16xbf16>
    %c0_1 = arith.constant 0 : index
    %c0_2 = arith.constant 0 : index
    %c0_3 = arith.constant 0 : index
    %1 = vector.load %arg2[%c0_1, %c0_2, %c0_3] : memref<4x16x128xbf16, #tpu.memory_space<vmem>>, vector<1x16x128xbf16>
    %2 = vector.shape_cast %1 : vector<1x16x128xbf16> to vector<16x128xbf16>
    %cst = arith.constant dense<0.000000e+00> : vector<272x128xf32>
    %3 = tpu.matmul %0, %2, %cst {dimension_numbers = #tpu.dot_dimension_numbers<[1], [0], [0], [1], [0, 0, 1, 1], [], []>} : vector<272x16xbf16>, vector<16x128xbf16>, vector<272x128xf32> -> vector<272x128xf32>
    %c1 = arith.constant 1 : index
    %c0_4 = arith.constant 0 : index
    %4 = vector.load %arg1[%c1, %c0_4] : memref<296x16xbf16, #tpu.memory_space<vmem>>, vector<272x16xbf16>
    %c1_5 = arith.constant 1 : index
    %c0_6 = arith.constant 0 : index
    %c0_7 = arith.constant 0 : index
    %5 = vector.load %arg2[%c1_5, %c0_6, %c0_7] : memref<4x16x128xbf16, #tpu.memory_space<vmem>>, vector<1x16x128xbf16>
    %6 = vector.shape_cast %5 : vector<1x16x128xbf16> to vector<16x128xbf16>
    %cst_8 = arith.constant dense<0.000000e+00> : vector<272x128xf32>
    %7 = tpu.matmul %4, %6, %cst_8 {dimension_numbers = #tpu.dot_dimension_numbers<[1], [0], [0], [1], [0, 0, 1, 1], [], []>} : vector<272x16xbf16>, vector<16x128xbf16>, vector<272x128xf32> -> vector<272x128xf32>
    %8 = arith.addf %3, %7 : vector<272x128xf32>
    %c17 = arith.constant 17 : index
    %c0_9 = arith.constant 0 : index
    %9 = vector.load %arg1[%c17, %c0_9] : memref<296x16xbf16, #tpu.memory_space<vmem>>, vector<272x16xbf16>
    %c2 = arith.constant 2 : index
    %c0_10 = arith.constant 0 : index
    %c0_11 = arith.constant 0 : index
    %10 = vector.load %arg2[%c2, %c0_10, %c0_11] : memref<4x16x128xbf16, #tpu.memory_space<vmem>>, vector<1x16x128xbf16>
    %11 = vector.shape_cast %10 : vector<1x16x128xbf16> to vector<16x128xbf16>
    %cst_12 = arith.constant dense<0.000000e+00> : vector<272x128xf32>
    %12 = tpu.matmul %9, %11, %cst_12 {dimension_numbers = #tpu.dot_dimension_numbers<[1], [0], [0], [1], [0, 0, 1, 1], [], []>} : vector<272x16xbf16>, vector<16x128xbf16>, vector<272x128xf32> -> vector<272x128xf32>
    %13 = arith.addf %8, %12 : vector<272x128xf32>
    %c18 = arith.constant 18 : index
    %c0_13 = arith.constant 0 : index
    %14 = vector.load %arg1[%c18, %c0_13] : memref<296x16xbf16, #tpu.memory_space<vmem>>, vector<272x16xbf16>
    %c3 = arith.constant 3 : index
    %c0_14 = arith.constant 0 : index
    %c0_15 = arith.constant 0 : index
    %15 = vector.load %arg2[%c3, %c0_14, %c0_15] : memref<4x16x128xbf16, #tpu.memory_space<vmem>>, vector<1x16x128xbf16>
    %16 = vector.shape_cast %15 : vector<1x16x128xbf16> to vector<16x128xbf16>
    %cst_16 = arith.constant dense<0.000000e+00> : vector<272x128xf32>
    %17 = tpu.matmul %14, %16, %cst_16 {dimension_numbers = #tpu.dot_dimension_numbers<[1], [0], [0], [1], [0, 0, 1, 1], [], []>} : vector<272x16xbf16>, vector<16x128xbf16>, vector<272x128xf32> -> vector<272x128xf32>
    %18 = arith.addf %13, %17 : vector<272x128xf32>
    %c0_17 = arith.constant 0 : index
    %c0_18 = arith.constant 0 : index
    %19 = vector.load %arg3[%c0_17, %c0_18] : memref<1x128xf32, #tpu.memory_space<vmem>>, vector<1x128xf32>
    %20 = vector.broadcast %19 : vector<1x128xf32> to vector<272x128xf32>
    %21 = arith.addf %18, %20 : vector<272x128xf32>
    %cst_19 = arith.constant 0.000000e+00 : f32
    %22 = vector.broadcast %cst_19 : f32 to vector<272x128xf32>
    %23 = arith.cmpf oge, %21, %22 : vector<272x128xf32>
    %cst_20 = arith.constant 2.000000e-01 : f32
    %24 = vector.broadcast %cst_20 : f32 to vector<272x128xf32>
    %25 = arith.mulf %24, %21 : vector<272x128xf32>
    %26 = arith.select %23, %21, %25 : vector<272x128xi1>, vector<272x128xf32>
    %27 = arith.truncf %26 : vector<272x128xf32> to vector<272x128xbf16>
    %c0_21 = arith.constant 0 : index
    %c0_22 = arith.constant 0 : index
    %c0_23 = arith.constant 0 : index
    %28 = vector.load %arg4[%c0_21, %c0_22, %c0_23] : memref<1x272x128xbf16, #tpu.memory_space<vmem>>, vector<1x272x128xbf16>
    %29 = vector.shape_cast %28 : vector<1x272x128xbf16> to vector<272x128xbf16>
    %30 = vector.shape_cast %27 : vector<272x128xbf16> to vector<1x272x128xbf16>
    tpu.vector_store %arg4[%c0_21, %c0_22, %c0_23], %30 {strides = array<i32>} : memref<1x272x128xbf16, #tpu.memory_space<vmem>>, vector<1x272x128xbf16>,
    return
  }
  func.func @transform_0(%arg0: i32) -> (i32, i32) {
    %c0_i32 = arith.constant 0 : i32
    %c0_i32_0 = arith.constant 0 : i32
    return %arg0, %c0_i32 : i32, i32
  }
  func.func @transform_1(%arg0: i32) -> (i32, i32, i32) {
    %c0_i32 = arith.constant 0 : i32
    %c0_i32_0 = arith.constant 0 : i32
    %c0_i32_1 = arith.constant 0 : i32
    %c0_i32_2 = arith.constant 0 : i32
    return %c0_i32, %c0_i32_0, %c0_i32_1 : i32, i32, i32
  }
  func.func @transform_2(%arg0: i32) -> (i32, i32) {
    %c0_i32 = arith.constant 0 : i32
    %c0_i32_0 = arith.constant 0 : i32
    %c0_i32_1 = arith.constant 0 : i32
    return %c0_i32, %c0_i32_0 : i32, i32
  }
  func.func @transform_3(%arg0: i32) -> (i32, i32, i32) {
    %c0_i32 = arith.constant 0 : i32
    %c0_i32_0 = arith.constant 0 : i32
    %c0_i32_1 = arith.constant 0 : i32
    return %arg0, %c0_i32, %c0_i32_0 : i32, i32, i32
  }
}

module attributes {stable_mosaic.version = 11 : i64} {
  func.func @_conv4x4s2_kernel(%arg0: i32, %arg1: memref<88x64xbf16, #tpu.memory_space<vmem>>, %arg2: memref<4x64x128xbf16, #tpu.memory_space<vmem>>, %arg3: memref<1x128xf32, #tpu.memory_space<vmem>>, %arg4: memref<1x72x128xbf16, #tpu.memory_space<vmem>>) attributes {dimension_semantics = [#tpu.dimension_semantics<parallel>], iteration_bounds = array<i64: 2>, scalar_prefetch = 0 : i64, scratch_operands = 0 : i64, tpu.core_type = #tpu.core_type<tc>, window_params = [{transform_indices = @transform_0, window_bounds = array<i64: 88, 64>}, {pipeline_mode = #tpu.pipeline_mode<synchronous>, transform_indices = @transform_1, window_bounds = array<i64: 4, 64, 128>}, {pipeline_mode = #tpu.pipeline_mode<synchronous>, transform_indices = @transform_2, window_bounds = array<i64: 1, 128>}, {transform_indices = @transform_3, window_bounds = array<i64: 1, 72, 128>}]} {
    %c0 = arith.constant 0 : index
    %c0_0 = arith.constant 0 : index
    %0 = vector.load %arg1[%c0, %c0_0] : memref<88x64xbf16, #tpu.memory_space<vmem>>, vector<72x64xbf16>
    %c0_1 = arith.constant 0 : index
    %c0_2 = arith.constant 0 : index
    %c0_3 = arith.constant 0 : index
    %1 = vector.load %arg2[%c0_1, %c0_2, %c0_3] : memref<4x64x128xbf16, #tpu.memory_space<vmem>>, vector<1x64x128xbf16>
    %2 = vector.shape_cast %1 : vector<1x64x128xbf16> to vector<64x128xbf16>
    %cst = arith.constant dense<0.000000e+00> : vector<72x128xf32>
    %3 = tpu.matmul %0, %2, %cst {dimension_numbers = #tpu.dot_dimension_numbers<[1], [0], [0], [1], [0, 0, 1, 1], [], []>} : vector<72x64xbf16>, vector<64x128xbf16>, vector<72x128xf32> -> vector<72x128xf32>
    %c1 = arith.constant 1 : index
    %c0_4 = arith.constant 0 : index
    %4 = vector.load %arg1[%c1, %c0_4] : memref<88x64xbf16, #tpu.memory_space<vmem>>, vector<72x64xbf16>
    %c1_5 = arith.constant 1 : index
    %c0_6 = arith.constant 0 : index
    %c0_7 = arith.constant 0 : index
    %5 = vector.load %arg2[%c1_5, %c0_6, %c0_7] : memref<4x64x128xbf16, #tpu.memory_space<vmem>>, vector<1x64x128xbf16>
    %6 = vector.shape_cast %5 : vector<1x64x128xbf16> to vector<64x128xbf16>
    %cst_8 = arith.constant dense<0.000000e+00> : vector<72x128xf32>
    %7 = tpu.matmul %4, %6, %cst_8 {dimension_numbers = #tpu.dot_dimension_numbers<[1], [0], [0], [1], [0, 0, 1, 1], [], []>} : vector<72x64xbf16>, vector<64x128xbf16>, vector<72x128xf32> -> vector<72x128xf32>
    %8 = arith.addf %3, %7 : vector<72x128xf32>
    %c9 = arith.constant 9 : index
    %c0_9 = arith.constant 0 : index
    %9 = vector.load %arg1[%c9, %c0_9] : memref<88x64xbf16, #tpu.memory_space<vmem>>, vector<72x64xbf16>
    %c2 = arith.constant 2 : index
    %c0_10 = arith.constant 0 : index
    %c0_11 = arith.constant 0 : index
    %10 = vector.load %arg2[%c2, %c0_10, %c0_11] : memref<4x64x128xbf16, #tpu.memory_space<vmem>>, vector<1x64x128xbf16>
    %11 = vector.shape_cast %10 : vector<1x64x128xbf16> to vector<64x128xbf16>
    %cst_12 = arith.constant dense<0.000000e+00> : vector<72x128xf32>
    %12 = tpu.matmul %9, %11, %cst_12 {dimension_numbers = #tpu.dot_dimension_numbers<[1], [0], [0], [1], [0, 0, 1, 1], [], []>} : vector<72x64xbf16>, vector<64x128xbf16>, vector<72x128xf32> -> vector<72x128xf32>
    %13 = arith.addf %8, %12 : vector<72x128xf32>
    %c10 = arith.constant 10 : index
    %c0_13 = arith.constant 0 : index
    %14 = vector.load %arg1[%c10, %c0_13] : memref<88x64xbf16, #tpu.memory_space<vmem>>, vector<72x64xbf16>
    %c3 = arith.constant 3 : index
    %c0_14 = arith.constant 0 : index
    %c0_15 = arith.constant 0 : index
    %15 = vector.load %arg2[%c3, %c0_14, %c0_15] : memref<4x64x128xbf16, #tpu.memory_space<vmem>>, vector<1x64x128xbf16>
    %16 = vector.shape_cast %15 : vector<1x64x128xbf16> to vector<64x128xbf16>
    %cst_16 = arith.constant dense<0.000000e+00> : vector<72x128xf32>
    %17 = tpu.matmul %14, %16, %cst_16 {dimension_numbers = #tpu.dot_dimension_numbers<[1], [0], [0], [1], [0, 0, 1, 1], [], []>} : vector<72x64xbf16>, vector<64x128xbf16>, vector<72x128xf32> -> vector<72x128xf32>
    %18 = arith.addf %13, %17 : vector<72x128xf32>
    %c0_17 = arith.constant 0 : index
    %c0_18 = arith.constant 0 : index
    %19 = vector.load %arg3[%c0_17, %c0_18] : memref<1x128xf32, #tpu.memory_space<vmem>>, vector<1x128xf32>
    %20 = vector.broadcast %19 : vector<1x128xf32> to vector<72x128xf32>
    %21 = arith.addf %18, %20 : vector<72x128xf32>
    %cst_19 = arith.constant 0.000000e+00 : f32
    %22 = vector.broadcast %cst_19 : f32 to vector<72x128xf32>
    %23 = arith.cmpf oge, %21, %22 : vector<72x128xf32>
    %cst_20 = arith.constant 2.000000e-01 : f32
    %24 = vector.broadcast %cst_20 : f32 to vector<72x128xf32>
    %25 = arith.mulf %24, %21 : vector<72x128xf32>
    %26 = arith.select %23, %21, %25 : vector<72x128xi1>, vector<72x128xf32>
    %27 = arith.truncf %26 : vector<72x128xf32> to vector<72x128xbf16>
    %c0_21 = arith.constant 0 : index
    %c0_22 = arith.constant 0 : index
    %c0_23 = arith.constant 0 : index
    %28 = vector.load %arg4[%c0_21, %c0_22, %c0_23] : memref<1x72x128xbf16, #tpu.memory_space<vmem>>, vector<1x72x128xbf16>
    %29 = vector.shape_cast %28 : vector<1x72x128xbf16> to vector<72x128xbf16>
    %30 = vector.shape_cast %27 : vector<72x128xbf16> to vector<1x72x128xbf16>
    tpu.vector_store %arg4[%c0_21, %c0_22, %c0_23], %30 {strides = array<i32>} : memref<1x72x128xbf16, #tpu.memory_space<vmem>>, vector<1x72x128xbf16>,
    return
  }
  func.func @transform_0(%arg0: i32) -> (i32, i32) {
    %c0_i32 = arith.constant 0 : i32
    %c0_i32_0 = arith.constant 0 : i32
    return %arg0, %c0_i32 : i32, i32
  }
  func.func @transform_1(%arg0: i32) -> (i32, i32, i32) {
    %c0_i32 = arith.constant 0 : i32
    %c0_i32_0 = arith.constant 0 : i32
    %c0_i32_1 = arith.constant 0 : i32
    %c0_i32_2 = arith.constant 0 : i32
    return %c0_i32, %c0_i32_0, %c0_i32_1 : i32, i32, i32
  }
  func.func @transform_2(%arg0: i32) -> (i32, i32) {
    %c0_i32 = arith.constant 0 : i32
    %c0_i32_0 = arith.constant 0 : i32
    %c0_i32_1 = arith.constant 0 : i32
    return %c0_i32, %c0_i32_0 : i32, i32
  }
  func.func @transform_3(%arg0: i32) -> (i32, i32, i32) {
    %c0_i32 = arith.constant 0 : i32
    %c0_i32_0 = arith.constant 0 : i32
    %c0_i32_1 = arith.constant 0 : i32
    return %arg0, %c0_i32, %c0_i32_0 : i32, i32, i32
  }
}

module attributes {stable_mosaic.version = 11 : i64} {
  func.func @_conv4x4s2_kernel(%arg0: i32, %arg1: memref<32x128xbf16, #tpu.memory_space<vmem>>, %arg2: memref<4x128x128xbf16, #tpu.memory_space<vmem>>, %arg3: memref<1x128xf32, #tpu.memory_space<vmem>>, %arg4: memref<1x24x128xbf16, #tpu.memory_space<vmem>>) attributes {dimension_semantics = [#tpu.dimension_semantics<parallel>], iteration_bounds = array<i64: 2>, scalar_prefetch = 0 : i64, scratch_operands = 0 : i64, tpu.core_type = #tpu.core_type<tc>, window_params = [{transform_indices = @transform_0, window_bounds = array<i64: 32, 128>}, {pipeline_mode = #tpu.pipeline_mode<synchronous>, transform_indices = @transform_1, window_bounds = array<i64: 4, 128, 128>}, {pipeline_mode = #tpu.pipeline_mode<synchronous>, transform_indices = @transform_2, window_bounds = array<i64: 1, 128>}, {transform_indices = @transform_3, window_bounds = array<i64: 1, 24, 128>}]} {
    %c0 = arith.constant 0 : index
    %c0_0 = arith.constant 0 : index
    %0 = vector.load %arg1[%c0, %c0_0] : memref<32x128xbf16, #tpu.memory_space<vmem>>, vector<24x128xbf16>
    %c0_1 = arith.constant 0 : index
    %c0_2 = arith.constant 0 : index
    %c0_3 = arith.constant 0 : index
    %1 = vector.load %arg2[%c0_1, %c0_2, %c0_3] : memref<4x128x128xbf16, #tpu.memory_space<vmem>>, vector<1x128x128xbf16>
    %2 = vector.shape_cast %1 : vector<1x128x128xbf16> to vector<128x128xbf16>
    %cst = arith.constant dense<0.000000e+00> : vector<24x128xf32>
    %3 = tpu.matmul %0, %2, %cst {dimension_numbers = #tpu.dot_dimension_numbers<[1], [0], [0], [1], [0, 0, 1, 1], [], []>} : vector<24x128xbf16>, vector<128x128xbf16>, vector<24x128xf32> -> vector<24x128xf32>
    %c1 = arith.constant 1 : index
    %c0_4 = arith.constant 0 : index
    %4 = vector.load %arg1[%c1, %c0_4] : memref<32x128xbf16, #tpu.memory_space<vmem>>, vector<24x128xbf16>
    %c1_5 = arith.constant 1 : index
    %c0_6 = arith.constant 0 : index
    %c0_7 = arith.constant 0 : index
    %5 = vector.load %arg2[%c1_5, %c0_6, %c0_7] : memref<4x128x128xbf16, #tpu.memory_space<vmem>>, vector<1x128x128xbf16>
    %6 = vector.shape_cast %5 : vector<1x128x128xbf16> to vector<128x128xbf16>
    %cst_8 = arith.constant dense<0.000000e+00> : vector<24x128xf32>
    %7 = tpu.matmul %4, %6, %cst_8 {dimension_numbers = #tpu.dot_dimension_numbers<[1], [0], [0], [1], [0, 0, 1, 1], [], []>} : vector<24x128xbf16>, vector<128x128xbf16>, vector<24x128xf32> -> vector<24x128xf32>
    %8 = arith.addf %3, %7 : vector<24x128xf32>
    %c5 = arith.constant 5 : index
    %c0_9 = arith.constant 0 : index
    %9 = vector.load %arg1[%c5, %c0_9] : memref<32x128xbf16, #tpu.memory_space<vmem>>, vector<24x128xbf16>
    %c2 = arith.constant 2 : index
    %c0_10 = arith.constant 0 : index
    %c0_11 = arith.constant 0 : index
    %10 = vector.load %arg2[%c2, %c0_10, %c0_11] : memref<4x128x128xbf16, #tpu.memory_space<vmem>>, vector<1x128x128xbf16>
    %11 = vector.shape_cast %10 : vector<1x128x128xbf16> to vector<128x128xbf16>
    %cst_12 = arith.constant dense<0.000000e+00> : vector<24x128xf32>
    %12 = tpu.matmul %9, %11, %cst_12 {dimension_numbers = #tpu.dot_dimension_numbers<[1], [0], [0], [1], [0, 0, 1, 1], [], []>} : vector<24x128xbf16>, vector<128x128xbf16>, vector<24x128xf32> -> vector<24x128xf32>
    %13 = arith.addf %8, %12 : vector<24x128xf32>
    %c6 = arith.constant 6 : index
    %c0_13 = arith.constant 0 : index
    %14 = vector.load %arg1[%c6, %c0_13] : memref<32x128xbf16, #tpu.memory_space<vmem>>, vector<24x128xbf16>
    %c3 = arith.constant 3 : index
    %c0_14 = arith.constant 0 : index
    %c0_15 = arith.constant 0 : index
    %15 = vector.load %arg2[%c3, %c0_14, %c0_15] : memref<4x128x128xbf16, #tpu.memory_space<vmem>>, vector<1x128x128xbf16>
    %16 = vector.shape_cast %15 : vector<1x128x128xbf16> to vector<128x128xbf16>
    %cst_16 = arith.constant dense<0.000000e+00> : vector<24x128xf32>
    %17 = tpu.matmul %14, %16, %cst_16 {dimension_numbers = #tpu.dot_dimension_numbers<[1], [0], [0], [1], [0, 0, 1, 1], [], []>} : vector<24x128xbf16>, vector<128x128xbf16>, vector<24x128xf32> -> vector<24x128xf32>
    %18 = arith.addf %13, %17 : vector<24x128xf32>
    %c0_17 = arith.constant 0 : index
    %c0_18 = arith.constant 0 : index
    %19 = vector.load %arg3[%c0_17, %c0_18] : memref<1x128xf32, #tpu.memory_space<vmem>>, vector<1x128xf32>
    %20 = vector.broadcast %19 : vector<1x128xf32> to vector<24x128xf32>
    %21 = arith.addf %18, %20 : vector<24x128xf32>
    %cst_19 = arith.constant 0.000000e+00 : f32
    %22 = vector.broadcast %cst_19 : f32 to vector<24x128xf32>
    %23 = arith.cmpf oge, %21, %22 : vector<24x128xf32>
    %cst_20 = arith.constant 2.000000e-01 : f32
    %24 = vector.broadcast %cst_20 : f32 to vector<24x128xf32>
    %25 = arith.mulf %24, %21 : vector<24x128xf32>
    %26 = arith.select %23, %21, %25 : vector<24x128xi1>, vector<24x128xf32>
    %27 = arith.truncf %26 : vector<24x128xf32> to vector<24x128xbf16>
    %c0_21 = arith.constant 0 : index
    %c0_22 = arith.constant 0 : index
    %c0_23 = arith.constant 0 : index
    %28 = vector.load %arg4[%c0_21, %c0_22, %c0_23] : memref<1x24x128xbf16, #tpu.memory_space<vmem>>, vector<1x24x128xbf16>
    %29 = vector.shape_cast %28 : vector<1x24x128xbf16> to vector<24x128xbf16>
    %30 = vector.shape_cast %27 : vector<24x128xbf16> to vector<1x24x128xbf16>
    tpu.vector_store %arg4[%c0_21, %c0_22, %c0_23], %30 {strides = array<i32>} : memref<1x24x128xbf16, #tpu.memory_space<vmem>>, vector<1x24x128xbf16>,
    return
  }
  func.func @transform_0(%arg0: i32) -> (i32, i32) {
    %c0_i32 = arith.constant 0 : i32
    %c0_i32_0 = arith.constant 0 : i32
    return %arg0, %c0_i32 : i32, i32
  }
  func.func @transform_1(%arg0: i32) -> (i32, i32, i32) {
    %c0_i32 = arith.constant 0 : i32
    %c0_i32_0 = arith.constant 0 : i32
    %c0_i32_1 = arith.constant 0 : i32
    %c0_i32_2 = arith.constant 0 : i32
    return %c0_i32, %c0_i32_0, %c0_i32_1 : i32, i32, i32
  }
  func.func @transform_2(%arg0: i32) -> (i32, i32) {
    %c0_i32 = arith.constant 0 : i32
    %c0_i32_0 = arith.constant 0 : i32
    %c0_i32_1 = arith.constant 0 : i32
    return %c0_i32, %c0_i32_0 : i32, i32
  }
  func.func @transform_3(%arg0: i32) -> (i32, i32, i32) {
    %c0_i32 = arith.constant 0 : i32
    %c0_i32_0 = arith.constant 0 : i32
    %c0_i32_1 = arith.constant 0 : i32
    return %arg0, %c0_i32, %c0_i32_0 : i32, i32, i32
  }
}

module attributes {stable_mosaic.version = 11 : i64} {
  func.func @_conv4x4s2_kernel(%arg0: i32, %arg1: memref<16x256xbf16, #tpu.memory_space<vmem>>, %arg2: memref<4x256x128xbf16, #tpu.memory_space<vmem>>, %arg3: memref<1x128xf32, #tpu.memory_space<vmem>>, %arg4: memref<1x8x128xbf16, #tpu.memory_space<vmem>>) attributes {dimension_semantics = [#tpu.dimension_semantics<parallel>], iteration_bounds = array<i64: 2>, scalar_prefetch = 0 : i64, scratch_operands = 0 : i64, tpu.core_type = #tpu.core_type<tc>, window_params = [{transform_indices = @transform_0, window_bounds = array<i64: 16, 256>}, {pipeline_mode = #tpu.pipeline_mode<synchronous>, transform_indices = @transform_1, window_bounds = array<i64: 4, 256, 128>}, {pipeline_mode = #tpu.pipeline_mode<synchronous>, transform_indices = @transform_2, window_bounds = array<i64: 1, 128>}, {transform_indices = @transform_3, window_bounds = array<i64: 1, 8, 128>}]} {
    %c0 = arith.constant 0 : index
    %c0_0 = arith.constant 0 : index
    %0 = vector.load %arg1[%c0, %c0_0] : memref<16x256xbf16, #tpu.memory_space<vmem>>, vector<8x256xbf16>
    %c0_1 = arith.constant 0 : index
    %c0_2 = arith.constant 0 : index
    %c0_3 = arith.constant 0 : index
    %1 = vector.load %arg2[%c0_1, %c0_2, %c0_3] : memref<4x256x128xbf16, #tpu.memory_space<vmem>>, vector<1x256x128xbf16>
    %2 = vector.shape_cast %1 : vector<1x256x128xbf16> to vector<256x128xbf16>
    %cst = arith.constant dense<0.000000e+00> : vector<8x128xf32>
    %3 = tpu.matmul %0, %2, %cst {dimension_numbers = #tpu.dot_dimension_numbers<[1], [0], [0], [1], [0, 0, 1, 1], [], []>} : vector<8x256xbf16>, vector<256x128xbf16>, vector<8x128xf32> -> vector<8x128xf32>
    %c1 = arith.constant 1 : index
    %c0_4 = arith.constant 0 : index
    %4 = vector.load %arg1[%c1, %c0_4] : memref<16x256xbf16, #tpu.memory_space<vmem>>, vector<8x256xbf16>
    %c1_5 = arith.constant 1 : index
    %c0_6 = arith.constant 0 : index
    %c0_7 = arith.constant 0 : index
    %5 = vector.load %arg2[%c1_5, %c0_6, %c0_7] : memref<4x256x128xbf16, #tpu.memory_space<vmem>>, vector<1x256x128xbf16>
    %6 = vector.shape_cast %5 : vector<1x256x128xbf16> to vector<256x128xbf16>
    %cst_8 = arith.constant dense<0.000000e+00> : vector<8x128xf32>
    %7 = tpu.matmul %4, %6, %cst_8 {dimension_numbers = #tpu.dot_dimension_numbers<[1], [0], [0], [1], [0, 0, 1, 1], [], []>} : vector<8x256xbf16>, vector<256x128xbf16>, vector<8x128xf32> -> vector<8x128xf32>
    %8 = arith.addf %3, %7 : vector<8x128xf32>
    %c3 = arith.constant 3 : index
    %c0_9 = arith.constant 0 : index
    %9 = vector.load %arg1[%c3, %c0_9] : memref<16x256xbf16, #tpu.memory_space<vmem>>, vector<8x256xbf16>
    %c2 = arith.constant 2 : index
    %c0_10 = arith.constant 0 : index
    %c0_11 = arith.constant 0 : index
    %10 = vector.load %arg2[%c2, %c0_10, %c0_11] : memref<4x256x128xbf16, #tpu.memory_space<vmem>>, vector<1x256x128xbf16>
    %11 = vector.shape_cast %10 : vector<1x256x128xbf16> to vector<256x128xbf16>
    %cst_12 = arith.constant dense<0.000000e+00> : vector<8x128xf32>
    %12 = tpu.matmul %9, %11, %cst_12 {dimension_numbers = #tpu.dot_dimension_numbers<[1], [0], [0], [1], [0, 0, 1, 1], [], []>} : vector<8x256xbf16>, vector<256x128xbf16>, vector<8x128xf32> -> vector<8x128xf32>
    %13 = arith.addf %8, %12 : vector<8x128xf32>
    %c4 = arith.constant 4 : index
    %c0_13 = arith.constant 0 : index
    %14 = vector.load %arg1[%c4, %c0_13] : memref<16x256xbf16, #tpu.memory_space<vmem>>, vector<8x256xbf16>
    %c3_14 = arith.constant 3 : index
    %c0_15 = arith.constant 0 : index
    %c0_16 = arith.constant 0 : index
    %15 = vector.load %arg2[%c3_14, %c0_15, %c0_16] : memref<4x256x128xbf16, #tpu.memory_space<vmem>>, vector<1x256x128xbf16>
    %16 = vector.shape_cast %15 : vector<1x256x128xbf16> to vector<256x128xbf16>
    %cst_17 = arith.constant dense<0.000000e+00> : vector<8x128xf32>
    %17 = tpu.matmul %14, %16, %cst_17 {dimension_numbers = #tpu.dot_dimension_numbers<[1], [0], [0], [1], [0, 0, 1, 1], [], []>} : vector<8x256xbf16>, vector<256x128xbf16>, vector<8x128xf32> -> vector<8x128xf32>
    %18 = arith.addf %13, %17 : vector<8x128xf32>
    %c0_18 = arith.constant 0 : index
    %c0_19 = arith.constant 0 : index
    %19 = vector.load %arg3[%c0_18, %c0_19] : memref<1x128xf32, #tpu.memory_space<vmem>>, vector<1x128xf32>
    %20 = vector.broadcast %19 : vector<1x128xf32> to vector<8x128xf32>
    %21 = arith.addf %18, %20 : vector<8x128xf32>
    %cst_20 = arith.constant 0.000000e+00 : f32
    %22 = vector.broadcast %cst_20 : f32 to vector<8x128xf32>
    %23 = arith.cmpf oge, %21, %22 : vector<8x128xf32>
    %cst_21 = arith.constant 2.000000e-01 : f32
    %24 = vector.broadcast %cst_21 : f32 to vector<8x128xf32>
    %25 = arith.mulf %24, %21 : vector<8x128xf32>
    %26 = arith.select %23, %21, %25 : vector<8x128xi1>, vector<8x128xf32>
    %27 = arith.truncf %26 : vector<8x128xf32> to vector<8x128xbf16>
    %c0_22 = arith.constant 0 : index
    %c0_23 = arith.constant 0 : index
    %c0_24 = arith.constant 0 : index
    %28 = vector.load %arg4[%c0_22, %c0_23, %c0_24] : memref<1x8x128xbf16, #tpu.memory_space<vmem>>, vector<1x8x128xbf16>
    %29 = vector.shape_cast %28 : vector<1x8x128xbf16> to vector<8x128xbf16>
    %30 = vector.shape_cast %27 : vector<8x128xbf16> to vector<1x8x128xbf16>
    tpu.vector_store %arg4[%c0_22, %c0_23, %c0_24], %30 {strides = array<i32>} : memref<1x8x128xbf16, #tpu.memory_space<vmem>>, vector<1x8x128xbf16>,
    return
  }
  func.func @transform_0(%arg0: i32) -> (i32, i32) {
    %c0_i32 = arith.constant 0 : i32
    %c0_i32_0 = arith.constant 0 : i32
    return %arg0, %c0_i32 : i32, i32
  }
  func.func @transform_1(%arg0: i32) -> (i32, i32, i32) {
    %c0_i32 = arith.constant 0 : i32
    %c0_i32_0 = arith.constant 0 : i32
    %c0_i32_1 = arith.constant 0 : i32
    %c0_i32_2 = arith.constant 0 : i32
    return %c0_i32, %c0_i32_0, %c0_i32_1 : i32, i32, i32
  }
  func.func @transform_2(%arg0: i32) -> (i32, i32) {
    %c0_i32 = arith.constant 0 : i32
    %c0_i32_0 = arith.constant 0 : i32
    %c0_i32_1 = arith.constant 0 : i32
    return %c0_i32, %c0_i32_0 : i32, i32
  }
  func.func @transform_3(%arg0: i32) -> (i32, i32, i32) {
    %c0_i32 = arith.constant 0 : i32
    %c0_i32_0 = arith.constant 0 : i32
    %c0_i32_1 = arith.constant 0 : i32
    return %arg0, %c0_i32, %c0_i32_0 : i32, i32, i32
  }
}

module attributes {stable_mosaic.version = 11 : i64} {
  func.func @_conv4x4s2_kernel(%arg0: i32, %arg1: memref<16x512xbf16, #tpu.memory_space<vmem>>, %arg2: memref<4x512x128xbf16, #tpu.memory_space<vmem>>, %arg3: memref<1x128xf32, #tpu.memory_space<vmem>>, %arg4: memref<1x8x128xbf16, #tpu.memory_space<vmem>>) attributes {dimension_semantics = [#tpu.dimension_semantics<parallel>], iteration_bounds = array<i64: 2>, scalar_prefetch = 0 : i64, scratch_operands = 0 : i64, tpu.core_type = #tpu.core_type<tc>, window_params = [{transform_indices = @transform_0, window_bounds = array<i64: 16, 512>}, {pipeline_mode = #tpu.pipeline_mode<synchronous>, transform_indices = @transform_1, window_bounds = array<i64: 4, 512, 128>}, {pipeline_mode = #tpu.pipeline_mode<synchronous>, transform_indices = @transform_2, window_bounds = array<i64: 1, 128>}, {transform_indices = @transform_3, window_bounds = array<i64: 1, 8, 128>}]} {
    %c0 = arith.constant 0 : index
    %c0_0 = arith.constant 0 : index
    %0 = vector.load %arg1[%c0, %c0_0] : memref<16x512xbf16, #tpu.memory_space<vmem>>, vector<8x512xbf16>
    %c0_1 = arith.constant 0 : index
    %c0_2 = arith.constant 0 : index
    %c0_3 = arith.constant 0 : index
    %1 = vector.load %arg2[%c0_1, %c0_2, %c0_3] : memref<4x512x128xbf16, #tpu.memory_space<vmem>>, vector<1x512x128xbf16>
    %2 = vector.shape_cast %1 : vector<1x512x128xbf16> to vector<512x128xbf16>
    %cst = arith.constant dense<0.000000e+00> : vector<8x128xf32>
    %3 = tpu.matmul %0, %2, %cst {dimension_numbers = #tpu.dot_dimension_numbers<[1], [0], [0], [1], [0, 0, 1, 1], [], []>} : vector<8x512xbf16>, vector<512x128xbf16>, vector<8x128xf32> -> vector<8x128xf32>
    %c1 = arith.constant 1 : index
    %c0_4 = arith.constant 0 : index
    %4 = vector.load %arg1[%c1, %c0_4] : memref<16x512xbf16, #tpu.memory_space<vmem>>, vector<8x512xbf16>
    %c1_5 = arith.constant 1 : index
    %c0_6 = arith.constant 0 : index
    %c0_7 = arith.constant 0 : index
    %5 = vector.load %arg2[%c1_5, %c0_6, %c0_7] : memref<4x512x128xbf16, #tpu.memory_space<vmem>>, vector<1x512x128xbf16>
    %6 = vector.shape_cast %5 : vector<1x512x128xbf16> to vector<512x128xbf16>
    %cst_8 = arith.constant dense<0.000000e+00> : vector<8x128xf32>
    %7 = tpu.matmul %4, %6, %cst_8 {dimension_numbers = #tpu.dot_dimension_numbers<[1], [0], [0], [1], [0, 0, 1, 1], [], []>} : vector<8x512xbf16>, vector<512x128xbf16>, vector<8x128xf32> -> vector<8x128xf32>
    %8 = arith.addf %3, %7 : vector<8x128xf32>
    %c2 = arith.constant 2 : index
    %c0_9 = arith.constant 0 : index
    %9 = vector.load %arg1[%c2, %c0_9] : memref<16x512xbf16, #tpu.memory_space<vmem>>, vector<8x512xbf16>
    %c2_10 = arith.constant 2 : index
    %c0_11 = arith.constant 0 : index
    %c0_12 = arith.constant 0 : index
    %10 = vector.load %arg2[%c2_10, %c0_11, %c0_12] : memref<4x512x128xbf16, #tpu.memory_space<vmem>>, vector<1x512x128xbf16>
    %11 = vector.shape_cast %10 : vector<1x512x128xbf16> to vector<512x128xbf16>
    %cst_13 = arith.constant dense<0.000000e+00> : vector<8x128xf32>
    %12 = tpu.matmul %9, %11, %cst_13 {dimension_numbers = #tpu.dot_dimension_numbers<[1], [0], [0], [1], [0, 0, 1, 1], [], []>} : vector<8x512xbf16>, vector<512x128xbf16>, vector<8x128xf32> -> vector<8x128xf32>
    %13 = arith.addf %8, %12 : vector<8x128xf32>
    %c3 = arith.constant 3 : index
    %c0_14 = arith.constant 0 : index
    %14 = vector.load %arg1[%c3, %c0_14] : memref<16x512xbf16, #tpu.memory_space<vmem>>, vector<8x512xbf16>
    %c3_15 = arith.constant 3 : index
    %c0_16 = arith.constant 0 : index
    %c0_17 = arith.constant 0 : index
    %15 = vector.load %arg2[%c3_15, %c0_16, %c0_17] : memref<4x512x128xbf16, #tpu.memory_space<vmem>>, vector<1x512x128xbf16>
    %16 = vector.shape_cast %15 : vector<1x512x128xbf16> to vector<512x128xbf16>
    %cst_18 = arith.constant dense<0.000000e+00> : vector<8x128xf32>
    %17 = tpu.matmul %14, %16, %cst_18 {dimension_numbers = #tpu.dot_dimension_numbers<[1], [0], [0], [1], [0, 0, 1, 1], [], []>} : vector<8x512xbf16>, vector<512x128xbf16>, vector<8x128xf32> -> vector<8x128xf32>
    %18 = arith.addf %13, %17 : vector<8x128xf32>
    %c0_19 = arith.constant 0 : index
    %c0_20 = arith.constant 0 : index
    %19 = vector.load %arg3[%c0_19, %c0_20] : memref<1x128xf32, #tpu.memory_space<vmem>>, vector<1x128xf32>
    %20 = vector.broadcast %19 : vector<1x128xf32> to vector<8x128xf32>
    %21 = arith.addf %18, %20 : vector<8x128xf32>
    %22 = arith.truncf %21 : vector<8x128xf32> to vector<8x128xbf16>
    %c0_21 = arith.constant 0 : index
    %c0_22 = arith.constant 0 : index
    %c0_23 = arith.constant 0 : index
    %23 = vector.load %arg4[%c0_21, %c0_22, %c0_23] : memref<1x8x128xbf16, #tpu.memory_space<vmem>>, vector<1x8x128xbf16>
    %24 = vector.shape_cast %23 : vector<1x8x128xbf16> to vector<8x128xbf16>
    %25 = vector.shape_cast %22 : vector<8x128xbf16> to vector<1x8x128xbf16>
    tpu.vector_store %arg4[%c0_21, %c0_22, %c0_23], %25 {strides = array<i32>} : memref<1x8x128xbf16, #tpu.memory_space<vmem>>, vector<1x8x128xbf16>,
    return
  }
  func.func @transform_0(%arg0: i32) -> (i32, i32) {
    %c0_i32 = arith.constant 0 : i32
    %c0_i32_0 = arith.constant 0 : i32
    return %arg0, %c0_i32 : i32, i32
  }
  func.func @transform_1(%arg0: i32) -> (i32, i32, i32) {
    %c0_i32 = arith.constant 0 : i32
    %c0_i32_0 = arith.constant 0 : i32
    %c0_i32_1 = arith.constant 0 : i32
    %c0_i32_2 = arith.constant 0 : i32
    return %c0_i32, %c0_i32_0, %c0_i32_1 : i32, i32, i32
  }
  func.func @transform_2(%arg0: i32) -> (i32, i32) {
    %c0_i32 = arith.constant 0 : i32
    %c0_i32_0 = arith.constant 0 : i32
    %c0_i32_1 = arith.constant 0 : i32
    return %c0_i32, %c0_i32_0 : i32, i32
  }
  func.func @transform_3(%arg0: i32) -> (i32, i32, i32) {
    %c0_i32 = arith.constant 0 : i32
    %c0_i32_0 = arith.constant 0 : i32
    %c0_i32_1 = arith.constant 0 : i32
    return %arg0, %c0_i32, %c0_i32_0 : i32, i32, i32
  }
}

</mosaic_0001>

<llo_original>
// kernel: latent_discriminator_forward.5
$region0: #{latent_discriminator_forward.5}
  #allocation0 [shape = 'u32[]', space=smem, size = 0x4, offset = 0x4, fixed_abs, tag = 'smem constant byte address 0x4 - core index']
  #allocation1 [shape = 'u32[144,128]{1,0:T(1,128)}', space=vmem, size = 0x12000, scoped, tag = 'internal scratch']
  %s0 = inlined_call_operand.vmem [shape: bf16[592,16], index: 0, kind: input, shape index: {}]
  %s1 = inlined_call_operand.vmem [shape: bf16[4,16,128], index: 1, kind: input, shape index: {}]
  %s2 = inlined_call_operand.vmem [shape: f32[1,128], index: 2, kind: input, shape index: {}]
  %s3 = inlined_call_operand.vmem [shape: bf16[2,272,128], index: 3, kind: output, shape index: {}]
  %s4 = sld [smem:[#allocation0]]
  $region45: #{latent_discriminator_forward.5} parent=0
    _
  %s6 = ssub.s32 1, %s4
  %s7 = scalar_select 0, %s6, %s4
  loop: start=0, step=1, limit=4
  $region2: #{latent_discriminator_forward.5} parent=0 // loop_pre_header
    _
  $region3: #{latent_discriminator_forward.5} parent=0 // loop_header
    %s9 = sphi 0, %s13
    %p10 = scmp.ge.s32.totalorder %s9, 4
    %s19 = sphi 0, %s21
    %s22 = sphi 0, %s19
    %s23 = sphi 0, %s22
    %s39 = sphi 0, %s23
    %s43 = sphi 0, %s43
    %s45 = sphi 0, %s43
    %s46 = sphi 0, %s45
    %s60 = sphi 0, %s46
    %s64 = sphi 0, %s64
    %s66 = sphi 0, %s64
    %s67 = sphi 0, %s66
    %s81 = sphi 0, %s67
    %s87 = sphi 0, %s89
    %s90 = sphi 0, %s87
    %s91 = sphi 0, %s90
    %s107 = sphi 0, %s91
  $region4: #{latent_discriminator_forward.5} parent=0 // loop_header_branch
    %12 = sbr.rel (%p10) target = $region8
  $region5: #{latent_discriminator_forward.5} parent=0 // loop_body
    %s14 = ssub.s32 %s9, 1
    %s15 = ssub.s32 %s9, 2
    %s16 = sadd.s32 %s9, 1
    %s17 = ssub.s32 %s9, %s16
    %p18 = scmp.eq.s32.totalorder %s17, 0
    %s20 = sadd.s32 %s19, 1
    %s21 = scalar_select %p18, %s19, %s20
    %p24 = pneg %p18
    %p25 = scmp.eq.s32.totalorder %s9, 1
    %p26 = por %p24, %p25
    %p27 = scmp.ne.s32.totalorder %s19, %s22
    %p28 = scmp.eq.s32.totalorder %s9, 0
    %p29 = por %p27, %p28
    %p30 = scmp.ne.s32.totalorder %s19, %s22
    %p31 = scmp.eq.s32.totalorder %s14, 1
    %p32 = por %p30, %p31
    %p33 = scmp.ne.s32.totalorder %s22, %s23
    %p34 = scmp.eq.s32.totalorder %s14, 0
    %p35 = por %p33, %p34
    %p36 = scmp.ne.s32.totalorder %s22, %s23
    %p37 = scmp.eq.s32.totalorder %s15, 1
    %p38 = por %p36, %p37
    %p40 = scmp.ne.s32.totalorder %s23, %s39
    %p41 = scmp.eq.s32.totalorder %s15, 0
    %p42 = por %p40, %p41
    %s44 = sadd.s32 %s43, 1
    %p47 = scmp.eq.s32.totalorder %s9, 1
    %p48 = scmp.ne.s32.totalorder %s43, %s45
    %p49 = scmp.eq.s32.totalorder %s9, 0
    %p50 = por %p48, %p49
    %p51 = scmp.ne.s32.totalorder %s43, %s45
    %p52 = scmp.eq.s32.totalorder %s14, 1
    %p53 = por %p51, %p52
    %p54 = scmp.ne.s32.totalorder %s45, %s46
    %p55 = scmp.eq.s32.totalorder %s14, 0
    %p56 = por %p54, %p55
    %p57 = scmp.ne.s32.totalorder %s45, %s46
    %p58 = scmp.eq.s32.totalorder %s15, 1
    %p59 = por %p57, %p58
    %p61 = scmp.ne.s32.totalorder %s46, %s60
    %p62 = scmp.eq.s32.totalorder %s15, 0
    %p63 = por %p61, %p62
    %s65 = sadd.s32 %s64, 1
    %p68 = scmp.eq.s32.totalorder %s9, 1
    %p69 = scmp.ne.s32.totalorder %s64, %s66
    %p70 = scmp.eq.s32.totalorder %s9, 0
    %p71 = por %p69, %p70
    %p72 = scmp.ne.s32.totalorder %s64, %s66
    %p73 = scmp.eq.s32.totalorder %s14, 1
    %p74 = por %p72, %p73
    %p75 = scmp.ne.s32.totalorder %s66, %s67
    %p76 = scmp.eq.s32.totalorder %s14, 0
    %p77 = por %p75, %p76
    %p78 = scmp.ne.s32.totalorder %s66, %s67
    %p79 = scmp.eq.s32.totalorder %s15, 1
    %p80 = por %p78, %p79
    %p82 = scmp.ne.s32.totalorder %s67, %s81
    %p83 = scmp.eq.s32.totalorder %s15, 0
    %p84 = por %p82, %p83
    %s85 = ssub.s32 %s9, %s16
    %p86 = scmp.eq.s32.totalorder %s85, 0
    %s88 = sadd.s32 %s87, 1
    %s89 = scalar_select %p86, %s87, %s88
    %p92 = pneg %p86
    %p93 = scmp.eq.s32.totalorder %s9, 1
    %p94 = por %p92, %p93
    %p95 = scmp.ne.s32.totalorder %s87, %s90
    %p96 = scmp.eq.s32.totalorder %s9, 0
    %p97 = por %p95, %p96
    %p98 = scmp.ne.s32.totalorder %s87, %s90
    %p99 = scmp.eq.s32.totalorder %s14, 1
    %p100 = por %p98, %p99
    %p101 = scmp.ne.s32.totalorder %s90, %s91
    %p102 = scmp.eq.s32.totalorder %s14, 0
    %p103 = por %p101, %p102
    %p104 = scmp.ne.s32.totalorder %s90, %s91
    %p105 = scmp.eq.s32.totalorder %s15, 1
    %p106 = por %p104, %p105
    %p108 = scmp.ne.s32.totalorder %s91, %s107
    %p109 = scmp.eq.s32.totalorder %s15, 0
    %p110 = por %p108, %p109
    %p111 = scmp.le.s32.totalorder 1, %s9
    %p112 = scmp.lt.s32.totalorder %s9, 3
    %p113 = pnand %p111, %p112
    %p114 = pneg %p113
    // Predicated region
    $region9: #{latent_discriminator_forward.5} parent=5 // pred_check
      _
    $region10: #{latent_discriminator_forward.5} parent=5 // pred_check_branch
      %116 = sbr.rel (%p113) target = $region12
    $region11: #{latent_discriminator_forward.5} parent=5 // pred_region
      %s117 = ssub.s32 %s9, 1
      // Predicated region
      $region13: #{latent_discriminator_forward.5} parent=11 // pred_check
        %p118 = pneg %p56
      $region14: #{latent_discriminator_forward.5} parent=11 // pred_check_branch
        %120 = sbr.rel (%p118) target = $region16
      $region15: #{latent_discriminator_forward.5} parent=11 // pred_region
        _
      $region16: #{latent_discriminator_forward.5} parent=11 // pred_fallthru
        _
      // Predicated region
      $region17: #{latent_discriminator_forward.5} parent=11 // pred_check
        %p121 = pneg %p77
      $region18: #{latent_discriminator_forward.5} parent=11 // pred_check_branch
        %123 = sbr.rel (%p121) target = $region20
      $region19: #{latent_discriminator_forward.5} parent=11 // pred_region
        _
      $region20: #{latent_discriminator_forward.5} parent=11 // pred_fallthru
        _
    $region12: #{latent_discriminator_forward.5} parent=5 // pred_fallthru
      _
    %p124 = scmp.lt.s32.totalorder %s9, 2
    // Predicated region
    $region21: #{latent_discriminator_forward.5} parent=5 // pred_check
      %p125 = pneg %p124
    $region22: #{latent_discriminator_forward.5} parent=5 // pred_check_branch
      %127 = sbr.rel (%p125) target = $region24
    $region23: #{latent_discriminator_forward.5} parent=5 // pred_region
      // Predicated region
      $region25: #{latent_discriminator_forward.5} parent=23 // pred_check
        %p128 = pneg %p29
      $region26: #{latent_discriminator_forward.5} parent=23 // pred_check_branch
        %130 = sbr.rel (%p128) target = $region28
      $region27: #{latent_discriminator_forward.5} parent=23 // pred_region
        %s131 = smul.u32 37, %s9
        %p132 = scmp.lt.s32.totalorder %s131, 73
        %s133 = scalar_select %p132, %s131, 73
        %s134 = smul.addr %s133, 4
        %s135 = scalar_lea.vmem %s0, %s134
        %s136 = smul.u32 37, %s9
      $region28: #{latent_discriminator_forward.5} parent=23 // pred_fallthru
        _
    $region24: #{latent_discriminator_forward.5} parent=5 // pred_fallthru
      _
    %p137 = scmp.le.s32.totalorder 1, %s9
    %p138 = scmp.lt.s32.totalorder %s9, 3
    %p139 = pnand %p137, %p138
    %p140 = pneg %p139
    // Predicated region
    $region29: #{latent_discriminator_forward.5} parent=5 // pred_check
      _
    $region30: #{latent_discriminator_forward.5} parent=5 // pred_check_branch
      %142 = sbr.rel (%p139) target = $region32
    $region31: #{latent_discriminator_forward.5} parent=5 // pred_region
      %s143 = ssub.s32 %s9, 1
      %s144 = smul.u32 37, %s14
      %p145 = scmp.lt.s32.totalorder %s144, 73
      %s146 = scalar_select %p145, %s144, 73
      %s147 = smul.addr %s146, 4
      %s148 = scalar_lea.vmem %s0, %s147
      %p149 = pneg %p35
      %p150 = pneg %p32
      %p151 = pneg %p56
      %p152 = pneg %p53
      %p153 = pneg %p77
      %p154 = pneg %p74
      %p155 = pneg %p103
      %p156 = pneg %p100
      %p157 = scmp.lt.s32.totalorder %s14, 1
      %s158 = scalar_select %p157, %s14, 1
      %s159 = smul.addr %s158, 34
      %s160 = smul.addr %s159, 4
      %s161 = scalar_lea.vmem %s3, %s160
      %s162 = smul.u32 37, %s14
      %p163 = scmp.lt.s32.totalorder %s162, 73
      %s164 = scalar_select %p163, %s162, 73
      %s165 = smul.addr %s164, 4
      %s166 = scalar_lea.vmem %s0, %s165
      %s167 = smul.u32 37, %s14
      %p168 = scmp.lt.s32.totalorder %s14, 1
      %s169 = scalar_select %p168, %s14, 1
      %s170 = smul.addr %s169, 34
      %s171 = smul.addr %s170, 4
      %s172 = scalar_lea.vmem %s3, %s171
      %v174 = vld [vmem:[%s166] sm:$0xf]
      %v175 = vld [vmem:[%s166 + $0x4] sm:$0xf]
      %v176 = vld [vmem:[%s166 + $0x8] sm:$0xf]
      %v177 = vld [vmem:[%s166 + $0xc] sm:$0xf]
      %v178 = vld [vmem:[%s166 + $0x10] sm:$0xf]
      %v179 = vld [vmem:[%s166 + $0x14] sm:$0xf]
      %v180 = vld [vmem:[%s166 + $0x18] sm:$0xf]
      %v181 = vld [vmem:[%s166 + $0x1c] sm:$0xf]
      %v182 = vld [vmem:[%s166 + $0x20] sm:$0xf]
      %v183 = vld [vmem:[%s166 + $0x24] sm:$0xf]
      %v184 = vld [vmem:[%s166 + $0x28] sm:$0xf]
      %v185 = vld [vmem:[%s166 + $0x2c] sm:$0xf]
      %v186 = vld [vmem:[%s166 + $0x30] sm:$0xf]
      %v187 = vld [vmem:[%s166 + $0x34] sm:$0xf]
      %v188 = vld [vmem:[%s166 + $0x38] sm:$0xf]
      %v189 = vld [vmem:[%s166 + $0x3c] sm:$0xf]
      %v190 = vld [vmem:[%s166 + $0x40] sm:$0xf]
      %v191 = vld [vmem:[%s166 + $0x44] sm:$0xf]
      %v192 = vld [vmem:[%s166 + $0x48] sm:$0xf]
      %v193 = vld [vmem:[%s166 + $0x4c] sm:$0xf]
      %v194 = vld [vmem:[%s166 + $0x50] sm:$0xf]
      %v195 = vld [vmem:[%s166 + $0x54] sm:$0xf]
      %v196 = vld [vmem:[%s166 + $0x58] sm:$0xf]
      %v197 = vld [vmem:[%s166 + $0x5c] sm:$0xf]
      %v198 = vld [vmem:[%s166 + $0x60] sm:$0xf]
      %v199 = vld [vmem:[%s166 + $0x64] sm:$0xf]
      %v200 = vld [vmem:[%s166 + $0x68] sm:$0xf]
      %v201 = vld [vmem:[%s166 + $0x6c] sm:$0xf]
      %v202 = vld [vmem:[%s166 + $0x70] sm:$0xf]
      %v203 = vld [vmem:[%s166 + $0x74] sm:$0xf]
      %v204 = vld [vmem:[%s166 + $0x78] sm:$0xf]
      %v205 = vld [vmem:[%s166 + $0x7c] sm:$0xf]
      %v206 = vld [vmem:[%s166 + $0x80] sm:$0xf]
      %v207 = vld [vmem:[%s166 + $0x84] sm:$0xf]
      %v208 = vld [vmem:[%s1] sm:$0xf]
      %v209 = vld [vmem:[%s1 + $0x4] sm:$0xf]
      %v210 = vld [vmem:[%s166 + $0x88] sm:$0x1]
      %s211 = scalar_lea.vmem %s1, 8
      %v212 = vld [vmem:[%s211] sm:$0xf]
      %v213 = vld [vmem:[%s211 + $0x4] sm:$0xf]
      %v249 = vunpack.c.l.b16 %v174
      %v250 = vunpack.c.l.b16 %v175
      %v251 = vunpack.c.l.b16 %v176
      %v252 = vunpack.c.l.b16 %v177
      %v253 = vunpack.c.l.b16 %v178
      %v254 = vunpack.c.l.b16 %v179
      %v255 = vunpack.c.l.b16 %v180
      %v256 = vunpack.c.l.b16 %v181
      %v257 = vunpack.c.l.b16 %v182
      %v258 = vunpack.c.l.b16 %v183
      %v259 = vunpack.c.l.b16 %v184
      %v260 = vunpack.c.l.b16 %v185
      %v261 = vunpack.c.l.b16 %v186
      %v262 = vunpack.c.l.b16 %v187
      %v263 = vunpack.c.l.b16 %v188
      %v264 = vunpack.c.l.b16 %v189
      %v265 = vunpack.c.l.b16 %v190
      %v266 = vunpack.c.l.b16 %v191
      %v267 = vunpack.c.l.b16 %v192
      %v268 = vunpack.c.l.b16 %v193
      %v269 = vunpack.c.l.b16 %v194
      %v270 = vunpack.c.l.b16 %v195
      %v271 = vunpack.c.l.b16 %v196
      %v272 = vunpack.c.l.b16 %v197
      %v273 = vunpack.c.l.b16 %v198
      %v274 = vunpack.c.l.b16 %v199
      %v275 = vunpack.c.l.b16 %v200
      %v276 = vunpack.c.l.b16 %v201
      %v277 = vunpack.c.l.b16 %v202
      %v278 = vunpack.c.l.b16 %v203
      %v279 = vunpack.c.l.b16 %v204
      %v280 = vunpack.c.l.b16 %v205
      %v281 = vunpack.c.l.b16 %v206
      %v282 = vunpack.c.l.b16 %v207
      %v283 = vunpack.c.l.b16 %v210
      %v284 = vpack.c.b16 %v250, %v249
      %v285 = vpack.c.b16 %v252, %v251
      %v286 = vpack.c.b16 %v254, %v253
      %v287 = vpack.c.b16 %v256, %v255
      %v288 = vpack.c.b16 %v258, %v257
      %v289 = vpack.c.b16 %v260, %v259
      %v290 = vpack.c.b16 %v262, %v261
      %v291 = vpack.c.b16 %v264, %v263
      %v292 = vpack.c.b16 %v266, %v265
      %v293 = vpack.c.b16 %v268, %v267
      %v294 = vpack.c.b16 %v270, %v269
      %v295 = vpack.c.b16 %v272, %v271
      %v296 = vpack.c.b16 %v274, %v273
      %v297 = vpack.c.b16 %v276, %v275
      %v298 = vpack.c.b16 %v278, %v277
      %v299 = vpack.c.b16 %v280, %v279
      %v300 = vpack.c.b16 %v282, %v281
      %v301 = vpack.c.b16 %v283, %v283
      %vm302 = vsmask.f32 7424
      %v304 = vshrl.u32 %v284, 16
      %v306 = vshll.u32 %v284, 16
      %v308 = vrot.slane %v306, 1
      %v309 = vor.u32 %v304, %v308
      %v311 = vshll.u32 %v285, 16
      %v313 = vrot.slane %v311, 1
      %v314 = vsel %vm302, %v309, %v313
      %v315 = vshrl.u32 %v285, 16
      %v317 = vor.u32 %v315, %v313
      %v319 = vshll.u32 %v286, 16
      %v321 = vrot.slane %v319, 1
      %v322 = vsel %vm302, %v317, %v321
      %v323 = vshrl.u32 %v286, 16
      %v325 = vor.u32 %v323, %v321
      %v327 = vshll.u32 %v287, 16
      %v329 = vrot.slane %v327, 1
      %v330 = vsel %vm302, %v325, %v329
      %v331 = vshrl.u32 %v287, 16
      %v333 = vor.u32 %v331, %v329
      %v335 = vshll.u32 %v288, 16
      %v337 = vrot.slane %v335, 1
      %v338 = vsel %vm302, %v333, %v337
      %v339 = vshrl.u32 %v288, 16
      %v341 = vor.u32 %v339, %v337
      %v343 = vshll.u32 %v289, 16
      %v345 = vrot.slane %v343, 1
      %v346 = vsel %vm302, %v341, %v345
      %v347 = vshrl.u32 %v289, 16
      %v349 = vor.u32 %v347, %v345
      %v351 = vshll.u32 %v290, 16
      %v353 = vrot.slane %v351, 1
      %v354 = vsel %vm302, %v349, %v353
      %v355 = vshrl.u32 %v290, 16
      %v357 = vor.u32 %v355, %v353
      %v359 = vshll.u32 %v291, 16
      %v361 = vrot.slane %v359, 1
      %v362 = vsel %vm302, %v357, %v361
      %v363 = vshrl.u32 %v291, 16
      %v365 = vor.u32 %v363, %v361
      %v367 = vshll.u32 %v292, 16
      %v369 = vrot.slane %v367, 1
      %v370 = vsel %vm302, %v365, %v369
      %v371 = vshrl.u32 %v292, 16
      %v373 = vor.u32 %v371, %v369
      %v375 = vshll.u32 %v293, 16
      %v377 = vrot.slane %v375, 1
      %v378 = vsel %vm302, %v373, %v377
      %v379 = vshrl.u32 %v293, 16
      %v381 = vor.u32 %v379, %v377
      %v383 = vshll.u32 %v294, 16
      %v385 = vrot.slane %v383, 1
      %v386 = vsel %vm302, %v381, %v385
      %v387 = vshrl.u32 %v294, 16
      %v389 = vor.u32 %v387, %v385
      %v391 = vshll.u32 %v295, 16
      %v393 = vrot.slane %v391, 1
      %v394 = vsel %vm302, %v389, %v393
      %v395 = vshrl.u32 %v295, 16
      %v397 = vor.u32 %v395, %v393
      %v399 = vshll.u32 %v296, 16
      %v401 = vrot.slane %v399, 1
      %v402 = vsel %vm302, %v397, %v401
      %v403 = vshrl.u32 %v296, 16
      %v405 = vor.u32 %v403, %v401
      %v407 = vshll.u32 %v297, 16
      %v409 = vrot.slane %v407, 1
      %v410 = vsel %vm302, %v405, %v409
      %v411 = vshrl.u32 %v297, 16
      %v413 = vor.u32 %v411, %v409
      %v415 = vshll.u32 %v298, 16
      %v417 = vrot.slane %v415, 1
      %v418 = vsel %vm302, %v413, %v417
      %v419 = vshrl.u32 %v298, 16
      %v421 = vor.u32 %v419, %v417
      %v423 = vshll.u32 %v299, 16
      %v425 = vrot.slane %v423, 1
      %v426 = vsel %vm302, %v421, %v425
      %v427 = vshrl.u32 %v299, 16
      %v429 = vor.u32 %v427, %v425
      %v431 = vshll.u32 %v300, 16
      %v433 = vrot.slane %v431, 1
      %v434 = vsel %vm302, %v429, %v433
      %v435 = vshrl.u32 %v300, 16
      %v437 = vor.u32 %v435, %v433
      %v439 = vshll.u32 %v301, 16
      %v441 = vrot.slane %v439, 1
      %v442 = vsel %vm302, %v437, %v441
      %v445 = vunpack.c.l.b16 %v212
      %v446 = vunpack.c.l.b16 %v213
      %v447 = vpack.c.b16 %v446, %v445
      %vm449 = vcmask 130048
      %v451 = vsel %vm449, %v314, 0
      %v454 = vsel %vm449, %v322, 0
      %v457 = vsel %vm449, %v330, 0
      %v460 = vsel %vm449, %v338, 0
      %v463 = vsel %vm449, %v346, 0
      %v466 = vsel %vm449, %v354, 0
      %v469 = vsel %vm449, %v362, 0
      %v472 = vsel %vm449, %v370, 0
      %v475 = vsel %vm449, %v378, 0
      %v478 = vsel %vm449, %v386, 0
      %v481 = vsel %vm449, %v394, 0
      %v484 = vsel %vm449, %v402, 0
      %v487 = vsel %vm449, %v410, 0
      %v490 = vsel %vm449, %v418, 0
      %v493 = vsel %vm449, %v426, 0
      %v496 = vsel %vm449, %v434, 0
      %v499 = vsel %vm449, %v442, 0
      %501 = vmatprep.subr.bf16.mxu0 0
      %502 = vmatpush1.bf16.msra.mxu0 %v447
      %503 = vmatprep.subr.bf16.mxu0 0
      %504 = vmatpush1.bf16.msra.mxu0 0
      %505 = vmatprep.subr.bf16.mxu0 0
      %506 = vmatpush1.bf16.msra.mxu0 0
      %507 = vmatprep.subr.bf16.mxu0 0
      %508 = vmatpush1.bf16.msra.mxu0 0
      %509 = vmatprep.subr.bf16.mxu0 0
      %510 = vmatpush1.bf16.msra.mxu0 0
      %511 = vmatprep.subr.bf16.mxu0 0
      %512 = vmatpush1.bf16.msra.mxu0 0
      %513 = vmatprep.subr.bf16.mxu0 0
      %514 = vmatpush1.bf16.msra.mxu0 0
      %515 = vmatprep.subr.bf16.mxu0 0
      %516 = vmatpush1.bf16.msra.mxu0 0
      %517 = vmatprep.subr.bf16.mxu0 0
      %518 = vmatpush1.bf16.msra.mxu0 0
      %519 = vmatprep.subr.bf16.mxu0 0
      %520 = vmatpush1.bf16.msra.mxu0 0
      %521 = vmatprep.subr.bf16.mxu0 0
      %522 = vmatpush1.bf16.msra.mxu0 0
      %523 = vmatprep.subr.bf16.mxu0 0
      %524 = vmatpush1.bf16.msra.mxu0 0
      %525 = vmatprep.subr.bf16.mxu0 0
      %526 = vmatpush1.bf16.msra.mxu0 0
      %527 = vmatprep.subr.bf16.mxu0 0
      %528 = vmatpush1.bf16.msra.mxu0 0
      %529 = vmatprep.subr.bf16.mxu0 0
      %530 = vmatpush1.bf16.msra.mxu0 0
      %531 = vmatprep.subr.bf16.mxu0 0
      %532 = vmatpush1.bf16.msra.mxu0 0
      %533 = vmatprep.mubr.bf16.mxu0 0
      %534 = vmatmul.mubr.bf16.gmra.mrb[0].mxu0 %v451
      %v535 = vpop.f32.mrb[0].mxu0
      %v536 = vadd.f32 0.0, %v535
      %v537 = vpop.f32.mrb[0].mxu0
      %v538 = vpop.f32.mrb[0].mxu0
      %v539 = vadd.f32 0.0, %v538
      %v540 = vpop.f32.mrb[0].mxu0
      %541 = vmatprep.mubr.bf16.mxu0 0
      %542 = vmatmul.mubr.bf16.gmra.mrb[0].mxu0 %v454
      %v543 = vpop.f32.mrb[0].mxu0
      %v544 = vadd.f32 0.0, %v543
      %v545 = vpop.f32.mrb[0].mxu0
      %v546 = vpop.f32.mrb[0].mxu0
      %v547 = vadd.f32 0.0, %v546
      %v548 = vpop.f32.mrb[0].mxu0
      %549 = vmatprep.mubr.bf16.mxu0 0
      %550 = vmatmul.mubr.bf16.gmra.mrb[0].mxu0 %v457
      %v551 = vpop.f32.mrb[0].mxu0
      %v552 = vadd.f32 0.0, %v551
      %v553 = vpop.f32.mrb[0].mxu0
      %v554 = vpop.f32.mrb[0].mxu0
      %v555 = vadd.f32 0.0, %v554
      %v556 = vpop.f32.mrb[0].mxu0
      %557 = vmatprep.mubr.bf16.mxu0 0
      %558 = vmatmul.mubr.bf16.gmra.mrb[0].mxu0 %v460
      %v559 = vpop.f32.mrb[0].mxu0
      %v560 = vadd.f32 0.0, %v559
      %v561 = vpop.f32.mrb[0].mxu0
      %v562 = vpop.f32.mrb[0].mxu0
      %v563 = vadd.f32 0.0, %v562
      %v564 = vpop.f32.mrb[0].mxu0
      %565 = vmatprep.mubr.bf16.mxu0 0
      %566 = vmatmul.mubr.bf16.gmra.mrb[0].mxu0 %v463
      %v567 = vpop.f32.mrb[0].mxu0
      %v568 = vadd.f32 0.0, %v567
      %v569 = vpop.f32.mrb[0].mxu0
      %v570 = vpop.f32.mrb[0].mxu0
      %v571 = vadd.f32 0.0, %v570
      %v572 = vpop.f32.mrb[0].mxu0
      %573 = vmatprep.mubr.bf16.mxu0 0
      %574 = vmatmul.mubr.bf16.gmra.mrb[0].mxu0 %v466
      %v575 = vpop.f32.mrb[0].mxu0
      %v576 = vadd.f32 0.0, %v575
      %v577 = vpop.f32.mrb[0].mxu0
      %v578 = vpop.f32.mrb[0].mxu0
      %v579 = vadd.f32 0.0, %v578
      %v580 = vpop.f32.mrb[0].mxu0
      %581 = vmatprep.mubr.bf16.mxu0 0
      %582 = vmatmul.mubr.bf16.gmra.mrb[0].mxu0 %v469
      %v583 = vpop.f32.mrb[0].mxu0
      %v584 = vadd.f32 0.0, %v583
      %v585 = vpop.f32.mrb[0].mxu0
      %v586 = vpop.f32.mrb[0].mxu0
      %v587 = vadd.f32 0.0, %v586
      %v588 = vpop.f32.mrb[0].mxu0
      %589 = vmatprep.mubr.bf16.mxu0 0
      %590 = vmatmul.mubr.bf16.gmra.mrb[0].mxu0 %v472
      %v591 = vpop.f32.mrb[0].mxu0
      %v592 = vadd.f32 0.0, %v591
      %v593 = vpop.f32.mrb[0].mxu0
      %v594 = vpop.f32.mrb[0].mxu0
      %v595 = vadd.f32 0.0, %v594
      %v596 = vpop.f32.mrb[0].mxu0
      %597 = vmatprep.mubr.bf16.mxu0 0
      %598 = vmatmul.mubr.bf16.gmra.mrb[0].mxu0 %v475
      %v599 = vpop.f32.mrb[0].mxu0
      %v600 = vadd.f32 0.0, %v599
      %v601 = vpop.f32.mrb[0].mxu0
      %v602 = vpop.f32.mrb[0].mxu0
      %v603 = vadd.f32 0.0, %v602
      %v604 = vpop.f32.mrb[0].mxu0
      %605 = vmatprep.mubr.bf16.mxu0 0
      %606 = vmatmul.mubr.bf16.gmra.mrb[0].mxu0 %v478
      %v607 = vpop.f32.mrb[0].mxu0
      %v608 = vadd.f32 0.0, %v607
      %v609 = vpop.f32.mrb[0].mxu0
      %v610 = vpop.f32.mrb[0].mxu0
      %v611 = vadd.f32 0.0, %v610
      %v612 = vpop.f32.mrb[0].mxu0
      %613 = vmatprep.mubr.bf16.mxu0 0
      %614 = vmatmul.mubr.bf16.gmra.mrb[0].mxu0 %v481
      %v615 = vpop.f32.mrb[0].mxu0
      %v616 = vadd.f32 0.0, %v615
      %v617 = vpop.f32.mrb[0].mxu0
      %v618 = vpop.f32.mrb[0].mxu0
      %v619 = vadd.f32 0.0, %v618
      %v620 = vpop.f32.mrb[0].mxu0
      %621 = vmatprep.mubr.bf16.mxu0 0
      %622 = vmatmul.mubr.bf16.gmra.mrb[0].mxu0 %v484
      %v623 = vpop.f32.mrb[0].mxu0
      %v624 = vadd.f32 0.0, %v623
      %v625 = vpop.f32.mrb[0].mxu0
      %v626 = vpop.f32.mrb[0].mxu0
      %v627 = vadd.f32 0.0, %v626
      %v628 = vpop.f32.mrb[0].mxu0
      %629 = vmatprep.mubr.bf16.mxu0 0
      %630 = vmatmul.mubr.bf16.gmra.mrb[0].mxu0 %v487
      %v631 = vpop.f32.mrb[0].mxu0
      %v632 = vadd.f32 0.0, %v631
      %v633 = vpop.f32.mrb[0].mxu0
      %v634 = vpop.f32.mrb[0].mxu0
      %v635 = vadd.f32 0.0, %v634
      %v636 = vpop.f32.mrb[0].mxu0
      %637 = vmatprep.mubr.bf16.mxu0 0
      %638 = vmatmul.mubr.bf16.gmra.mrb[0].mxu0 %v490
      %v639 = vpop.f32.mrb[0].mxu0
      %v640 = vadd.f32 0.0, %v639
      %v641 = vpop.f32.mrb[0].mxu0
      %v642 = vpop.f32.mrb[0].mxu0
      %v643 = vadd.f32 0.0, %v642
      %v644 = vpop.f32.mrb[0].mxu0
      %645 = vmatprep.mubr.bf16.mxu0 0
      %646 = vmatmul.mubr.bf16.gmra.mrb[0].mxu0 %v493
      %v647 = vpop.f32.mrb[0].mxu0
      %v648 = vadd.f32 0.0, %v647
      %v649 = vpop.f32.mrb[0].mxu0
      %v650 = vpop.f32.mrb[0].mxu0
      %v651 = vadd.f32 0.0, %v650
      %v652 = vpop.f32.mrb[0].mxu0
      %653 = vmatprep.mubr.bf16.mxu0 0
      %654 = vmatmul.mubr.bf16.gmra.mrb[0].mxu0 %v496
      %v655 = vpop.f32.mrb[0].mxu0
      %v656 = vadd.f32 0.0, %v655
      %v657 = vpop.f32.mrb[0].mxu0
      %v658 = vpop.f32.mrb[0].mxu0
      %v659 = vadd.f32 0.0, %v658
      %v660 = vpop.f32.mrb[0].mxu0
      %661 = vmatprep.mubr.bf16.mxu0 0
      %662 = vmatmul.mubr.bf16.gmra.mrb[0].mxu0 %v499
      %v663 = vpop.f32.mrb[0].mxu0
      %v664 = vadd.f32 0.0, %v663
      %v665 = vpop.f32.mrb[0].mxu0
      %v666 = vpop.f32.mrb[0].mxu0
      %v667 = vadd.f32 0.0, %v666
      %v668 = vpop.f32.mrb[0].mxu0
      %669 = vdwg.mxu0
      %v672 = vunpack.c.l.b16 %v208
      %v673 = vunpack.c.l.b16 %v209
      %v674 = vpack.c.b16 %v673, %v672
      %v676 = vsel %vm449, %v284, 0
      %v678 = vsel %vm449, %v285, 0
      %v680 = vsel %vm449, %v286, 0
      %v682 = vsel %vm449, %v287, 0
      %v684 = vsel %vm449, %v288, 0
      %v686 = vsel %vm449, %v289, 0
      %v688 = vsel %vm449, %v290, 0
      %v690 = vsel %vm449, %v291, 0
      %v692 = vsel %vm449, %v292, 0
      %v694 = vsel %vm449, %v293, 0
      %v696 = vsel %vm449, %v294, 0
      %v698 = vsel %vm449, %v295, 0
      %v700 = vsel %vm449, %v296, 0
      %v702 = vsel %vm449, %v297, 0
      %v704 = vsel %vm449, %v298, 0
      %v706 = vsel %vm449, %v299, 0
      %v708 = vsel %vm449, %v300, 0
      %710 = vmatprep.subr.bf16.mxu0 0
      %711 = vmatpush1.bf16.msra.mxu0 %v674
      %712 = vmatprep.subr.bf16.mxu0 0
      %713 = vmatpush1.bf16.msra.mxu0 0
      %714 = vmatprep.subr.bf16.mxu0 0
      %715 = vmatpush1.bf16.msra.mxu0 0
      %716 = vmatprep.subr.bf16.mxu0 0
      %717 = vmatpush1.bf16.msra.mxu0 0
      %718 = vmatprep.subr.bf16.mxu0 0
      %719 = vmatpush1.bf16.msra.mxu0 0
      %720 = vmatprep.subr.bf16.mxu0 0
      %721 = vmatpush1.bf16.msra.mxu0 0
      %722 = vmatprep.subr.bf16.mxu0 0
      %723 = vmatpush1.bf16.msra.mxu0 0
      %724 = vmatprep.subr.bf16.mxu0 0
      %725 = vmatpush1.bf16.msra.mxu0 0
      %726 = vmatprep.subr.bf16.mxu0 0
      %727 = vmatpush1.bf16.msra.mxu0 0
      %728 = vmatprep.subr.bf16.mxu0 0
      %729 = vmatpush1.bf16.msra.mxu0 0
      %730 = vmatprep.subr.bf16.mxu0 0
      %731 = vmatpush1.bf16.msra.mxu0 0
      %732 = vmatprep.subr.bf16.mxu0 0
      %733 = vmatpush1.bf16.msra.mxu0 0
      %734 = vmatprep.subr.bf16.mxu0 0
      %735 = vmatpush1.bf16.msra.mxu0 0
      %736 = vmatprep.subr.bf16.mxu0 0
      %737 = vmatpush1.bf16.msra.mxu0 0
      %738 = vmatprep.subr.bf16.mxu0 0
      %739 = vmatpush1.bf16.msra.mxu0 0
      %740 = vmatprep.subr.bf16.mxu0 0
      %741 = vmatpush1.bf16.msra.mxu0 0
      %742 = vmatprep.mubr.bf16.mxu0 0
      %743 = vmatmul.mubr.bf16.gmra.mrb[0].mxu0 %v676
      %v744 = vpop.f32.mrb[0].mxu0
      %v745 = vadd.f32 %v536, %v744
      %v746 = vpop.f32.mrb[0].mxu0
      %v747 = vpop.f32.mrb[0].mxu0
      %v748 = vadd.f32 %v539, %v747
      %v749 = vpop.f32.mrb[0].mxu0
      %750 = vmatprep.mubr.bf16.mxu0 0
      %751 = vmatmul.mubr.bf16.gmra.mrb[0].mxu0 %v678
      %v752 = vpop.f32.mrb[0].mxu0
      %v753 = vadd.f32 %v544, %v752
      %v754 = vpop.f32.mrb[0].mxu0
      %v755 = vpop.f32.mrb[0].mxu0
      %v756 = vadd.f32 %v547, %v755
      %v757 = vpop.f32.mrb[0].mxu0
      %758 = vmatprep.mubr.bf16.mxu0 0
      %759 = vmatmul.mubr.bf16.gmra.mrb[0].mxu0 %v680
      %v760 = vpop.f32.mrb[0].mxu0
      %v761 = vadd.f32 %v552, %v760
      %v762 = vpop.f32.mrb[0].mxu0
      %v763 = vpop.f32.mrb[0].mxu0
      %v764 = vadd.f32 %v555, %v763
      %v765 = vpop.f32.mrb[0].mxu0
      %766 = vmatprep.mubr.bf16.mxu0 0
      %767 = vmatmul.mubr.bf16.gmra.mrb[0].mxu0 %v682
      %v768 = vpop.f32.mrb[0].mxu0
      %v769 = vadd.f32 %v560, %v768
      %v770 = vpop.f32.mrb[0].mxu0
      %v771 = vpop.f32.mrb[0].mxu0
      %v772 = vadd.f32 %v563, %v771
      %v773 = vpop.f32.mrb[0].mxu0
      %774 = vmatprep.mubr.bf16.mxu0 0
      %775 = vmatmul.mubr.bf16.gmra.mrb[0].mxu0 %v684
      %v776 = vpop.f32.mrb[0].mxu0
      %v777 = vadd.f32 %v568, %v776
      %v778 = vpop.f32.mrb[0].mxu0
      %v779 = vpop.f32.mrb[0].mxu0
      %v780 = vadd.f32 %v571, %v779
      %v781 = vpop.f32.mrb[0].mxu0
      %782 = vmatprep.mubr.bf16.mxu0 0
      %783 = vmatmul.mubr.bf16.gmra.mrb[0].mxu0 %v686
      %v784 = vpop.f32.mrb[0].mxu0
      %v785 = vadd.f32 %v576, %v784
      %v786 = vpop.f32.mrb[0].mxu0
      %v787 = vpop.f32.mrb[0].mxu0
      %v788 = vadd.f32 %v579, %v787
      %v789 = vpop.f32.mrb[0].mxu0
      %790 = vmatprep.mubr.bf16.mxu0 0
      %791 = vmatmul.mubr.bf16.gmra.mrb[0].mxu0 %v688
      %v792 = vpop.f32.mrb[0].mxu0
      %v793 = vadd.f32 %v584, %v792
      %v794 = vpop.f32.mrb[0].mxu0
      %v795 = vpop.f32.mrb[0].mxu0
      %v796 = vadd.f32 %v587, %v795
      %v797 = vpop.f32.mrb[0].mxu0
      %798 = vmatprep.mubr.bf16.mxu0 0
      %799 = vmatmul.mubr.bf16.gmra.mrb[0].mxu0 %v690
      %v800 = vpop.f32.mrb[0].mxu0
      %v801 = vadd.f32 %v592, %v800
      %v802 = vpop.f32.mrb[0].mxu0
      %v803 = vpop.f32.mrb[0].mxu0
      %v804 = vadd.f32 %v595, %v803
      %v805 = vpop.f32.mrb[0].mxu0
      %806 = vmatprep.mubr.bf16.mxu0 0
      %807 = vmatmul.mubr.bf16.gmra.mrb[0].mxu0 %v692
      %v808 = vpop.f32.mrb[0].mxu0
      %v809 = vadd.f32 %v600, %v808
      %v810 = vpop.f32.mrb[0].mxu0
      %v811 = vpop.f32.mrb[0].mxu0
      %v812 = vadd.f32 %v603, %v811
      %v813 = vpop.f32.mrb[0].mxu0
      %814 = vmatprep.mubr.bf16.mxu0 0
      %815 = vmatmul.mubr.bf16.gmra.mrb[0].mxu0 %v694
      %v816 = vpop.f32.mrb[0].mxu0
      %v817 = vadd.f32 %v608, %v816
      %v818 = vpop.f32.mrb[0].mxu0
      %v819 = vpop.f32.mrb[0].mxu0
      %v820 = vadd.f32 %v611, %v819
      %v821 = vpop.f32.mrb[0].mxu0
      %822 = vmatprep.mubr.bf16.mxu0 0
      %823 = vmatmul.mubr.bf16.gmra.mrb[0].mxu0 %v696
      %v824 = vpop.f32.mrb[0].mxu0
      %v825 = vadd.f32 %v616, %v824
      %v826 = vpop.f32.mrb[0].mxu0
      %v827 = vpop.f32.mrb[0].mxu0
      %v828 = vadd.f32 %v619, %v827
      %v829 = vpop.f32.mrb[0].mxu0
      %830 = vmatprep.mubr.bf16.mxu0 0
      %831 = vmatmul.mubr.bf16.gmra.mrb[0].mxu0 %v698
      %v832 = vpop.f32.mrb[0].mxu0
      %v833 = vadd.f32 %v624, %v832
      %v834 = vpop.f32.mrb[0].mxu0
      %v835 = vpop.f32.mrb[0].mxu0
      %v836 = vadd.f32 %v627, %v835
      %v837 = vpop.f32.mrb[0].mxu0
      %838 = vmatprep.mubr.bf16.mxu0 0
      %839 = vmatmul.mubr.bf16.gmra.mrb[0].mxu0 %v700
      %v840 = vpop.f32.mrb[0].mxu0
      %v841 = vadd.f32 %v632, %v840
      %v842 = vpop.f32.mrb[0].mxu0
      %v843 = vpop.f32.mrb[0].mxu0
      %v844 = vadd.f32 %v635, %v843
      %v845 = vpop.f32.mrb[0].mxu0
      %846 = vmatprep.mubr.bf16.mxu0 0
      %847 = vmatmul.mubr.bf16.gmra.mrb[0].mxu0 %v702
      %v848 = vpop.f32.mrb[0].mxu0
      %v849 = vadd.f32 %v640, %v848
      %v850 = vpop.f32.mrb[0].mxu0
      %v851 = vpop.f32.mrb[0].mxu0
      %v852 = vadd.f32 %v643, %v851
      %v853 = vpop.f32.mrb[0].mxu0
      %854 = vmatprep.mubr.bf16.mxu0 0
      %855 = vmatmul.mubr.bf16.gmra.mrb[0].mxu0 %v704
      %v856 = vpop.f32.mrb[0].mxu0
      %v857 = vadd.f32 %v648, %v856
      %v858 = vpop.f32.mrb[0].mxu0
      %v859 = vpop.f32.mrb[0].mxu0
      %v860 = vadd.f32 %v651, %v859
      %v861 = vpop.f32.mrb[0].mxu0
      %862 = vmatprep.mubr.bf16.mxu0 0
      %863 = vmatmul.mubr.bf16.gmra.mrb[0].mxu0 %v706
      %v864 = vpop.f32.mrb[0].mxu0
      %v865 = vadd.f32 %v656, %v864
      %v866 = vpop.f32.mrb[0].mxu0
      %v867 = vpop.f32.mrb[0].mxu0
      %v868 = vadd.f32 %v659, %v867
      %v869 = vpop.f32.mrb[0].mxu0
      %870 = vmatprep.mubr.bf16.mxu0 0
      %871 = vmatmul.mubr.bf16.gmra.mrb[0].mxu0 %v708
      %v872 = vpop.f32.mrb[0].mxu0
      %v873 = vadd.f32 %v664, %v872
      %v874 = vpop.f32.mrb[0].mxu0
      %v875 = vpop.f32.mrb[0].mxu0
      %v876 = vadd.f32 %v667, %v875
      %v877 = vpop.f32.mrb[0].mxu0
      %878 = vdwg.mxu0
      %v879 = vld [vmem:[%s166 + $0x8] sm:$0xf]
      %v880 = vld [vmem:[%s166 + $0xc] sm:$0xf]
      %v881 = vld [vmem:[%s166 + $0x10] sm:$0xf]
      %v882 = vld [vmem:[%s166 + $0x14] sm:$0xf]
      %v883 = vld [vmem:[%s166 + $0x18] sm:$0xf]
      %v884 = vld [vmem:[%s166 + $0x1c] sm:$0xf]
      %v885 = vld [vmem:[%s166 + $0x20] sm:$0xf]
      %v886 = vld [vmem:[%s166 + $0x24] sm:$0xf]
      %v887 = vld [vmem:[%s166 + $0x28] sm:$0xf]
      %v888 = vld [vmem:[%s166 + $0x2c] sm:$0xf]
      %v889 = vld [vmem:[%s166 + $0x30] sm:$0xf]
      %v890 = vld [vmem:[%s166 + $0x34] sm:$0xf]
      %v891 = vld [vmem:[%s166 + $0x38] sm:$0xf]
      %v892 = vld [vmem:[%s166 + $0x3c] sm:$0xf]
      %v893 = vld [vmem:[%s166 + $0x40] sm:$0xf]
      %v894 = vld [vmem:[%s166 + $0x44] sm:$0xf]
      %v895 = vld [vmem:[%s166 + $0x48] sm:$0xf]
      %v896 = vld [vmem:[%s166 + $0x4c] sm:$0xf]
      %v897 = vld [vmem:[%s166 + $0x50] sm:$0xf]
      %v898 = vld [vmem:[%s166 + $0x54] sm:$0xf]
      %v899 = vld [vmem:[%s166 + $0x58] sm:$0xf]
      %v900 = vld [vmem:[%s166 + $0x5c] sm:$0xf]
      %v901 = vld [vmem:[%s166 + $0x60] sm:$0xf]
      %v902 = vld [vmem:[%s166 + $0x64] sm:$0xf]
      %v903 = vld [vmem:[%s166 + $0x68] sm:$0xf]
      %v904 = vld [vmem:[%s166 + $0x6c] sm:$0xf]
      %v905 = vld [vmem:[%s166 + $0x70] sm:$0xf]
      %v906 = vld [vmem:[%s166 + $0x74] sm:$0xf]
      %v907 = vld [vmem:[%s166 + $0x78] sm:$0xf]
      %v908 = vld [vmem:[%s166 + $0x7c] sm:$0xf]
      %v909 = vld [vmem:[%s166 + $0x80] sm:$0xf]
      %v910 = vld [vmem:[%s166 + $0x84] sm:$0xf]
      %v911 = vld [vmem:[%s166 + $0x88] sm:$0xf]
      %v912 = vld [vmem:[%s166 + $0x8c] sm:$0xf]
      %v913 = vld [vmem:[%s166 + $0x90] sm:$0x1]
      %s914 = scalar_lea.vmem %s1, 16
      %v915 = vld [vmem:[%s914] sm:$0xf]
      %v916 = vld [vmem:[%s914 + $0x4] sm:$0xf]
      %v952 = vunpack.c.l.b16 %v879
      %v953 = vunpack.c.l.b16 %v880
      %v954 = vunpack.c.l.b16 %v881
      %v955 = vunpack.c.l.b16 %v882
      %v956 = vunpack.c.l.b16 %v883
      %v957 = vunpack.c.l.b16 %v884
      %v958 = vunpack.c.l.b16 %v885
      %v959 = vunpack.c.l.b16 %v886
      %v960 = vunpack.c.l.b16 %v887
      %v961 = vunpack.c.l.b16 %v888
      %v962 = vunpack.c.l.b16 %v889
      %v963 = vunpack.c.l.b16 %v890
      %v964 = vunpack.c.l.b16 %v891
      %v965 = vunpack.c.l.b16 %v892
      %v966 = vunpack.c.l.b16 %v893
      %v967 = vunpack.c.l.b16 %v894
      %v968 = vunpack.c.l.b16 %v895
      %v969 = vunpack.c.l.b16 %v896
      %v970 = vunpack.c.l.b16 %v897
      %v971 = vunpack.c.l.b16 %v898
      %v972 = vunpack.c.l.b16 %v899
      %v973 = vunpack.c.l.b16 %v900
      %v974 = vunpack.c.l.b16 %v901
      %v975 = vunpack.c.l.b16 %v902
      %v976 = vunpack.c.l.b16 %v903
      %v977 = vunpack.c.l.b16 %v904
      %v978 = vunpack.c.l.b16 %v905
      %v979 = vunpack.c.l.b16 %v906
      %v980 = vunpack.c.l.b16 %v907
      %v981 = vunpack.c.l.b16 %v908
      %v982 = vunpack.c.l.b16 %v909
      %v983 = vunpack.c.l.b16 %v910
      %v984 = vunpack.c.l.b16 %v911
      %v985 = vunpack.c.l.b16 %v912
      %v986 = vunpack.c.l.b16 %v913
      %v987 = vpack.c.b16 %v953, %v952
      %v988 = vpack.c.b16 %v955, %v954
      %v989 = vpack.c.b16 %v957, %v956
      %v990 = vpack.c.b16 %v959, %v958
      %v991 = vpack.c.b16 %v961, %v960
      %v992 = vpack.c.b16 %v963, %v962
      %v993 = vpack.c.b16 %v965, %v964
      %v994 = vpack.c.b16 %v967, %v966
      %v995 = vpack.c.b16 %v969, %v968
      %v996 = vpack.c.b16 %v971, %v970
      %v997 = vpack.c.b16 %v973, %v972
      %v998 = vpack.c.b16 %v975, %v974
      %v999 = vpack.c.b16 %v977, %v976
      %v1000 = vpack.c.b16 %v979, %v978
      %v1001 = vpack.c.b16 %v981, %v980
      %v1002 = vpack.c.b16 %v983, %v982
      %v1003 = vpack.c.b16 %v985, %v984
      %v1004 = vpack.c.b16 %v986, %v986
      %v1006 = vshrl.u32 %v987, 16
      %v1008 = vshll.u32 %v987, 16
      %v1010 = vrot.slane %v1008, 1
      %v1011 = vor.u32 %v1006, %v1010
      %v1013 = vshll.u32 %v988, 16
      %v1015 = vrot.slane %v1013, 1
      %v1016 = vsel %vm302, %v1011, %v1015
      %v1017 = vshrl.u32 %v988, 16
      %v1019 = vor.u32 %v1017, %v1015
      %v1021 = vshll.u32 %v989, 16
      %v1023 = vrot.slane %v1021, 1
      %v1024 = vsel %vm302, %v1019, %v1023
      %v1025 = vshrl.u32 %v989, 16
      %v1027 = vor.u32 %v1025, %v1023
      %v1029 = vshll.u32 %v990, 16
      %v1031 = vrot.slane %v1029, 1
      %v1032 = vsel %vm302, %v1027, %v1031
      %v1033 = vshrl.u32 %v990, 16
      %v1035 = vor.u32 %v1033, %v1031
      %v1037 = vshll.u32 %v991, 16
      %v1039 = vrot.slane %v1037, 1
      %v1040 = vsel %vm302, %v1035, %v1039
      %v1041 = vshrl.u32 %v991, 16
      %v1043 = vor.u32 %v1041, %v1039
      %v1045 = vshll.u32 %v992, 16
      %v1047 = vrot.slane %v1045, 1
      %v1048 = vsel %vm302, %v1043, %v1047
      %v1049 = vshrl.u32 %v992, 16
      %v1051 = vor.u32 %v1049, %v1047
      %v1053 = vshll.u32 %v993, 16
      %v1055 = vrot.slane %v1053, 1
      %v1056 = vsel %vm302, %v1051, %v1055
      %v1057 = vshrl.u32 %v993, 16
      %v1059 = vor.u32 %v1057, %v1055
      %v1061 = vshll.u32 %v994, 16
      %v1063 = vrot.slane %v1061, 1
      %v1064 = vsel %vm302, %v1059, %v1063
      %v1065 = vshrl.u32 %v994, 16
      %v1067 = vor.u32 %v1065, %v1063
      %v1069 = vshll.u32 %v995, 16
      %v1071 = vrot.slane %v1069, 1
      %v1072 = vsel %vm302, %v1067, %v1071
      %v1073 = vshrl.u32 %v995, 16
      %v1075 = vor.u32 %v1073, %v1071
      %v1077 = vshll.u32 %v996, 16
      %v1079 = vrot.slane %v1077, 1
      %v1080 = vsel %vm302, %v1075, %v1079
      %v1081 = vshrl.u32 %v996, 16
      %v1083 = vor.u32 %v1081, %v1079
      %v1085 = vshll.u32 %v997, 16
      %v1087 = vrot.slane %v1085, 1
      %v1088 = vsel %vm302, %v1083, %v1087
      %v1089 = vshrl.u32 %v997, 16
      %v1091 = vor.u32 %v1089, %v1087
      %v1093 = vshll.u32 %v998, 16
      %v1095 = vrot.slane %v1093, 1
      %v1096 = vsel %vm302, %v1091, %v1095
      %v1097 = vshrl.u32 %v998, 16
      %v1099 = vor.u32 %v1097, %v1095
      %v1101 = vshll.u32 %v999, 16
      %v1103 = vrot.slane %v1101, 1
      %v1104 = vsel %vm302, %v1099, %v1103
      %v1105 = vshrl.u32 %v999, 16
      %v1107 = vor.u32 %v1105, %v1103
      %v1109 = vshll.u32 %v1000, 16
      %v1111 = vrot.slane %v1109, 1
      %v1112 = vsel %vm302, %v1107, %v1111
      %v1113 = vshrl.u32 %v1000, 16
      %v1115 = vor.u32 %v1113, %v1111
      %v1117 = vshll.u32 %v1001, 16
      %v1119 = vrot.slane %v1117, 1
      %v1120 = vsel %vm302, %v1115, %v1119
      %v1121 = vshrl.u32 %v1001, 16
      %v1123 = vor.u32 %v1121, %v1119
      %v1125 = vshll.u32 %v1002, 16
      %v1127 = vrot.slane %v1125, 1
      %v1128 = vsel %vm302, %v1123, %v1127
      %v1129 = vshrl.u32 %v1002, 16
      %v1131 = vor.u32 %v1129, %v1127
      %v1133 = vshll.u32 %v1003, 16
      %v1135 = vrot.slane %v1133, 1
      %v1136 = vsel %vm302, %v1131, %v1135
      %v1137 = vshrl.u32 %v1003, 16
      %v1139 = vor.u32 %v1137, %v1135
      %v1141 = vshll.u32 %v1004, 16
      %v1143 = vrot.slane %v1141, 1
      %v1144 = vsel %vm302, %v1139, %v1143
      %v1147 = vunpack.c.l.b16 %v915
      %v1148 = vunpack.c.l.b16 %v916
      %v1149 = vpack.c.b16 %v1148, %v1147
      %v1152 = vsel %vm449, %v1016, 0
      %v1155 = vsel %vm449, %v1024, 0
      %v1158 = vsel %vm449, %v1032, 0
      %v1161 = vsel %vm449, %v1040, 0
      %v1164 = vsel %vm449, %v1048, 0
      %v1167 = vsel %vm449, %v1056, 0
      %v1170 = vsel %vm449, %v1064, 0
      %v1173 = vsel %vm449, %v1072, 0
      %v1176 = vsel %vm449, %v1080, 0
      %v1179 = vsel %vm449, %v1088, 0
      %v1182 = vsel %vm449, %v1096, 0
      %v1185 = vsel %vm449, %v1104, 0
      %v1188 = vsel %vm449, %v1112, 0
      %v1191 = vsel %vm449, %v1120, 0
      %v1194 = vsel %vm449, %v1128, 0
      %v1197 = vsel %vm449, %v1136, 0
      %v1200 = vsel %vm449, %v1144, 0
      %1202 = vmatprep.subr.bf16.mxu0 0
      %1203 = vmatpush1.bf16.msra.mxu0 %v1149
      %1204 = vmatprep.subr.bf16.mxu0 0
      %1205 = vmatpush1.bf16.msra.mxu0 0
      %1206 = vmatprep.subr.bf16.mxu0 0
      %1207 = vmatpush1.bf16.msra.mxu0 0
      %1208 = vmatprep.subr.bf16.mxu0 0
      %1209 = vmatpush1.bf16.msra.mxu0 0
      %1210 = vmatprep.subr.bf16.mxu0 0
      %1211 = vmatpush1.bf16.msra.mxu0 0
      %1212 = vmatprep.subr.bf16.mxu0 0
      %1213 = vmatpush1.bf16.msra.mxu0 0
      %1214 = vmatprep.subr.bf16.mxu0 0
      %1215 = vmatpush1.bf16.msra.mxu0 0
      %1216 = vmatprep.subr.bf16.mxu0 0
      %1217 = vmatpush1.bf16.msra.mxu0 0
      %1218 = vmatprep.subr.bf16.mxu0 0
      %1219 = vmatpush1.bf16.msra.mxu0 0
      %1220 = vmatprep.subr.bf16.mxu0 0
      %1221 = vmatpush1.bf16.msra.mxu0 0
      %1222 = vmatprep.subr.bf16.mxu0 0
      %1223 = vmatpush1.bf16.msra.mxu0 0
      %1224 = vmatprep.subr.bf16.mxu0 0
      %1225 = vmatpush1.bf16.msra.mxu0 0
      %1226 = vmatprep.subr.bf16.mxu0 0
      %1227 = vmatpush1.bf16.msra.mxu0 0
      %1228 = vmatprep.subr.bf16.mxu0 0
      %1229 = vmatpush1.bf16.msra.mxu0 0
      %1230 = vmatprep.subr.bf16.mxu0 0
      %1231 = vmatpush1.bf16.msra.mxu0 0
      %1232 = vmatprep.subr.bf16.mxu0 0
      %1233 = vmatpush1.bf16.msra.mxu0 0
      %1234 = vmatprep.mubr.bf16.mxu0 0
      %1235 = vmatmul.mubr.bf16.gmra.mrb[0].mxu0 %v1152
      %v1236 = vpop.f32.mrb[0].mxu0
      %v1237 = vadd.f32 0.0, %v1236
      %v1238 = vpop.f32.mrb[0].mxu0
      %v1239 = vpop.f32.mrb[0].mxu0
      %v1240 = vadd.f32 0.0, %v1239
      %v1241 = vpop.f32.mrb[0].mxu0
      %1242 = vmatprep.mubr.bf16.mxu0 0
      %1243 = vmatmul.mubr.bf16.gmra.mrb[0].mxu0 %v1155
      %v1244 = vpop.f32.mrb[0].mxu0
      %v1245 = vadd.f32 0.0, %v1244
      %v1246 = vpop.f32.mrb[0].mxu0
      %v1247 = vpop.f32.mrb[0].mxu0
      %v1248 = vadd.f32 0.0, %v1247
      %v1249 = vpop.f32.mrb[0].mxu0
      %1250 = vmatprep.mubr.bf16.mxu0 0
      %1251 = vmatmul.mubr.bf16.gmra.mrb[0].mxu0 %v1158
      %v1252 = vpop.f32.mrb[0].mxu0
      %v1253 = vadd.f32 0.0, %v1252
      %v1254 = vpop.f32.mrb[0].mxu0
      %v1255 = vpop.f32.mrb[0].mxu0
      %v1256 = vadd.f32 0.0, %v1255
      %v1257 = vpop.f32.mrb[0].mxu0
      %1258 = vmatprep.mubr.bf16.mxu0 0
      %1259 = vmatmul.mubr.bf16.gmra.mrb[0].mxu0 %v1161
      %v1260 = vpop.f32.mrb[0].mxu0
      %v1261 = vadd.f32 0.0, %v1260
      %v1262 = vpop.f32.mrb[0].mxu0
      %v1263 = vpop.f32.mrb[0].mxu0
      %v1264 = vadd.f32 0.0, %v1263
      %v1265 = vpop.f32.mrb[0].mxu0
      %1266 = vmatprep.mubr.bf16.mxu0 0
      %1267 = vmatmul.mubr.bf16.gmra.mrb[0].mxu0 %v1164
      %v1268 = vpop.f32.mrb[0].mxu0
      %v1269 = vadd.f32 0.0, %v1268
      %v1270 = vpop.f32.mrb[0].mxu0
      %v1271 = vpop.f32.mrb[0].mxu0
      %v1272 = vadd.f32 0.0, %v1271
      %v1273 = vpop.f32.mrb[0].mxu0
      %1274 = vmatprep.mubr.bf16.mxu0 0
      %1275 = vmatmul.mubr.bf16.gmra.mrb[0].mxu0 %v1167
      %v1276 = vpop.f32.mrb[0].mxu0
      %v1277 = vadd.f32 0.0, %v1276
      %v1278 = vpop.f32.mrb[0].mxu0
      %v1279 = vpop.f32.mrb[0].mxu0
      %v1280 = vadd.f32 0.0, %v1279
      %v1281 = vpop.f32.mrb[0].mxu0
      %1282 = vmatprep.mubr.bf16.mxu0 0
      %1283 = vmatmul.mubr.bf16.gmra.mrb[0].mxu0 %v1170
      %v1284 = vpop.f32.mrb[0].mxu0
      %v1285 = vadd.f32 0.0, %v1284
      %v1286 = vpop.f32.mrb[0].mxu0
      %v1287 = vpop.f32.mrb[0].mxu0
      %v1288 = vadd.f32 0.0, %v1287
      %v1289 = vpop.f32.mrb[0].mxu0
      %1290 = vmatprep.mubr.bf16.mxu0 0
      %1291 = vmatmul.mubr.bf16.gmra.mrb[0].mxu0 %v1173
      %v1292 = vpop.f32.mrb[0].mxu0
      %v1293 = vadd.f32 0.0, %v1292
      %v1294 = vpop.f32.mrb[0].mxu0
      %v1295 = vpop.f32.mrb[0].mxu0
      %v1296 = vadd.f32 0.0, %v1295
      %v1297 = vpop.f32.mrb[0].mxu0
      %1298 = vmatprep.mubr.bf16.mxu0 0
      %1299 = vmatmul.mubr.bf16.gmra.mrb[0].mxu0 %v1176
      %v1300 = vpop.f32.mrb[0].mxu0
      %v1301 = vadd.f32 0.0, %v1300
      %v1302 = vpop.f32.mrb[0].mxu0
      %v1303 = vpop.f32.mrb[0].mxu0
      %v1304 = vadd.f32 0.0, %v1303
      %v1305 = vpop.f32.mrb[0].mxu0
      %1306 = vmatprep.mubr.bf16.mxu0 0
      %1307 = vmatmul.mubr.bf16.gmra.mrb[0].mxu0 %v1179
      %v1308 = vpop.f32.mrb[0].mxu0
      %v1309 = vadd.f32 0.0, %v1308
      %v1310 = vpop.f32.mrb[0].mxu0
      %v1311 = vpop.f32.mrb[0].mxu0
      %v1312 = vadd.f32 0.0, %v1311
      %v1313 = vpop.f32.mrb[0].mxu0
      %1314 = vmatprep.mubr.bf16.mxu0 0
      %1315 = vmatmul.mubr.bf16.gmra.mrb[0].mxu0 %v1182
      %v1316 = vpop.f32.mrb[0].mxu0
      %v1317 = vadd.f32 0.0, %v1316
      %v1318 = vpop.f32.mrb[0].mxu0
      %v1319 = vpop.f32.mrb[0].mxu0
      %v1320 = vadd.f32 0.0, %v1319
      %v1321 = vpop.f32.mrb[0].mxu0
      %1322 = vmatprep.mubr.bf16.mxu0 0
      %1323 = vmatmul.mubr.bf16.gmra.mrb[0].mxu0 %v1185
      %v1324 = vpop.f32.mrb[0].mxu0
      %v1325 = vadd.f32 0.0, %v1324
      %v1326 = vpop.f32.mrb[0].mxu0
      %v1327 = vpop.f32.mrb[0].mxu0
      %v1328 = vadd.f32 0.0, %v1327
      %v1329 = vpop.f32.mrb[0].mxu0
      %1330 = vmatprep.mubr.bf16.mxu0 0
      %1331 = vmatmul.mubr.bf16.gmra.mrb[0].mxu0 %v1188
      %v1332 = vpop.f32.mrb[0].mxu0
      %v1333 = vadd.f32 0.0, %v1332
      %v1334 = vpop.f32.mrb[0].mxu0
      %v1335 = vpop.f32.mrb[0].mxu0
      %v1336 = vadd.f32 0.0, %v1335
      %v1337 = vpop.f32.mrb[0].mxu0
      %1338 = vmatprep.mubr.bf16.mxu0 0
      %1339 = vmatmul.mubr.bf16.gmra.mrb[0].mxu0 %v1191
      %v1340 = vpop.f32.mrb[0].mxu0
      %v1341 = vadd.f32 0.0, %v1340
      %v1342 = vpop.f32.mrb[0].mxu0
      %v1343 = vpop.f32.mrb[0].mxu0
      %v1344 = vadd.f32 0.0, %v1343
      %v1345 = vpop.f32.mrb[0].mxu0
      %1346 = vmatprep.mubr.bf16.mxu0 0
      %1347 = vmatmul.mubr.bf16.gmra.mrb[0].mxu0 %v1194
      %v1348 = vpop.f32.mrb[0].mxu0
      %v1349 = vadd.f32 0.0, %v1348
      %v1350 = vpop.f32.mrb[0].mxu0
      %v1351 = vpop.f32.mrb[0].mxu0
      %v1352 = vadd.f32 0.0, %v1351
      %v1353 = vpop.f32.mrb[0].mxu0
      %1354 = vmatprep.mubr.bf16.mxu0 0
      %1355 = vmatmul.mubr.bf16.gmra.mrb[0].mxu0 %v1197
      %v1356 = vpop.f32.mrb[0].mxu0
      %v1357 = vadd.f32 0.0, %v1356
      %v1358 = vpop.f32.mrb[0].mxu0
      %v1359 = vpop.f32.mrb[0].mxu0
      %v1360 = vadd.f32 0.0, %v1359
      %v1361 = vpop.f32.mrb[0].mxu0
      %1362 = vmatprep.mubr.bf16.mxu0 0
      %1363 = vmatmul.mubr.bf16.gmra.mrb[0].mxu0 %v1200
      %v1364 = vpop.f32.mrb[0].mxu0
      %v1365 = vadd.f32 0.0, %v1364
      %v1366 = vpop.f32.mrb[0].mxu0
      %v1367 = vpop.f32.mrb[0].mxu0
      %v1368 = vadd.f32 0.0, %v1367
      %v1369 = vpop.f32.mrb[0].mxu0
      %1370 = vdwg.mxu0
      %v1371 = vadd.f32 %v745, %v1237
      %v1372 = vadd.f32 %v748, %v1240
      %v1373 = vadd.f32 %v753, %v1245
      %v1374 = vadd.f32 %v756, %v1248
      %v1375 = vadd.f32 %v761, %v1253
      %v1376 = vadd.f32 %v764, %v1256
      %v1377 = vadd.f32 %v769, %v1261
      %v1378 = vadd.f32 %v772, %v1264
      %v1379 = vadd.f32 %v777, %v1269
      %v1380 = vadd.f32 %v780, %v1272
      %v1381 = vadd.f32 %v785, %v1277
      %v1382 = vadd.f32 %v788, %v1280
      %v1383 = vadd.f32 %v793, %v1285
      %v1384 = vadd.f32 %v796, %v1288
      %v1385 = vadd.f32 %v801, %v1293
      %v1386 = vadd.f32 %v804, %v1296
      %v1387 = vadd.f32 %v809, %v1301
      %v1388 = vadd.f32 %v812, %v1304
      %v1389 = vadd.f32 %v817, %v1309
      %v1390 = vadd.f32 %v820, %v1312
      %v1391 = vadd.f32 %v825, %v1317
      %v1392 = vadd.f32 %v828, %v1320
      %v1393 = vadd.f32 %v833, %v1325
      %v1394 = vadd.f32 %v836, %v1328
      %v1395 = vadd.f32 %v841, %v1333
      %v1396 = vadd.f32 %v844, %v1336
      %v1397 = vadd.f32 %v849, %v1341
      %v1398 = vadd.f32 %v852, %v1344
      %v1399 = vadd.f32 %v857, %v1349
      %v1400 = vadd.f32 %v860, %v1352
      %v1401 = vadd.f32 %v865, %v1357
      %v1402 = vadd.f32 %v868, %v1360
      %v1403 = vadd.f32 %v873, %v1365
      %v1404 = vadd.f32 %v876, %v1368
      %v1405 = vld [vmem:[%s166 + $0x8] sm:$0xe]
      %s1406 = scalar_lea.vmem %s1, 24
      %v1407 = vld [vmem:[%s1406] sm:$0xf]
      %v1408 = vld [vmem:[%s1406 + $0x4] sm:$0xf]
      %v1410 = vunpack.c.l.b16 %v1405
      %v1411 = vpack.c.b16 %v953, %v1410
      %vm1412 = vcmask 1046528
      %v1413 = vrot.slane %v1411, 1
      %v1414 = vrot.slane %v988, 1
      %v1415 = vsel %vm1412, %v1413, %v1414
      %v1416 = vrot.slane %v989, 1
      %v1417 = vsel %vm1412, %v1414, %v1416
      %v1418 = vrot.slane %v990, 1
      %v1419 = vsel %vm1412, %v1416, %v1418
      %v1420 = vrot.slane %v991, 1
      %v1421 = vsel %vm1412, %v1418, %v1420
      %v1422 = vrot.slane %v992, 1
      %v1423 = vsel %vm1412, %v1420, %v1422
      %v1424 = vrot.slane %v993, 1
      %v1425 = vsel %vm1412, %v1422, %v1424
      %v1426 = vrot.slane %v994, 1
      %v1427 = vsel %vm1412, %v1424, %v1426
      %v1428 = vrot.slane %v995, 1
      %v1429 = vsel %vm1412, %v1426, %v1428
      %v1430 = vrot.slane %v996, 1
      %v1431 = vsel %vm1412, %v1428, %v1430
      %v1432 = vrot.slane %v997, 1
      %v1433 = vsel %vm1412, %v1430, %v1432
      %v1434 = vrot.slane %v998, 1
      %v1435 = vsel %vm1412, %v1432, %v1434
      %v1436 = vrot.slane %v999, 1
      %v1437 = vsel %vm1412, %v1434, %v1436
      %v1438 = vrot.slane %v1000, 1
      %v1439 = vsel %vm1412, %v1436, %v1438
      %v1440 = vrot.slane %v1001, 1
      %v1441 = vsel %vm1412, %v1438, %v1440
      %v1442 = vrot.slane %v1002, 1
      %v1443 = vsel %vm1412, %v1440, %v1442
      %v1444 = vrot.slane %v1003, 1
      %v1445 = vsel %vm1412, %v1442, %v1444
      %v1446 = vrot.slane %v1004, 1
      %v1447 = vsel %vm1412, %v1444, %v1446
      %v1450 = vunpack.c.l.b16 %v1407
      %v1451 = vunpack.c.l.b16 %v1408
      %v1452 = vpack.c.b16 %v1451, %v1450
      %v1455 = vsel %vm449, %v1415, 0
      %v1458 = vsel %vm449, %v1417, 0
      %v1461 = vsel %vm449, %v1419, 0
      %v1464 = vsel %vm449, %v1421, 0
      %v1467 = vsel %vm449, %v1423, 0
      %v1470 = vsel %vm449, %v1425, 0
      %v1473 = vsel %vm449, %v1427, 0
      %v1476 = vsel %vm449, %v1429, 0
      %v1479 = vsel %vm449, %v1431, 0
      %v1482 = vsel %vm449, %v1433, 0
      %v1485 = vsel %vm449, %v1435, 0
      %v1488 = vsel %vm449, %v1437, 0
      %v1491 = vsel %vm449, %v1439, 0
      %v1494 = vsel %vm449, %v1441, 0
      %v1497 = vsel %vm449, %v1443, 0
      %v1500 = vsel %vm449, %v1445, 0
      %v1503 = vsel %vm449, %v1447, 0
      %1505 = vmatprep.subr.bf16.mxu0 0
      %1506 = vmatpush1.bf16.msra.mxu0 %v1452
      %1507 = vmatprep.subr.bf16.mxu0 0
      %1508 = vmatpush1.bf16.msra.mxu0 0
      %1509 = vmatprep.subr.bf16.mxu0 0
      %1510 = vmatpush1.bf16.msra.mxu0 0
      %1511 = vmatprep.subr.bf16.mxu0 0
      %1512 = vmatpush1.bf16.msra.mxu0 0
      %1513 = vmatprep.subr.bf16.mxu0 0
      %1514 = vmatpush1.bf16.msra.mxu0 0
      %1515 = vmatprep.subr.bf16.mxu0 0
      %1516 = vmatpush1.bf16.msra.mxu0 0
      %1517 = vmatprep.subr.bf16.mxu0 0
      %1518 = vmatpush1.bf16.msra.mxu0 0
      %1519 = vmatprep.subr.bf16.mxu0 0
      %1520 = vmatpush1.bf16.msra.mxu0 0
      %1521 = vmatprep.subr.bf16.mxu0 0
      %1522 = vmatpush1.bf16.msra.mxu0 0
      %1523 = vmatprep.subr.bf16.mxu0 0
      %1524 = vmatpush1.bf16.msra.mxu0 0
      %1525 = vmatprep.subr.bf16.mxu0 0
      %1526 = vmatpush1.bf16.msra.mxu0 0
      %1527 = vmatprep.subr.bf16.mxu0 0
      %1528 = vmatpush1.bf16.msra.mxu0 0
      %1529 = vmatprep.subr.bf16.mxu0 0
      %1530 = vmatpush1.bf16.msra.mxu0 0
      %1531 = vmatprep.subr.bf16.mxu0 0
      %1532 = vmatpush1.bf16.msra.mxu0 0
      %1533 = vmatprep.subr.bf16.mxu0 0
      %1534 = vmatpush1.bf16.msra.mxu0 0
      %1535 = vmatprep.subr.bf16.mxu0 0
      %1536 = vmatpush1.bf16.msra.mxu0 0
      %1537 = vmatprep.mubr.bf16.mxu0 0
      %1538 = vmatmul.mubr.bf16.gmra.mrb[0].mxu0 %v1455
      %v1539 = vpop.f32.mrb[0].mxu0
      %v1540 = vadd.f32 0.0, %v1539
      %v1541 = vpop.f32.mrb[0].mxu0
      %v1542 = vpop.f32.mrb[0].mxu0
      %v1543 = vadd.f32 0.0, %v1542
      %v1544 = vpop.f32.mrb[0].mxu0
      %1545 = vmatprep.mubr.bf16.mxu0 0
      %1546 = vmatmul.mubr.bf16.gmra.mrb[0].mxu0 %v1458
      %v1547 = vpop.f32.mrb[0].mxu0
      %v1548 = vadd.f32 0.0, %v1547
      %v1549 = vpop.f32.mrb[0].mxu0
      %v1550 = vpop.f32.mrb[0].mxu0
      %v1551 = vadd.f32 0.0, %v1550
      %v1552 = vpop.f32.mrb[0].mxu0
      %1553 = vmatprep.mubr.bf16.mxu0 0
      %1554 = vmatmul.mubr.bf16.gmra.mrb[0].mxu0 %v1461
      %v1555 = vpop.f32.mrb[0].mxu0
      %v1556 = vadd.f32 0.0, %v1555
      %v1557 = vpop.f32.mrb[0].mxu0
      %v1558 = vpop.f32.mrb[0].mxu0
      %v1559 = vadd.f32 0.0, %v1558
      %v1560 = vpop.f32.mrb[0].mxu0
      %1561 = vmatprep.mubr.bf16.mxu0 0
      %1562 = vmatmul.mubr.bf16.gmra.mrb[0].mxu0 %v1464
      %v1563 = vpop.f32.mrb[0].mxu0
      %v1564 = vadd.f32 0.0, %v1563
      %v1565 = vpop.f32.mrb[0].mxu0
      %v1566 = vpop.f32.mrb[0].mxu0
      %v1567 = vadd.f32 0.0, %v1566
      %v1568 = vpop.f32.mrb[0].mxu0
      %1569 = vmatprep.mubr.bf16.mxu0 0
      %1570 = vmatmul.mubr.bf16.gmra.mrb[0].mxu0 %v1467
      %v1571 = vpop.f32.mrb[0].mxu0
      %v1572 = vadd.f32 0.0, %v1571
      %v1573 = vpop.f32.mrb[0].mxu0
      %v1574 = vpop.f32.mrb[0].mxu0
      %v1575 = vadd.f32 0.0, %v1574
      %v1576 = vpop.f32.mrb[0].mxu0
      %1577 = vmatprep.mubr.bf16.mxu0 0
      %1578 = vmatmul.mubr.bf16.gmra.mrb[0].mxu0 %v1470
      %v1579 = vpop.f32.mrb[0].mxu0
      %v1580 = vadd.f32 0.0, %v1579
      %v1581 = vpop.f32.mrb[0].mxu0
      %v1582 = vpop.f32.mrb[0].mxu0
      %v1583 = vadd.f32 0.0, %v1582
      %v1584 = vpop.f32.mrb[0].mxu0
      %1585 = vmatprep.mubr.bf16.mxu0 0
      %1586 = vmatmul.mubr.bf16.gmra.mrb[0].mxu0 %v1473
      %v1587 = vpop.f32.mrb[0].mxu0
      %v1588 = vadd.f32 0.0, %v1587
      %v1589 = vpop.f32.mrb[0].mxu0
      %v1590 = vpop.f32.mrb[0].mxu0
      %v1591 = vadd.f32 0.0, %v1590
      %v1592 = vpop.f32.mrb[0].mxu0
      %1593 = vmatprep.mubr.bf16.mxu0 0
      %1594 = vmatmul.mubr.bf16.gmra.mrb[0].mxu0 %v1476
      %v1595 = vpop.f32.mrb[0].mxu0
      %v1596 = vadd.f32 0.0, %v1595
      %v1597 = vpop.f32.mrb[0].mxu0
      %v1598 = vpop.f32.mrb[0].mxu0
      %v1599 = vadd.f32 0.0, %v1598
      %v1600 = vpop.f32.mrb[0].mxu0
      %1601 = vmatprep.mubr.bf16.mxu0 0
      %1602 = vmatmul.mubr.bf16.gmra.mrb[0].mxu0 %v1479
      %v1603 = vpop.f32.mrb[0].mxu0
      %v1604 = vadd.f32 0.0, %v1603
      %v1605 = vpop.f32.mrb[0].mxu0
      %v1606 = vpop.f32.mrb[0].mxu0
      %v1607 = vadd.f32 0.0, %v1606
      %v1608 = vpop.f32.mrb[0].mxu0
      %1609 = vmatprep.mubr.bf16.mxu0 0
      %1610 = vmatmul.mubr.bf16.gmra.mrb[0].mxu0 %v1482
      %v1611 = vpop.f32.mrb[0].mxu0
      %v1612 = vadd.f32 0.0, %v1611
      %v1613 = vpop.f32.mrb[0].mxu0
      %v1614 = vpop.f32.mrb[0].mxu0
      %v1615 = vadd.f32 0.0, %v1614
      %v1616 = vpop.f32.mrb[0].mxu0
      %1617 = vmatprep.mubr.bf16.mxu0 0
      %1618 = vmatmul.mubr.bf16.gmra.mrb[0].mxu0 %v1485
      %v1619 = vpop.f32.mrb[0].mxu0
      %v1620 = vadd.f32 0.0, %v1619
      %v1621 = vpop.f32.mrb[0].mxu0
      %v1622 = vpop.f32.mrb[0].mxu0
      %v1623 = vadd.f32 0.0, %v1622
      %v1624 = vpop.f32.mrb[0].mxu0
      %1625 = vmatprep.mubr.bf16.mxu0 0
      %1626 = vmatmul.mubr.bf16.gmra.mrb[0].mxu0 %v1488
      %v1627 = vpop.f32.mrb[0].mxu0
      %v1628 = vadd.f32 0.0, %v1627
      %v1629 = vpop.f32.mrb[0].mxu0
      %v1630 = vpop.f32.mrb[0].mxu0
      %v1631 = vadd.f32 0.0, %v1630
      %v1632 = vpop.f32.mrb[0].mxu0
      %1633 = vmatprep.mubr.bf16.mxu0 0
      %1634 = vmatmul.mubr.bf16.gmra.mrb[0].mxu0 %v1491
      %v1635 = vpop.f32.mrb[0].mxu0
      %v1636 = vadd.f32 0.0, %v1635
      %v1637 = vpop.f32.mrb[0].mxu0
      %v1638 = vpop.f32.mrb[0].mxu0
      %v1639 = vadd.f32 0.0, %v1638
      %v1640 = vpop.f32.mrb[0].mxu0
      %1641 = vmatprep.mubr.bf16.mxu0 0
      %1642 = vmatmul.mubr.bf16.gmra.mrb[0].mxu0 %v1494
      %v1643 = vpop.f32.mrb[0].mxu0
      %v1644 = vadd.f32 0.0, %v1643
      %v1645 = vpop.f32.mrb[0].mxu0
      %v1646 = vpop.f32.mrb[0].mxu0
      %v1647 = vadd.f32 0.0, %v1646
      %v1648 = vpop.f32.mrb[0].mxu0
      %1649 = vmatprep.mubr.bf16.mxu0 0
      %1650 = vmatmul.mubr.bf16.gmra.mrb[0].mxu0 %v1497
      %v1651 = vpop.f32.mrb[0].mxu0
      %v1652 = vadd.f32 0.0, %v1651
      %v1653 = vpop.f32.mrb[0].mxu0
      %v1654 = vpop.f32.mrb[0].mxu0
      %v1655 = vadd.f32 0.0, %v1654
      %v1656 = vpop.f32.mrb[0].mxu0
      %1657 = vmatprep.mubr.bf16.mxu0 0
      %1658 = vmatmul.mubr.bf16.gmra.mrb[0].mxu0 %v1500
      %v1659 = vpop.f32.mrb[0].mxu0
      %v1660 = vadd.f32 0.0, %v1659
      %v1661 = vpop.f32.mrb[0].mxu0
      %v1662 = vpop.f32.mrb[0].mxu0
      %v1663 = vadd.f32 0.0, %v1662
      %v1664 = vpop.f32.mrb[0].mxu0
      %1665 = vmatprep.mubr.bf16.mxu0 0
      %1666 = vmatmul.mubr.bf16.gmra.mrb[0].mxu0 %v1503
      %v1667 = vpop.f32.mrb[0].mxu0
      %v1668 = vadd.f32 0.0, %v1667
      %v1669 = vpop.f32.mrb[0].mxu0
      %v1670 = vpop.f32.mrb[0].mxu0
      %v1671 = vadd.f32 0.0, %v1670
      %v1672 = vpop.f32.mrb[0].mxu0
      %1673 = vdwg.mxu0
      %v1674 = vadd.f32 %v1371, %v1540
      %v1675 = vadd.f32 %v1372, %v1543
      %v1676 = vadd.f32 %v1373, %v1548
      %v1677 = vadd.f32 %v1374, %v1551
      %v1678 = vadd.f32 %v1375, %v1556
      %v1679 = vadd.f32 %v1376, %v1559
      %v1680 = vadd.f32 %v1377, %v1564
      %v1681 = vadd.f32 %v1378, %v1567
      %v1682 = vadd.f32 %v1379, %v1572
      %v1683 = vadd.f32 %v1380, %v1575
      %v1684 = vadd.f32 %v1381, %v1580
      %v1685 = vadd.f32 %v1382, %v1583
      %v1686 = vadd.f32 %v1383, %v1588
      %v1687 = vadd.f32 %v1384, %v1591
      %v1688 = vadd.f32 %v1385, %v1596
      %v1689 = vadd.f32 %v1386, %v1599
      %v1690 = vadd.f32 %v1387, %v1604
      %v1691 = vadd.f32 %v1388, %v1607
      %v1692 = vadd.f32 %v1389, %v1612
      %v1693 = vadd.f32 %v1390, %v1615
      %v1694 = vadd.f32 %v1391, %v1620
      %v1695 = vadd.f32 %v1392, %v1623
      %v1696 = vadd.f32 %v1393, %v1628
      %v1697 = vadd.f32 %v1394, %v1631
      %v1698 = vadd.f32 %v1395, %v1636
      %v1699 = vadd.f32 %v1396, %v1639
      %v1700 = vadd.f32 %v1397, %v1644
      %v1701 = vadd.f32 %v1398, %v1647
      %v1702 = vadd.f32 %v1399, %v1652
      %v1703 = vadd.f32 %v1400, %v1655
      %v1704 = vadd.f32 %v1401, %v1660
      %v1705 = vadd.f32 %v1402, %v1663
      %v1706 = vadd.f32 %v1403, %v1668
      %v1707 = vadd.f32 %v1404, %v1671
      %v1708 = vld [vmem:[%s2] sm:$0x1]
      %v1710 = vlaneseq
      %v1711 = vshrl.u32 %v1710, 7
      %v1712 = vsub.s32 0, %v1711
      %v1713 = vrot.slane %v1708, %v1712
      %v1715 = vadd.f32 %v1674, %v1713
      %v1716 = vadd.f32 %v1675, %v1713
      %v1717 = vadd.f32 %v1676, %v1713
      %v1718 = vadd.f32 %v1677, %v1713
      %v1719 = vadd.f32 %v1678, %v1713
      %v1720 = vadd.f32 %v1679, %v1713
      %v1721 = vadd.f32 %v1680, %v1713
      %v1722 = vadd.f32 %v1681, %v1713
      %v1723 = vadd.f32 %v1682, %v1713
      %v1724 = vadd.f32 %v1683, %v1713
      %v1725 = vadd.f32 %v1684, %v1713
      %v1726 = vadd.f32 %v1685, %v1713
      %v1727 = vadd.f32 %v1686, %v1713
      %v1728 = vadd.f32 %v1687, %v1713
      %v1729 = vadd.f32 %v1688, %v1713
      %v1730 = vadd.f32 %v1689, %v1713
      %v1731 = vadd.f32 %v1690, %v1713
      %v1732 = vadd.f32 %v1691, %v1713
      %v1733 = vadd.f32 %v1692, %v1713
      %v1734 = vadd.f32 %v1693, %v1713
      %v1735 = vadd.f32 %v1694, %v1713
      %v1736 = vadd.f32 %v1695, %v1713
      %v1737 = vadd.f32 %v1696, %v1713
      %v1738 = vadd.f32 %v1697, %v1713
      %v1739 = vadd.f32 %v1698, %v1713
      %v1740 = vadd.f32 %v1699, %v1713
      %v1741 = vadd.f32 %v1700, %v1713
      %v1742 = vadd.f32 %v1701, %v1713
      %v1743 = vadd.f32 %v1702, %v1713
      %v1744 = vadd.f32 %v1703, %v1713
      %v1745 = vadd.f32 %v1704, %v1713
      %v1746 = vadd.f32 %v1705, %v1713
      %v1747 = vadd.f32 %v1706, %v1713
      %v1748 = vadd.f32 %v1707, %v1713
      %vm1749 = vcmp.ge.f32.partialorder %v1715, 0.0
      %vm1750 = vcmp.ge.f32.partialorder %v1716, 0.0
      %vm1751 = vcmp.ge.f32.partialorder %v1717, 0.0
      %vm1752 = vcmp.ge.f32.partialorder %v1718, 0.0
      %vm1753 = vcmp.ge.f32.partialorder %v1719, 0.0
      %vm1754 = vcmp.ge.f32.partialorder %v1720, 0.0
      %vm1755 = vcmp.ge.f32.partialorder %v1721, 0.0
      %vm1756 = vcmp.ge.f32.partialorder %v1722, 0.0
      %vm1757 = vcmp.ge.f32.partialorder %v1723, 0.0
      %vm1758 = vcmp.ge.f32.partialorder %v1724, 0.0
      %vm1759 = vcmp.ge.f32.partialorder %v1725, 0.0
      %vm1760 = vcmp.ge.f32.partialorder %v1726, 0.0
      %vm1761 = vcmp.ge.f32.partialorder %v1727, 0.0
      %vm1762 = vcmp.ge.f32.partialorder %v1728, 0.0
      %vm1763 = vcmp.ge.f32.partialorder %v1729, 0.0
      %vm1764 = vcmp.ge.f32.partialorder %v1730, 0.0
      %vm1765 = vcmp.ge.f32.partialorder %v1731, 0.0
      %vm1766 = vcmp.ge.f32.partialorder %v1732, 0.0
      %vm1767 = vcmp.ge.f32.partialorder %v1733, 0.0
      %vm1768 = vcmp.ge.f32.partialorder %v1734, 0.0
      %vm1769 = vcmp.ge.f32.partialorder %v1735, 0.0
      %vm1770 = vcmp.ge.f32.partialorder %v1736, 0.0
      %vm1771 = vcmp.ge.f32.partialorder %v1737, 0.0
      %vm1772 = vcmp.ge.f32.partialorder %v1738, 0.0
      %vm1773 = vcmp.ge.f32.partialorder %v1739, 0.0
      %vm1774 = vcmp.ge.f32.partialorder %v1740, 0.0
      %vm1775 = vcmp.ge.f32.partialorder %v1741, 0.0
      %vm1776 = vcmp.ge.f32.partialorder %v1742, 0.0
      %vm1777 = vcmp.ge.f32.partialorder %v1743, 0.0
      %vm1778 = vcmp.ge.f32.partialorder %v1744, 0.0
      %vm1779 = vcmp.ge.f32.partialorder %v1745, 0.0
      %vm1780 = vcmp.ge.f32.partialorder %v1746, 0.0
      %vm1781 = vcmp.ge.f32.partialorder %v1747, 0.0
      %vm1782 = vcmp.ge.f32.partialorder %v1748, 0.0
      %v1783 = vmul.f32 %v1715, 0.2
      %v1784 = vmul.f32 %v1716, 0.2
      %v1785 = vmul.f32 %v1717, 0.2
      %v1786 = vmul.f32 %v1718, 0.2
      %v1787 = vmul.f32 %v1719, 0.2
      %v1788 = vmul.f32 %v1720, 0.2
      %v1789 = vmul.f32 %v1721, 0.2
      %v1790 = vmul.f32 %v1722, 0.2
      %v1791 = vmul.f32 %v1723, 0.2
      %v1792 = vmul.f32 %v1724, 0.2
      %v1793 = vmul.f32 %v1725, 0.2
      %v1794 = vmul.f32 %v1726, 0.2
      %v1795 = vmul.f32 %v1727, 0.2
      %v1796 = vmul.f32 %v1728, 0.2
      %v1797 = vmul.f32 %v1729, 0.2
      %v1798 = vmul.f32 %v1730, 0.2
      %v1799 = vmul.f32 %v1731, 0.2
      %v1800 = vmul.f32 %v1732, 0.2
      %v1801 = vmul.f32 %v1733, 0.2
      %v1802 = vmul.f32 %v1734, 0.2
      %v1803 = vmul.f32 %v1735, 0.2
      %v1804 = vmul.f32 %v1736, 0.2
      %v1805 = vmul.f32 %v1737, 0.2
      %v1806 = vmul.f32 %v1738, 0.2
      %v1807 = vmul.f32 %v1739, 0.2
      %v1808 = vmul.f32 %v1740, 0.2
      %v1809 = vmul.f32 %v1741, 0.2
      %v1810 = vmul.f32 %v1742, 0.2
      %v1811 = vmul.f32 %v1743, 0.2
      %v1812 = vmul.f32 %v1744, 0.2
      %v1813 = vmul.f32 %v1745, 0.2
      %v1814 = vmul.f32 %v1746, 0.2
      %v1815 = vmul.f32 %v1747, 0.2
      %v1816 = vmul.f32 %v1748, 0.2
      %v1817 = vsel %vm1749, %v1715, %v1783
      %v1818 = vsel %vm1750, %v1716, %v1784
      %v1819 = vsel %vm1751, %v1717, %v1785
      %v1820 = vsel %vm1752, %v1718, %v1786
      %v1821 = vsel %vm1753, %v1719, %v1787
      %v1822 = vsel %vm1754, %v1720, %v1788
      %v1823 = vsel %vm1755, %v1721, %v1789
      %v1824 = vsel %vm1756, %v1722, %v1790
      %v1825 = vsel %vm1757, %v1723, %v1791
      %v1826 = vsel %vm1758, %v1724, %v1792
      %v1827 = vsel %vm1759, %v1725, %v1793
      %v1828 = vsel %vm1760, %v1726, %v1794
      %v1829 = vsel %vm1761, %v1727, %v1795
      %v1830 = vsel %vm1762, %v1728, %v1796
      %v1831 = vsel %vm1763, %v1729, %v1797
      %v1832 = vsel %vm1764, %v1730, %v1798
      %v1833 = vsel %vm1765, %v1731, %v1799
      %v1834 = vsel %vm1766, %v1732, %v1800
      %v1835 = vsel %vm1767, %v1733, %v1801
      %v1836 = vsel %vm1768, %v1734, %v1802
      %v1837 = vsel %vm1769, %v1735, %v1803
      %v1838 = vsel %vm1770, %v1736, %v1804
      %v1839 = vsel %vm1771, %v1737, %v1805
      %v1840 = vsel %vm1772, %v1738, %v1806
      %v1841 = vsel %vm1773, %v1739, %v1807
      %v1842 = vsel %vm1774, %v1740, %v1808
      %v1843 = vsel %vm1775, %v1741, %v1809
      %v1844 = vsel %vm1776, %v1742, %v1810
      %v1845 = vsel %vm1777, %v1743, %v1811
      %v1846 = vsel %vm1778, %v1744, %v1812
      %v1847 = vsel %vm1779, %v1745, %v1813
      %v1848 = vsel %vm1780, %v1746, %v1814
      %v1849 = vsel %vm1781, %v1747, %v1815
      %v1850 = vsel %vm1782, %v1748, %v1816
      %v1851 = vpack.c.bf16 %v1818, %v1817
      %v1852 = vpack.c.bf16 %v1820, %v1819
      %v1853 = vpack.c.bf16 %v1822, %v1821
      %v1854 = vpack.c.bf16 %v1824, %v1823
      %v1855 = vpack.c.bf16 %v1826, %v1825
      %v1856 = vpack.c.bf16 %v1828, %v1827
      %v1857 = vpack.c.bf16 %v1830, %v1829
      %v1858 = vpack.c.bf16 %v1832, %v1831
      %v1859 = vpack.c.bf16 %v1834, %v1833
      %v1860 = vpack.c.bf16 %v1836, %v1835
      %v1861 = vpack.c.bf16 %v1838, %v1837
      %v1862 = vpack.c.bf16 %v1840, %v1839
      %v1863 = vpack.c.bf16 %v1842, %v1841
      %v1864 = vpack.c.bf16 %v1844, %v1843
      %v1865 = vpack.c.bf16 %v1846, %v1845
      %v1866 = vpack.c.bf16 %v1848, %v1847
      %v1867 = vpack.c.bf16 %v1850, %v1849
      %v1885 = vunpack.c.l.b16 %v1851
      %v1886 = vunpack.c.h.b16 %v1851
      %v1887 = vunpack.c.l.b16 %v1852
      %v1888 = vunpack.c.h.b16 %v1852
      %v1889 = vunpack.c.l.b16 %v1853
      %v1890 = vunpack.c.h.b16 %v1853
      %v1891 = vunpack.c.l.b16 %v1854
      %v1892 = vunpack.c.h.b16 %v1854
      %v1893 = vunpack.c.l.b16 %v1855
      %v1894 = vunpack.c.h.b16 %v1855
      %v1895 = vunpack.c.l.b16 %v1856
      %v1896 = vunpack.c.h.b16 %v1856
      %v1897 = vunpack.c.l.b16 %v1857
      %v1898 = vunpack.c.h.b16 %v1857
      %v1899 = vunpack.c.l.b16 %v1858
      %v1900 = vunpack.c.h.b16 %v1858
      %v1901 = vunpack.c.l.b16 %v1859
      %v1902 = vunpack.c.h.b16 %v1859
      %v1903 = vunpack.c.l.b16 %v1860
      %v1904 = vunpack.c.h.b16 %v1860
      %v1905 = vunpack.c.l.b16 %v1861
      %v1906 = vunpack.c.h.b16 %v1861
      %v1907 = vunpack.c.l.b16 %v1862
      %v1908 = vunpack.c.h.b16 %v1862
      %v1909 = vunpack.c.l.b16 %v1863
      %v1910 = vunpack.c.h.b16 %v1863
      %v1911 = vunpack.c.l.b16 %v1864
      %v1912 = vunpack.c.h.b16 %v1864
      %v1913 = vunpack.c.l.b16 %v1865
      %v1914 = vunpack.c.h.b16 %v1865
      %v1915 = vunpack.c.l.b16 %v1866
      %v1916 = vunpack.c.h.b16 %v1866
      %v1917 = vunpack.c.l.b16 %v1867
      %v1918 = vunpack.c.h.b16 %v1867
      %v1919 = vpack.c.b16 %v1885, %v1885
      %v1920 = vpack.c.b16 %v1886, %v1886
      %v1921 = vpack.c.b16 %v1887, %v1887
      %v1922 = vpack.c.b16 %v1888, %v1888
      %v1923 = vpack.c.b16 %v1889, %v1889
      %v1924 = vpack.c.b16 %v1890, %v1890
      %v1925 = vpack.c.b16 %v1891, %v1891
      %v1926 = vpack.c.b16 %v1892, %v1892
      %v1927 = vpack.c.b16 %v1893, %v1893
      %v1928 = vpack.c.b16 %v1894, %v1894
      %v1929 = vpack.c.b16 %v1895, %v1895
      %v1930 = vpack.c.b16 %v1896, %v1896
      %v1931 = vpack.c.b16 %v1897, %v1897
      %v1932 = vpack.c.b16 %v1898, %v1898
      %v1933 = vpack.c.b16 %v1899, %v1899
      %v1934 = vpack.c.b16 %v1900, %v1900
      %v1935 = vpack.c.b16 %v1901, %v1901
      %v1936 = vpack.c.b16 %v1902, %v1902
      %v1937 = vpack.c.b16 %v1903, %v1903
      %v1938 = vpack.c.b16 %v1904, %v1904
      %v1939 = vpack.c.b16 %v1905, %v1905
      %v1940 = vpack.c.b16 %v1906, %v1906
      %v1941 = vpack.c.b16 %v1907, %v1907
      %v1942 = vpack.c.b16 %v1908, %v1908
      %v1943 = vpack.c.b16 %v1909, %v1909
      %v1944 = vpack.c.b16 %v1910, %v1910
      %v1945 = vpack.c.b16 %v1911, %v1911
      %v1946 = vpack.c.b16 %v1912, %v1912
      %v1947 = vpack.c.b16 %v1913, %v1913
      %v1948 = vpack.c.b16 %v1914, %v1914
      %v1949 = vpack.c.b16 %v1915, %v1915
      %v1950 = vpack.c.b16 %v1916, %v1916
      %v1951 = vpack.c.b16 %v1917, %v1917
      %v1952 = vpack.c.b16 %v1918, %v1918
      %1987 = vst [vmem:[%s172] sm:$0xf] %v1919
      %1988 = vst [vmem:[%s172 + $0x4] sm:$0xf] %v1920
      %1989 = vst [vmem:[%s172 + $0x8] sm:$0xf] %v1921
      %1990 = vst [vmem:[%s172 + $0xc] sm:$0xf] %v1922
      %1991 = vst [vmem:[%s172 + $0x10] sm:$0xf] %v1923
      %1992 = vst [vmem:[%s172 + $0x14] sm:$0xf] %v1924
      %1993 = vst [vmem:[%s172 + $0x18] sm:$0xf] %v1925
      %1994 = vst [vmem:[%s172 + $0x1c] sm:$0xf] %v1926
      %1995 = vst [vmem:[%s172 + $0x20] sm:$0xf] %v1927
      %1996 = vst [vmem:[%s172 + $0x24] sm:$0xf] %v1928
      %1997 = vst [vmem:[%s172 + $0x28] sm:$0xf] %v1929
      %1998 = vst [vmem:[%s172 + $0x2c] sm:$0xf] %v1930
      %1999 = vst [vmem:[%s172 + $0x30] sm:$0xf] %v1931
      %2000 = vst [vmem:[%s172 + $0x34] sm:$0xf] %v1932
      %2001 = vst [vmem:[%s172 + $0x38] sm:$0xf] %v1933
      %2002 = vst [vmem:[%s172 + $0x3c] sm:$0xf] %v1934
      %2003 = vst [vmem:[%s172 + $0x40] sm:$0xf] %v1935
      %2004 = vst [vmem:[%s172 + $0x44] sm:$0xf] %v1936
      %2005 = vst [vmem:[%s172 + $0x48] sm:$0xf] %v1937
      %2006 = vst [vmem:[%s172 + $0x4c] sm:$0xf] %v1938
      %2007 = vst [vmem:[%s172 + $0x50] sm:$0xf] %v1939
      %2008 = vst [vmem:[%s172 + $0x54] sm:$0xf] %v1940
      %2009 = vst [vmem:[%s172 + $0x58] sm:$0xf] %v1941
      %2010 = vst [vmem:[%s172 + $0x5c] sm:$0xf] %v1942
      %2011 = vst [vmem:[%s172 + $0x60] sm:$0xf] %v1943
      %2012 = vst [vmem:[%s172 + $0x64] sm:$0xf] %v1944
      %2013 = vst [vmem:[%s172 + $0x68] sm:$0xf] %v1945
      %2014 = vst [vmem:[%s172 + $0x6c] sm:$0xf] %v1946
      %2015 = vst [vmem:[%s172 + $0x70] sm:$0xf] %v1947
      %2016 = vst [vmem:[%s172 + $0x74] sm:$0xf] %v1948
      %2017 = vst [vmem:[%s172 + $0x78] sm:$0xf] %v1949
      %2018 = vst [vmem:[%s172 + $0x7c] sm:$0xf] %v1950
      %2019 = vst [vmem:[%s172 + $0x80] sm:$0xf] %v1951
      %2020 = vst [vmem:[%s172 + $0x84] sm:$0xf] %v1952
      %p2021 = scmp.lt.s32.totalorder %s14, 1
      %s2022 = scalar_select %p2021, %s14, 1
      %s2023 = smul.addr %s2022, 34
      %s2024 = smul.addr %s2023, 4
      %s2025 = scalar_lea.vmem %s3, %s2024
      // Predicated region
      $region33: #{latent_discriminator_forward.5} parent=31 // pred_check
        %p2026 = pneg %p100
      $region34: #{latent_discriminator_forward.5} parent=31 // pred_check_branch
        %2028 = sbr.rel (%p2026) target = $region36
      $region35: #{latent_discriminator_forward.5} parent=31 // pred_region
        _
      $region36: #{latent_discriminator_forward.5} parent=31 // pred_fallthru
        _
    $region32: #{latent_discriminator_forward.5} parent=5 // pred_fallthru
      _
    %p2029 = scmp.le.s32.totalorder 2, %s9
    // Predicated region
    $region37: #{latent_discriminator_forward.5} parent=5 // pred_check
      %p2030 = pneg %p2029
    $region38: #{latent_discriminator_forward.5} parent=5 // pred_check_branch
      %2032 = sbr.rel (%p2030) target = $region40
    $region39: #{latent_discriminator_forward.5} parent=5 // pred_region
      %s2033 = ssub.s32 %s9, 2
      // Predicated region
      $region41: #{latent_discriminator_forward.5} parent=39 // pred_check
        %p2034 = pneg %p106
      $region42: #{latent_discriminator_forward.5} parent=39 // pred_check_branch
        %2036 = sbr.rel (%p2034) target = $region44
      $region43: #{latent_discriminator_forward.5} parent=39 // pred_region
        %p2037 = scmp.lt.s32.totalorder %s15, 1
        %s2038 = scalar_select %p2037, %s15, 1
        %s2039 = smul.addr %s2038, 34
        %s2040 = smul.addr %s2039, 4
        %s2041 = scalar_lea.vmem %s3, %s2040
      $region44: #{latent_discriminator_forward.5} parent=39 // pred_fallthru
        _
    $region40: #{latent_discriminator_forward.5} parent=5 // pred_fallthru
      _
  $region6: #{latent_discriminator_forward.5} parent=0 // loop_footer
    %s13 = sadd.s32 1, %s9
  $region7: #{latent_discriminator_forward.5} parent=0 // loop_footer_branch
    %8 = sbr.rel target = $region3
  $region8: #{latent_discriminator_forward.5} parent=0 // loop_exit
    _

// kernel: latent_discriminator_forward.6
$region0: #{latent_discriminator_forward.6}
  #allocation0 [shape = 'u32[]', space=smem, size = 0x4, offset = 0x4, fixed_abs, tag = 'smem constant byte address 0x4 - core index']
  #allocation1 [shape = 'u32[144,128]{1,0:T(1,128)}', space=vmem, size = 0x12000, scoped, tag = 'internal scratch']
  %s0 = inlined_call_operand.vmem [shape: bf16[176,64], index: 0, kind: input, shape index: {}]
  %s1 = inlined_call_operand.vmem [shape: bf16[4,64,128], index: 1, kind: input, shape index: {}]
  %s2 = inlined_call_operand.vmem [shape: f32[1,128], index: 2, kind: input, shape index: {}]
  %s3 = inlined_call_operand.vmem [shape: bf16[2,72,128], index: 3, kind: output, shape index: {}]
  %s4 = sld [smem:[#allocation0]]
  $region45: #{latent_discriminator_forward.6} parent=0
    _
  %s6 = ssub.s32 1, %s4
  %s7 = scalar_select 0, %s6, %s4
  loop: start=0, step=1, limit=4
  $region2: #{latent_discriminator_forward.6} parent=0 // loop_pre_header
    _
  $region3: #{latent_discriminator_forward.6} parent=0 // loop_header
    %s9 = sphi 0, %s13
    %p10 = scmp.ge.s32.totalorder %s9, 4
    %s19 = sphi 0, %s21
    %s22 = sphi 0, %s19
    %s23 = sphi 0, %s22
    %s39 = sphi 0, %s23
    %s43 = sphi 0, %s43
    %s45 = sphi 0, %s43
    %s46 = sphi 0, %s45
    %s60 = sphi 0, %s46
    %s64 = sphi 0, %s64
    %s66 = sphi 0, %s64
    %s67 = sphi 0, %s66
    %s81 = sphi 0, %s67
    %s87 = sphi 0, %s89
    %s90 = sphi 0, %s87
    %s91 = sphi 0, %s90
    %s107 = sphi 0, %s91
  $region4: #{latent_discriminator_forward.6} parent=0 // loop_header_branch
    %12 = sbr.rel (%p10) target = $region8
  $region5: #{latent_discriminator_forward.6} parent=0 // loop_body
    %s14 = ssub.s32 %s9, 1
    %s15 = ssub.s32 %s9, 2
    %s16 = sadd.s32 %s9, 1
    %s17 = ssub.s32 %s9, %s16
    %p18 = scmp.eq.s32.totalorder %s17, 0
    %s20 = sadd.s32 %s19, 1
    %s21 = scalar_select %p18, %s19, %s20
    %p24 = pneg %p18
    %p25 = scmp.eq.s32.totalorder %s9, 1
    %p26 = por %p24, %p25
    %p27 = scmp.ne.s32.totalorder %s19, %s22
    %p28 = scmp.eq.s32.totalorder %s9, 0
    %p29 = por %p27, %p28
    %p30 = scmp.ne.s32.totalorder %s19, %s22
    %p31 = scmp.eq.s32.totalorder %s14, 1
    %p32 = por %p30, %p31
    %p33 = scmp.ne.s32.totalorder %s22, %s23
    %p34 = scmp.eq.s32.totalorder %s14, 0
    %p35 = por %p33, %p34
    %p36 = scmp.ne.s32.totalorder %s22, %s23
    %p37 = scmp.eq.s32.totalorder %s15, 1
    %p38 = por %p36, %p37
    %p40 = scmp.ne.s32.totalorder %s23, %s39
    %p41 = scmp.eq.s32.totalorder %s15, 0
    %p42 = por %p40, %p41
    %s44 = sadd.s32 %s43, 1
    %p47 = scmp.eq.s32.totalorder %s9, 1
    %p48 = scmp.ne.s32.totalorder %s43, %s45
    %p49 = scmp.eq.s32.totalorder %s9, 0
    %p50 = por %p48, %p49
    %p51 = scmp.ne.s32.totalorder %s43, %s45
    %p52 = scmp.eq.s32.totalorder %s14, 1
    %p53 = por %p51, %p52
    %p54 = scmp.ne.s32.totalorder %s45, %s46
    %p55 = scmp.eq.s32.totalorder %s14, 0
    %p56 = por %p54, %p55
    %p57 = scmp.ne.s32.totalorder %s45, %s46
    %p58 = scmp.eq.s32.totalorder %s15, 1
    %p59 = por %p57, %p58
    %p61 = scmp.ne.s32.totalorder %s46, %s60
    %p62 = scmp.eq.s32.totalorder %s15, 0
    %p63 = por %p61, %p62
    %s65 = sadd.s32 %s64, 1
    %p68 = scmp.eq.s32.totalorder %s9, 1
    %p69 = scmp.ne.s32.totalorder %s64, %s66
    %p70 = scmp.eq.s32.totalorder %s9, 0
    %p71 = por %p69, %p70
    %p72 = scmp.ne.s32.totalorder %s64, %s66
    %p73 = scmp.eq.s32.totalorder %s14, 1
    %p74 = por %p72, %p73
    %p75 = scmp.ne.s32.totalorder %s66, %s67
    %p76 = scmp.eq.s32.totalorder %s14, 0
    %p77 = por %p75, %p76
    %p78 = scmp.ne.s32.totalorder %s66, %s67
    %p79 = scmp.eq.s32.totalorder %s15, 1
    %p80 = por %p78, %p79
    %p82 = scmp.ne.s32.totalorder %s67, %s81
    %p83 = scmp.eq.s32.totalorder %s15, 0
    %p84 = por %p82, %p83
    %s85 = ssub.s32 %s9, %s16
    %p86 = scmp.eq.s32.totalorder %s85, 0
    %s88 = sadd.s32 %s87, 1
    %s89 = scalar_select %p86, %s87, %s88
    %p92 = pneg %p86
    %p93 = scmp.eq.s32.totalorder %s9, 1
    %p94 = por %p92, %p93
    %p95 = scmp.ne.s32.totalorder %s87, %s90
    %p96 = scmp.eq.s32.totalorder %s9, 0
    %p97 = por %p95, %p96
    %p98 = scmp.ne.s32.totalorder %s87, %s90
    %p99 = scmp.eq.s32.totalorder %s14, 1
    %p100 = por %p98, %p99
    %p101 = scmp.ne.s32.totalorder %s90, %s91
    %p102 = scmp.eq.s32.totalorder %s14, 0
    %p103 = por %p101, %p102
    %p104 = scmp.ne.s32.totalorder %s90, %s91
    %p105 = scmp.eq.s32.totalorder %s15, 1
    %p106 = por %p104, %p105
    %p108 = scmp.ne.s32.totalorder %s91, %s107
    %p109 = scmp.eq.s32.totalorder %s15, 0
    %p110 = por %p108, %p109
    %p111 = scmp.le.s32.totalorder 1, %s9
    %p112 = scmp.lt.s32.totalorder %s9, 3
    %p113 = pnand %p111, %p112
    %p114 = pneg %p113
    // Predicated region
    $region9: #{latent_discriminator_forward.6} parent=5 // pred_check
      _
    $region10: #{latent_discriminator_forward.6} parent=5 // pred_check_branch
      %116 = sbr.rel (%p113) target = $region12
    $region11: #{latent_discriminator_forward.6} parent=5 // pred_region
      %s117 = ssub.s32 %s9, 1
      // Predicated region
      $region13: #{latent_discriminator_forward.6} parent=11 // pred_check
        %p118 = pneg %p56
      $region14: #{latent_discriminator_forward.6} parent=11 // pred_check_branch
        %120 = sbr.rel (%p118) target = $region16
      $region15: #{latent_discriminator_forward.6} parent=11 // pred_region
        _
      $region16: #{latent_discriminator_forward.6} parent=11 // pred_fallthru
        _
      // Predicated region
      $region17: #{latent_discriminator_forward.6} parent=11 // pred_check
        %p121 = pneg %p77
      $region18: #{latent_discriminator_forward.6} parent=11 // pred_check_branch
        %123 = sbr.rel (%p121) target = $region20
      $region19: #{latent_discriminator_forward.6} parent=11 // pred_region
        _
      $region20: #{latent_discriminator_forward.6} parent=11 // pred_fallthru
        _
    $region12: #{latent_discriminator_forward.6} parent=5 // pred_fallthru
      _
    %p124 = scmp.lt.s32.totalorder %s9, 2
    // Predicated region
    $region21: #{latent_discriminator_forward.6} parent=5 // pred_check
      %p125 = pneg %p124
    $region22: #{latent_discriminator_forward.6} parent=5 // pred_check_branch
      %127 = sbr.rel (%p125) target = $region24
    $region23: #{latent_discriminator_forward.6} parent=5 // pred_region
      // Predicated region
      $region25: #{latent_discriminator_forward.6} parent=23 // pred_check
        %p128 = pneg %p29
      $region26: #{latent_discriminator_forward.6} parent=23 // pred_check_branch
        %130 = sbr.rel (%p128) target = $region28
      $region27: #{latent_discriminator_forward.6} parent=23 // pred_region
        %s131 = smul.u32 11, %s9
        %p132 = scmp.lt.s32.totalorder %s131, 21
        %s133 = scalar_select %p132, %s131, 21
        %s134 = smul.addr %s133, 4
        %s135 = scalar_lea.vmem %s0, %s134
        %s136 = smul.u32 11, %s9
      $region28: #{latent_discriminator_forward.6} parent=23 // pred_fallthru
        _
    $region24: #{latent_discriminator_forward.6} parent=5 // pred_fallthru
      _
    %p137 = scmp.le.s32.totalorder 1, %s9
    %p138 = scmp.lt.s32.totalorder %s9, 3
    %p139 = pnand %p137, %p138
    %p140 = pneg %p139
    // Predicated region
    $region29: #{latent_discriminator_forward.6} parent=5 // pred_check
      _
    $region30: #{latent_discriminator_forward.6} parent=5 // pred_check_branch
      %142 = sbr.rel (%p139) target = $region32
    $region31: #{latent_discriminator_forward.6} parent=5 // pred_region
      %s143 = ssub.s32 %s9, 1
      %s144 = smul.u32 11, %s14
      %p145 = scmp.lt.s32.totalorder %s144, 21
      %s146 = scalar_select %p145, %s144, 21
      %s147 = smul.addr %s146, 4
      %s148 = scalar_lea.vmem %s0, %s147
      %p149 = pneg %p35
      %p150 = pneg %p32
      %p151 = pneg %p56
      %p152 = pneg %p53
      %p153 = pneg %p77
      %p154 = pneg %p74
      %p155 = pneg %p103
      %p156 = pneg %p100
      %p157 = scmp.lt.s32.totalorder %s14, 1
      %s158 = scalar_select %p157, %s14, 1
      %s159 = smul.addr %s158, 9
      %s160 = smul.addr %s159, 4
      %s161 = scalar_lea.vmem %s3, %s160
      %s162 = smul.u32 11, %s14
      %p163 = scmp.lt.s32.totalorder %s162, 21
      %s164 = scalar_select %p163, %s162, 21
      %s165 = smul.addr %s164, 4
      %s166 = scalar_lea.vmem %s0, %s165
      %s167 = smul.u32 11, %s14
      %p168 = scmp.lt.s32.totalorder %s14, 1
      %s169 = scalar_select %p168, %s14, 1
      %s170 = smul.addr %s169, 9
      %s171 = smul.addr %s170, 4
      %s172 = scalar_lea.vmem %s3, %s171
      %v174 = vld [vmem:[%s166] sm:$0xf]
      %v175 = vld [vmem:[%s166 + $0x4] sm:$0xf]
      %v176 = vld [vmem:[%s166 + $0x8] sm:$0xf]
      %v177 = vld [vmem:[%s166 + $0xc] sm:$0xf]
      %v178 = vld [vmem:[%s166 + $0x10] sm:$0xf]
      %v179 = vld [vmem:[%s166 + $0x14] sm:$0xf]
      %v180 = vld [vmem:[%s166 + $0x18] sm:$0xf]
      %v181 = vld [vmem:[%s166 + $0x1c] sm:$0xf]
      %v182 = vld [vmem:[%s166 + $0x20] sm:$0xf]
      %v183 = vld [vmem:[%s1] sm:$0xf]
      %v184 = vld [vmem:[%s1 + $0x4] sm:$0xf]
      %v185 = vld [vmem:[%s1 + $0x8] sm:$0xf]
      %v186 = vld [vmem:[%s1 + $0xc] sm:$0xf]
      %v187 = vld [vmem:[%s1 + $0x10] sm:$0xf]
      %v188 = vld [vmem:[%s1 + $0x14] sm:$0xf]
      %v189 = vld [vmem:[%s1 + $0x18] sm:$0xf]
      %v190 = vld [vmem:[%s1 + $0x1c] sm:$0xf]
      %v191 = vld [vmem:[%s166 + $0x24] sm:$0x1]
      %s192 = scalar_lea.vmem %s1, 32
      %v193 = vld [vmem:[%s192] sm:$0xf]
      %v194 = vld [vmem:[%s192 + $0x4] sm:$0xf]
      %v195 = vld [vmem:[%s192 + $0x8] sm:$0xf]
      %v196 = vld [vmem:[%s192 + $0xc] sm:$0xf]
      %v197 = vld [vmem:[%s192 + $0x10] sm:$0xf]
      %v198 = vld [vmem:[%s192 + $0x14] sm:$0xf]
      %v199 = vld [vmem:[%s192 + $0x18] sm:$0xf]
      %v200 = vld [vmem:[%s192 + $0x1c] sm:$0xf]
      %v211 = vunpack.c.l.b16 %v174
      %v212 = vunpack.c.l.b16 %v175
      %v213 = vunpack.c.l.b16 %v176
      %v214 = vunpack.c.l.b16 %v177
      %v215 = vunpack.c.l.b16 %v178
      %v216 = vunpack.c.l.b16 %v179
      %v217 = vunpack.c.l.b16 %v180
      %v218 = vunpack.c.l.b16 %v181
      %v219 = vunpack.c.l.b16 %v182
      %v220 = vunpack.c.l.b16 %v191
      %v221 = vpack.c.b16 %v212, %v211
      %v222 = vpack.c.b16 %v214, %v213
      %v223 = vpack.c.b16 %v216, %v215
      %v224 = vpack.c.b16 %v218, %v217
      %v225 = vpack.c.b16 %v220, %v219
      %vm226 = vsmask.f32 7424
      %v228 = vshrl.u32 %v221, 16
      %v230 = vshll.u32 %v221, 16
      %v232 = vrot.slane %v230, 1
      %v233 = vor.u32 %v228, %v232
      %v235 = vshll.u32 %v222, 16
      %v237 = vrot.slane %v235, 1
      %v238 = vsel %vm226, %v233, %v237
      %v239 = vshrl.u32 %v222, 16
      %v241 = vor.u32 %v239, %v237
      %v243 = vshll.u32 %v223, 16
      %v245 = vrot.slane %v243, 1
      %v246 = vsel %vm226, %v241, %v245
      %v247 = vshrl.u32 %v223, 16
      %v249 = vor.u32 %v247, %v245
      %v251 = vshll.u32 %v224, 16
      %v253 = vrot.slane %v251, 1
      %v254 = vsel %vm226, %v249, %v253
      %v255 = vshrl.u32 %v224, 16
      %v257 = vor.u32 %v255, %v253
      %v259 = vshll.u32 %v225, 16
      %v261 = vrot.slane %v259, 1
      %v262 = vsel %vm226, %v257, %v261
      %v263 = vshrl.u32 %v225, 16
      %v265 = vor.u32 %v263, %v261
      %v274 = vunpack.c.l.b16 %v193
      %v275 = vunpack.c.l.b16 %v194
      %v276 = vunpack.c.l.b16 %v195
      %v277 = vunpack.c.l.b16 %v196
      %v278 = vunpack.c.l.b16 %v197
      %v279 = vunpack.c.l.b16 %v198
      %v280 = vunpack.c.l.b16 %v199
      %v281 = vunpack.c.l.b16 %v200
      %v282 = vpack.c.b16 %v275, %v274
      %v283 = vpack.c.b16 %v277, %v276
      %v284 = vpack.c.b16 %v279, %v278
      %v285 = vpack.c.b16 %v281, %v280
      %vm290 = vcmask 523264
      %v292 = vsel %vm290, %v238, 0
      %v295 = vsel %vm290, %v246, 0
      %v298 = vsel %vm290, %v254, 0
      %v301 = vsel %vm290, %v262, 0
      %v304 = vsel %vm290, %v265, 0
      %306 = vmatprep.subr.bf16.mxu0 0
      %307 = vmatpush1.bf16.msra.mxu0 %v282
      %308 = vmatprep.subr.bf16.mxu0 0
      %309 = vmatpush1.bf16.msra.mxu0 %v283
      %310 = vmatprep.subr.bf16.mxu0 0
      %311 = vmatpush1.bf16.msra.mxu0 %v284
      %312 = vmatprep.subr.bf16.mxu0 0
      %313 = vmatpush1.bf16.msra.mxu0 %v285
      %314 = vmatprep.subr.bf16.mxu0 0
      %315 = vmatpush1.bf16.msra.mxu0 0
      %316 = vmatprep.subr.bf16.mxu0 0
      %317 = vmatpush1.bf16.msra.mxu0 0
      %318 = vmatprep.subr.bf16.mxu0 0
      %319 = vmatpush1.bf16.msra.mxu0 0
      %320 = vmatprep.subr.bf16.mxu0 0
      %321 = vmatpush1.bf16.msra.mxu0 0
      %322 = vmatprep.subr.bf16.mxu0 0
      %323 = vmatpush1.bf16.msra.mxu0 0
      %324 = vmatprep.subr.bf16.mxu0 0
      %325 = vmatpush1.bf16.msra.mxu0 0
      %326 = vmatprep.subr.bf16.mxu0 0
      %327 = vmatpush1.bf16.msra.mxu0 0
      %328 = vmatprep.subr.bf16.mxu0 0
      %329 = vmatpush1.bf16.msra.mxu0 0
      %330 = vmatprep.subr.bf16.mxu0 0
      %331 = vmatpush1.bf16.msra.mxu0 0
      %332 = vmatprep.subr.bf16.mxu0 0
      %333 = vmatpush1.bf16.msra.mxu0 0
      %334 = vmatprep.subr.bf16.mxu0 0
      %335 = vmatpush1.bf16.msra.mxu0 0
      %336 = vmatprep.subr.bf16.mxu0 0
      %337 = vmatpush1.bf16.msra.mxu0 0
      %338 = vmatprep.mubr.bf16.mxu0 0
      %339 = vmatmul.mubr.bf16.gmra.mrb[0].mxu0 %v292
      %v340 = vpop.f32.mrb[0].mxu0
      %v341 = vadd.f32 0.0, %v340
      %v342 = vpop.f32.mrb[0].mxu0
      %v343 = vpop.f32.mrb[0].mxu0
      %v344 = vadd.f32 0.0, %v343
      %v345 = vpop.f32.mrb[0].mxu0
      %346 = vmatprep.mubr.bf16.mxu0 0
      %347 = vmatmul.mubr.bf16.gmra.mrb[0].mxu0 %v295
      %v348 = vpop.f32.mrb[0].mxu0
      %v349 = vadd.f32 0.0, %v348
      %v350 = vpop.f32.mrb[0].mxu0
      %v351 = vpop.f32.mrb[0].mxu0
      %v352 = vadd.f32 0.0, %v351
      %v353 = vpop.f32.mrb[0].mxu0
      %354 = vmatprep.mubr.bf16.mxu0 0
      %355 = vmatmul.mubr.bf16.gmra.mrb[0].mxu0 %v298
      %v356 = vpop.f32.mrb[0].mxu0
      %v357 = vadd.f32 0.0, %v356
      %v358 = vpop.f32.mrb[0].mxu0
      %v359 = vpop.f32.mrb[0].mxu0
      %v360 = vadd.f32 0.0, %v359
      %v361 = vpop.f32.mrb[0].mxu0
      %362 = vmatprep.mubr.bf16.mxu0 0
      %363 = vmatmul.mubr.bf16.gmra.mrb[0].mxu0 %v301
      %v364 = vpop.f32.mrb[0].mxu0
      %v365 = vadd.f32 0.0, %v364
      %v366 = vpop.f32.mrb[0].mxu0
      %v367 = vpop.f32.mrb[0].mxu0
      %v368 = vadd.f32 0.0, %v367
      %v369 = vpop.f32.mrb[0].mxu0
      %370 = vmatprep.mubr.bf16.mxu0 0
      %371 = vmatmul.mubr.bf16.gmra.mrb[0].mxu0 %v304
      %v372 = vpop.f32.mrb[0].mxu0
      %v373 = vadd.f32 0.0, %v372
      %v374 = vpop.f32.mrb[0].mxu0
      %v375 = vpop.f32.mrb[0].mxu0
      %v376 = vpop.f32.mrb[0].mxu0
      %377 = vdwg.mxu0
      %v378 = vpack.c.b16 %v219, %v219
      %v387 = vunpack.c.l.b16 %v183
      %v388 = vunpack.c.l.b16 %v184
      %v389 = vunpack.c.l.b16 %v185
      %v390 = vunpack.c.l.b16 %v186
      %v391 = vunpack.c.l.b16 %v187
      %v392 = vunpack.c.l.b16 %v188
      %v393 = vunpack.c.l.b16 %v189
      %v394 = vunpack.c.l.b16 %v190
      %v395 = vpack.c.b16 %v388, %v387
      %v396 = vpack.c.b16 %v390, %v389
      %v397 = vpack.c.b16 %v392, %v391
      %v398 = vpack.c.b16 %v394, %v393
      %v403 = vsel %vm290, %v221, 0
      %v405 = vsel %vm290, %v222, 0
      %v407 = vsel %vm290, %v223, 0
      %v409 = vsel %vm290, %v224, 0
      %v412 = vsel %vm290, %v378, 0
      %414 = vmatprep.subr.bf16.mxu0 0
      %415 = vmatpush1.bf16.msra.mxu0 %v395
      %416 = vmatprep.subr.bf16.mxu0 0
      %417 = vmatpush1.bf16.msra.mxu0 %v396
      %418 = vmatprep.subr.bf16.mxu0 0
      %419 = vmatpush1.bf16.msra.mxu0 %v397
      %420 = vmatprep.subr.bf16.mxu0 0
      %421 = vmatpush1.bf16.msra.mxu0 %v398
      %422 = vmatprep.subr.bf16.mxu0 0
      %423 = vmatpush1.bf16.msra.mxu0 0
      %424 = vmatprep.subr.bf16.mxu0 0
      %425 = vmatpush1.bf16.msra.mxu0 0
      %426 = vmatprep.subr.bf16.mxu0 0
      %427 = vmatpush1.bf16.msra.mxu0 0
      %428 = vmatprep.subr.bf16.mxu0 0
      %429 = vmatpush1.bf16.msra.mxu0 0
      %430 = vmatprep.subr.bf16.mxu0 0
      %431 = vmatpush1.bf16.msra.mxu0 0
      %432 = vmatprep.subr.bf16.mxu0 0
      %433 = vmatpush1.bf16.msra.mxu0 0
      %434 = vmatprep.subr.bf16.mxu0 0
      %435 = vmatpush1.bf16.msra.mxu0 0
      %436 = vmatprep.subr.bf16.mxu0 0
      %437 = vmatpush1.bf16.msra.mxu0 0
      %438 = vmatprep.subr.bf16.mxu0 0
      %439 = vmatpush1.bf16.msra.mxu0 0
      %440 = vmatprep.subr.bf16.mxu0 0
      %441 = vmatpush1.bf16.msra.mxu0 0
      %442 = vmatprep.subr.bf16.mxu0 0
      %443 = vmatpush1.bf16.msra.mxu0 0
      %444 = vmatprep.subr.bf16.mxu0 0
      %445 = vmatpush1.bf16.msra.mxu0 0
      %446 = vmatprep.mubr.bf16.mxu0 0
      %447 = vmatmul.mubr.bf16.gmra.mrb[0].mxu0 %v403
      %v448 = vpop.f32.mrb[0].mxu0
      %v449 = vadd.f32 %v341, %v448
      %v450 = vpop.f32.mrb[0].mxu0
      %v451 = vpop.f32.mrb[0].mxu0
      %v452 = vadd.f32 %v344, %v451
      %v453 = vpop.f32.mrb[0].mxu0
      %454 = vmatprep.mubr.bf16.mxu0 0
      %455 = vmatmul.mubr.bf16.gmra.mrb[0].mxu0 %v405
      %v456 = vpop.f32.mrb[0].mxu0
      %v457 = vadd.f32 %v349, %v456
      %v458 = vpop.f32.mrb[0].mxu0
      %v459 = vpop.f32.mrb[0].mxu0
      %v460 = vadd.f32 %v352, %v459
      %v461 = vpop.f32.mrb[0].mxu0
      %462 = vmatprep.mubr.bf16.mxu0 0
      %463 = vmatmul.mubr.bf16.gmra.mrb[0].mxu0 %v407
      %v464 = vpop.f32.mrb[0].mxu0
      %v465 = vadd.f32 %v357, %v464
      %v466 = vpop.f32.mrb[0].mxu0
      %v467 = vpop.f32.mrb[0].mxu0
      %v468 = vadd.f32 %v360, %v467
      %v469 = vpop.f32.mrb[0].mxu0
      %470 = vmatprep.mubr.bf16.mxu0 0
      %471 = vmatmul.mubr.bf16.gmra.mrb[0].mxu0 %v409
      %v472 = vpop.f32.mrb[0].mxu0
      %v473 = vadd.f32 %v365, %v472
      %v474 = vpop.f32.mrb[0].mxu0
      %v475 = vpop.f32.mrb[0].mxu0
      %v476 = vadd.f32 %v368, %v475
      %v477 = vpop.f32.mrb[0].mxu0
      %478 = vmatprep.mubr.bf16.mxu0 0
      %479 = vmatmul.mubr.bf16.gmra.mrb[0].mxu0 %v412
      %v480 = vpop.f32.mrb[0].mxu0
      %v481 = vadd.f32 %v373, %v480
      %v482 = vpop.f32.mrb[0].mxu0
      %v483 = vpop.f32.mrb[0].mxu0
      %v484 = vpop.f32.mrb[0].mxu0
      %485 = vdwg.mxu0
      %v486 = vld [vmem:[%s166 + $0x4] sm:$0xf]
      %v487 = vld [vmem:[%s166 + $0x8] sm:$0xf]
      %v488 = vld [vmem:[%s166 + $0xc] sm:$0xf]
      %v489 = vld [vmem:[%s166 + $0x10] sm:$0xf]
      %v490 = vld [vmem:[%s166 + $0x14] sm:$0xf]
      %v491 = vld [vmem:[%s166 + $0x18] sm:$0xf]
      %v492 = vld [vmem:[%s166 + $0x1c] sm:$0xf]
      %v493 = vld [vmem:[%s166 + $0x20] sm:$0xf]
      %v494 = vld [vmem:[%s166 + $0x24] sm:$0xf]
      %v495 = vld [vmem:[%s166 + $0x28] sm:$0x1]
      %s496 = scalar_lea.vmem %s1, 64
      %v497 = vld [vmem:[%s496] sm:$0xf]
      %v498 = vld [vmem:[%s496 + $0x4] sm:$0xf]
      %v499 = vld [vmem:[%s496 + $0x8] sm:$0xf]
      %v500 = vld [vmem:[%s496 + $0xc] sm:$0xf]
      %v501 = vld [vmem:[%s496 + $0x10] sm:$0xf]
      %v502 = vld [vmem:[%s496 + $0x14] sm:$0xf]
      %v503 = vld [vmem:[%s496 + $0x18] sm:$0xf]
      %v504 = vld [vmem:[%s496 + $0x1c] sm:$0xf]
      %v515 = vunpack.c.l.b16 %v486
      %v516 = vunpack.c.l.b16 %v487
      %v517 = vunpack.c.l.b16 %v488
      %v518 = vunpack.c.l.b16 %v489
      %v519 = vunpack.c.l.b16 %v490
      %v520 = vunpack.c.l.b16 %v491
      %v521 = vunpack.c.l.b16 %v492
      %v522 = vunpack.c.l.b16 %v493
      %v523 = vunpack.c.l.b16 %v494
      %v524 = vunpack.c.l.b16 %v495
      %v525 = vpack.c.b16 %v516, %v515
      %v526 = vpack.c.b16 %v518, %v517
      %v527 = vpack.c.b16 %v520, %v519
      %v528 = vpack.c.b16 %v522, %v521
      %v529 = vpack.c.b16 %v524, %v523
      %v531 = vshrl.u32 %v525, 16
      %v533 = vshll.u32 %v525, 16
      %v535 = vrot.slane %v533, 1
      %v536 = vor.u32 %v531, %v535
      %v538 = vshll.u32 %v526, 16
      %v540 = vrot.slane %v538, 1
      %v541 = vsel %vm226, %v536, %v540
      %v542 = vshrl.u32 %v526, 16
      %v544 = vor.u32 %v542, %v540
      %v546 = vshll.u32 %v527, 16
      %v548 = vrot.slane %v546, 1
      %v549 = vsel %vm226, %v544, %v548
      %v550 = vshrl.u32 %v527, 16
      %v552 = vor.u32 %v550, %v548
      %v554 = vshll.u32 %v528, 16
      %v556 = vrot.slane %v554, 1
      %v557 = vsel %vm226, %v552, %v556
      %v558 = vshrl.u32 %v528, 16
      %v560 = vor.u32 %v558, %v556
      %v562 = vshll.u32 %v529, 16
      %v564 = vrot.slane %v562, 1
      %v565 = vsel %vm226, %v560, %v564
      %v566 = vshrl.u32 %v529, 16
      %v568 = vor.u32 %v566, %v564
      %v577 = vunpack.c.l.b16 %v497
      %v578 = vunpack.c.l.b16 %v498
      %v579 = vunpack.c.l.b16 %v499
      %v580 = vunpack.c.l.b16 %v500
      %v581 = vunpack.c.l.b16 %v501
      %v582 = vunpack.c.l.b16 %v502
      %v583 = vunpack.c.l.b16 %v503
      %v584 = vunpack.c.l.b16 %v504
      %v585 = vpack.c.b16 %v578, %v577
      %v586 = vpack.c.b16 %v580, %v579
      %v587 = vpack.c.b16 %v582, %v581
      %v588 = vpack.c.b16 %v584, %v583
      %v594 = vsel %vm290, %v541, 0
      %v597 = vsel %vm290, %v549, 0
      %v600 = vsel %vm290, %v557, 0
      %v603 = vsel %vm290, %v565, 0
      %v606 = vsel %vm290, %v568, 0
      %608 = vmatprep.subr.bf16.mxu0 0
      %609 = vmatpush1.bf16.msra.mxu0 %v585
      %610 = vmatprep.subr.bf16.mxu0 0
      %611 = vmatpush1.bf16.msra.mxu0 %v586
      %612 = vmatprep.subr.bf16.mxu0 0
      %613 = vmatpush1.bf16.msra.mxu0 %v587
      %614 = vmatprep.subr.bf16.mxu0 0
      %615 = vmatpush1.bf16.msra.mxu0 %v588
      %616 = vmatprep.subr.bf16.mxu0 0
      %617 = vmatpush1.bf16.msra.mxu0 0
      %618 = vmatprep.subr.bf16.mxu0 0
      %619 = vmatpush1.bf16.msra.mxu0 0
      %620 = vmatprep.subr.bf16.mxu0 0
      %621 = vmatpush1.bf16.msra.mxu0 0
      %622 = vmatprep.subr.bf16.mxu0 0
      %623 = vmatpush1.bf16.msra.mxu0 0
      %624 = vmatprep.subr.bf16.mxu0 0
      %625 = vmatpush1.bf16.msra.mxu0 0
      %626 = vmatprep.subr.bf16.mxu0 0
      %627 = vmatpush1.bf16.msra.mxu0 0
      %628 = vmatprep.subr.bf16.mxu0 0
      %629 = vmatpush1.bf16.msra.mxu0 0
      %630 = vmatprep.subr.bf16.mxu0 0
      %631 = vmatpush1.bf16.msra.mxu0 0
      %632 = vmatprep.subr.bf16.mxu0 0
      %633 = vmatpush1.bf16.msra.mxu0 0
      %634 = vmatprep.subr.bf16.mxu0 0
      %635 = vmatpush1.bf16.msra.mxu0 0
      %636 = vmatprep.subr.bf16.mxu0 0
      %637 = vmatpush1.bf16.msra.mxu0 0
      %638 = vmatprep.subr.bf16.mxu0 0
      %639 = vmatpush1.bf16.msra.mxu0 0
      %640 = vmatprep.mubr.bf16.mxu0 0
      %641 = vmatmul.mubr.bf16.gmra.mrb[0].mxu0 %v594
      %v642 = vpop.f32.mrb[0].mxu0
      %v643 = vadd.f32 0.0, %v642
      %v644 = vpop.f32.mrb[0].mxu0
      %v645 = vpop.f32.mrb[0].mxu0
      %v646 = vadd.f32 0.0, %v645
      %v647 = vpop.f32.mrb[0].mxu0
      %648 = vmatprep.mubr.bf16.mxu0 0
      %649 = vmatmul.mubr.bf16.gmra.mrb[0].mxu0 %v597
      %v650 = vpop.f32.mrb[0].mxu0
      %v651 = vadd.f32 0.0, %v650
      %v652 = vpop.f32.mrb[0].mxu0
      %v653 = vpop.f32.mrb[0].mxu0
      %v654 = vadd.f32 0.0, %v653
      %v655 = vpop.f32.mrb[0].mxu0
      %656 = vmatprep.mubr.bf16.mxu0 0
      %657 = vmatmul.mubr.bf16.gmra.mrb[0].mxu0 %v600
      %v658 = vpop.f32.mrb[0].mxu0
      %v659 = vadd.f32 0.0, %v658
      %v660 = vpop.f32.mrb[0].mxu0
      %v661 = vpop.f32.mrb[0].mxu0
      %v662 = vadd.f32 0.0, %v661
      %v663 = vpop.f32.mrb[0].mxu0
      %664 = vmatprep.mubr.bf16.mxu0 0
      %665 = vmatmul.mubr.bf16.gmra.mrb[0].mxu0 %v603
      %v666 = vpop.f32.mrb[0].mxu0
      %v667 = vadd.f32 0.0, %v666
      %v668 = vpop.f32.mrb[0].mxu0
      %v669 = vpop.f32.mrb[0].mxu0
      %v670 = vadd.f32 0.0, %v669
      %v671 = vpop.f32.mrb[0].mxu0
      %672 = vmatprep.mubr.bf16.mxu0 0
      %673 = vmatmul.mubr.bf16.gmra.mrb[0].mxu0 %v606
      %v674 = vpop.f32.mrb[0].mxu0
      %v675 = vadd.f32 0.0, %v674
      %v676 = vpop.f32.mrb[0].mxu0
      %v677 = vpop.f32.mrb[0].mxu0
      %v678 = vpop.f32.mrb[0].mxu0
      %679 = vdwg.mxu0
      %v680 = vadd.f32 %v449, %v643
      %v681 = vadd.f32 %v452, %v646
      %v682 = vadd.f32 %v457, %v651
      %v683 = vadd.f32 %v460, %v654
      %v684 = vadd.f32 %v465, %v659
      %v685 = vadd.f32 %v468, %v662
      %v686 = vadd.f32 %v473, %v667
      %v687 = vadd.f32 %v476, %v670
      %v688 = vadd.f32 %v481, %v675
      %v689 = vld [vmem:[%s166 + $0x4] sm:$0xe]
      %s690 = scalar_lea.vmem %s1, 96
      %v691 = vld [vmem:[%s690] sm:$0xf]
      %v692 = vld [vmem:[%s690 + $0x4] sm:$0xf]
      %v693 = vld [vmem:[%s690 + $0x8] sm:$0xf]
      %v694 = vld [vmem:[%s690 + $0xc] sm:$0xf]
      %v695 = vld [vmem:[%s690 + $0x10] sm:$0xf]
      %v696 = vld [vmem:[%s690 + $0x14] sm:$0xf]
      %v697 = vld [vmem:[%s690 + $0x18] sm:$0xf]
      %v698 = vld [vmem:[%s690 + $0x1c] sm:$0xf]
      %v700 = vunpack.c.l.b16 %v689
      %v701 = vpack.c.b16 %v516, %v700
      %vm702 = vcmask 1046528
      %v703 = vrot.slane %v701, 1
      %v704 = vrot.slane %v526, 1
      %v705 = vsel %vm702, %v703, %v704
      %v706 = vrot.slane %v527, 1
      %v707 = vsel %vm702, %v704, %v706
      %v708 = vrot.slane %v528, 1
      %v709 = vsel %vm702, %v706, %v708
      %v710 = vrot.slane %v529, 1
      %v711 = vsel %vm702, %v708, %v710
      %v720 = vunpack.c.l.b16 %v691
      %v721 = vunpack.c.l.b16 %v692
      %v722 = vunpack.c.l.b16 %v693
      %v723 = vunpack.c.l.b16 %v694
      %v724 = vunpack.c.l.b16 %v695
      %v725 = vunpack.c.l.b16 %v696
      %v726 = vunpack.c.l.b16 %v697
      %v727 = vunpack.c.l.b16 %v698
      %v728 = vpack.c.b16 %v721, %v720
      %v729 = vpack.c.b16 %v723, %v722
      %v730 = vpack.c.b16 %v725, %v724
      %v731 = vpack.c.b16 %v727, %v726
      %v737 = vsel %vm290, %v705, 0
      %v740 = vsel %vm290, %v707, 0
      %v743 = vsel %vm290, %v709, 0
      %v746 = vsel %vm290, %v711, 0
      %v749 = vsel %vm290, %v710, 0
      %751 = vmatprep.subr.bf16.mxu0 0
      %752 = vmatpush1.bf16.msra.mxu0 %v728
      %753 = vmatprep.subr.bf16.mxu0 0
      %754 = vmatpush1.bf16.msra.mxu0 %v729
      %755 = vmatprep.subr.bf16.mxu0 0
      %756 = vmatpush1.bf16.msra.mxu0 %v730
      %757 = vmatprep.subr.bf16.mxu0 0
      %758 = vmatpush1.bf16.msra.mxu0 %v731
      %759 = vmatprep.subr.bf16.mxu0 0
      %760 = vmatpush1.bf16.msra.mxu0 0
      %761 = vmatprep.subr.bf16.mxu0 0
      %762 = vmatpush1.bf16.msra.mxu0 0
      %763 = vmatprep.subr.bf16.mxu0 0
      %764 = vmatpush1.bf16.msra.mxu0 0
      %765 = vmatprep.subr.bf16.mxu0 0
      %766 = vmatpush1.bf16.msra.mxu0 0
      %767 = vmatprep.subr.bf16.mxu0 0
      %768 = vmatpush1.bf16.msra.mxu0 0
      %769 = vmatprep.subr.bf16.mxu0 0
      %770 = vmatpush1.bf16.msra.mxu0 0
      %771 = vmatprep.subr.bf16.mxu0 0
      %772 = vmatpush1.bf16.msra.mxu0 0
      %773 = vmatprep.subr.bf16.mxu0 0
      %774 = vmatpush1.bf16.msra.mxu0 0
      %775 = vmatprep.subr.bf16.mxu0 0
      %776 = vmatpush1.bf16.msra.mxu0 0
      %777 = vmatprep.subr.bf16.mxu0 0
      %778 = vmatpush1.bf16.msra.mxu0 0
      %779 = vmatprep.subr.bf16.mxu0 0
      %780 = vmatpush1.bf16.msra.mxu0 0
      %781 = vmatprep.subr.bf16.mxu0 0
      %782 = vmatpush1.bf16.msra.mxu0 0
      %783 = vmatprep.mubr.bf16.mxu0 0
      %784 = vmatmul.mubr.bf16.gmra.mrb[0].mxu0 %v737
      %v785 = vpop.f32.mrb[0].mxu0
      %v786 = vadd.f32 0.0, %v785
      %v787 = vpop.f32.mrb[0].mxu0
      %v788 = vpop.f32.mrb[0].mxu0
      %v789 = vadd.f32 0.0, %v788
      %v790 = vpop.f32.mrb[0].mxu0
      %791 = vmatprep.mubr.bf16.mxu0 0
      %792 = vmatmul.mubr.bf16.gmra.mrb[0].mxu0 %v740
      %v793 = vpop.f32.mrb[0].mxu0
      %v794 = vadd.f32 0.0, %v793
      %v795 = vpop.f32.mrb[0].mxu0
      %v796 = vpop.f32.mrb[0].mxu0
      %v797 = vadd.f32 0.0, %v796
      %v798 = vpop.f32.mrb[0].mxu0
      %799 = vmatprep.mubr.bf16.mxu0 0
      %800 = vmatmul.mubr.bf16.gmra.mrb[0].mxu0 %v743
      %v801 = vpop.f32.mrb[0].mxu0
      %v802 = vadd.f32 0.0, %v801
      %v803 = vpop.f32.mrb[0].mxu0
      %v804 = vpop.f32.mrb[0].mxu0
      %v805 = vadd.f32 0.0, %v804
      %v806 = vpop.f32.mrb[0].mxu0
      %807 = vmatprep.mubr.bf16.mxu0 0
      %808 = vmatmul.mubr.bf16.gmra.mrb[0].mxu0 %v746
      %v809 = vpop.f32.mrb[0].mxu0
      %v810 = vadd.f32 0.0, %v809
      %v811 = vpop.f32.mrb[0].mxu0
      %v812 = vpop.f32.mrb[0].mxu0
      %v813 = vadd.f32 0.0, %v812
      %v814 = vpop.f32.mrb[0].mxu0
      %815 = vmatprep.mubr.bf16.mxu0 0
      %816 = vmatmul.mubr.bf16.gmra.mrb[0].mxu0 %v749
      %v817 = vpop.f32.mrb[0].mxu0
      %v818 = vadd.f32 0.0, %v817
      %v819 = vpop.f32.mrb[0].mxu0
      %v820 = vpop.f32.mrb[0].mxu0
      %v821 = vpop.f32.mrb[0].mxu0
      %822 = vdwg.mxu0
      %v823 = vadd.f32 %v680, %v786
      %v824 = vadd.f32 %v681, %v789
      %v825 = vadd.f32 %v682, %v794
      %v826 = vadd.f32 %v683, %v797
      %v827 = vadd.f32 %v684, %v802
      %v828 = vadd.f32 %v685, %v805
      %v829 = vadd.f32 %v686, %v810
      %v830 = vadd.f32 %v687, %v813
      %v831 = vadd.f32 %v688, %v818
      %v832 = vld [vmem:[%s2] sm:$0x1]
      %v834 = vlaneseq
      %v835 = vshrl.u32 %v834, 7
      %v836 = vsub.s32 0, %v835
      %v837 = vrot.slane %v832, %v836
      %v839 = vadd.f32 %v823, %v837
      %v840 = vadd.f32 %v824, %v837
      %v841 = vadd.f32 %v825, %v837
      %v842 = vadd.f32 %v826, %v837
      %v843 = vadd.f32 %v827, %v837
      %v844 = vadd.f32 %v828, %v837
      %v845 = vadd.f32 %v829, %v837
      %v846 = vadd.f32 %v830, %v837
      %v847 = vadd.f32 %v831, %v837
      %vm848 = vcmp.ge.f32.partialorder %v839, 0.0
      %vm849 = vcmp.ge.f32.partialorder %v840, 0.0
      %vm850 = vcmp.ge.f32.partialorder %v841, 0.0
      %vm851 = vcmp.ge.f32.partialorder %v842, 0.0
      %vm852 = vcmp.ge.f32.partialorder %v843, 0.0
      %vm853 = vcmp.ge.f32.partialorder %v844, 0.0
      %vm854 = vcmp.ge.f32.partialorder %v845, 0.0
      %vm855 = vcmp.ge.f32.partialorder %v846, 0.0
      %vm856 = vcmp.ge.f32.partialorder %v847, 0.0
      %v857 = vmul.f32 %v839, 0.2
      %v858 = vmul.f32 %v840, 0.2
      %v859 = vmul.f32 %v841, 0.2
      %v860 = vmul.f32 %v842, 0.2
      %v861 = vmul.f32 %v843, 0.2
      %v862 = vmul.f32 %v844, 0.2
      %v863 = vmul.f32 %v845, 0.2
      %v864 = vmul.f32 %v846, 0.2
      %v865 = vmul.f32 %v847, 0.2
      %v866 = vsel %vm848, %v839, %v857
      %v867 = vsel %vm849, %v840, %v858
      %v868 = vsel %vm850, %v841, %v859
      %v869 = vsel %vm851, %v842, %v860
      %v870 = vsel %vm852, %v843, %v861
      %v871 = vsel %vm853, %v844, %v862
      %v872 = vsel %vm854, %v845, %v863
      %v873 = vsel %vm855, %v846, %v864
      %v874 = vsel %vm856, %v847, %v865
      %v875 = vpack.c.bf16 %v867, %v866
      %v876 = vpack.c.bf16 %v869, %v868
      %v877 = vpack.c.bf16 %v871, %v870
      %v878 = vpack.c.bf16 %v873, %v872
      %v879 = vpack.c.bf16 %v874, %v874
      %v885 = vunpack.c.l.b16 %v875
      %v886 = vunpack.c.h.b16 %v875
      %v887 = vunpack.c.l.b16 %v876
      %v888 = vunpack.c.h.b16 %v876
      %v889 = vunpack.c.l.b16 %v877
      %v890 = vunpack.c.h.b16 %v877
      %v891 = vunpack.c.l.b16 %v878
      %v892 = vunpack.c.h.b16 %v878
      %v893 = vunpack.c.l.b16 %v879
      %v894 = vpack.c.b16 %v885, %v885
      %v895 = vpack.c.b16 %v886, %v886
      %v896 = vpack.c.b16 %v887, %v887
      %v897 = vpack.c.b16 %v888, %v888
      %v898 = vpack.c.b16 %v889, %v889
      %v899 = vpack.c.b16 %v890, %v890
      %v900 = vpack.c.b16 %v891, %v891
      %v901 = vpack.c.b16 %v892, %v892
      %v902 = vpack.c.b16 %v893, %v893
      %912 = vst [vmem:[%s172] sm:$0xf] %v894
      %913 = vst [vmem:[%s172 + $0x4] sm:$0xf] %v895
      %914 = vst [vmem:[%s172 + $0x8] sm:$0xf] %v896
      %915 = vst [vmem:[%s172 + $0xc] sm:$0xf] %v897
      %916 = vst [vmem:[%s172 + $0x10] sm:$0xf] %v898
      %917 = vst [vmem:[%s172 + $0x14] sm:$0xf] %v899
      %918 = vst [vmem:[%s172 + $0x18] sm:$0xf] %v900
      %919 = vst [vmem:[%s172 + $0x1c] sm:$0xf] %v901
      %920 = vst [vmem:[%s172 + $0x20] sm:$0xf] %v902
      %p921 = scmp.lt.s32.totalorder %s14, 1
      %s922 = scalar_select %p921, %s14, 1
      %s923 = smul.addr %s922, 9
      %s924 = smul.addr %s923, 4
      %s925 = scalar_lea.vmem %s3, %s924
      // Predicated region
      $region33: #{latent_discriminator_forward.6} parent=31 // pred_check
        %p926 = pneg %p100
      $region34: #{latent_discriminator_forward.6} parent=31 // pred_check_branch
        %928 = sbr.rel (%p926) target = $region36
      $region35: #{latent_discriminator_forward.6} parent=31 // pred_region
        _
      $region36: #{latent_discriminator_forward.6} parent=31 // pred_fallthru
        _
    $region32: #{latent_discriminator_forward.6} parent=5 // pred_fallthru
      _
    %p929 = scmp.le.s32.totalorder 2, %s9
    // Predicated region
    $region37: #{latent_discriminator_forward.6} parent=5 // pred_check
      %p930 = pneg %p929
    $region38: #{latent_discriminator_forward.6} parent=5 // pred_check_branch
      %932 = sbr.rel (%p930) target = $region40
    $region39: #{latent_discriminator_forward.6} parent=5 // pred_region
      %s933 = ssub.s32 %s9, 2
      // Predicated region
      $region41: #{latent_discriminator_forward.6} parent=39 // pred_check
        %p934 = pneg %p106
      $region42: #{latent_discriminator_forward.6} parent=39 // pred_check_branch
        %936 = sbr.rel (%p934) target = $region44
      $region43: #{latent_discriminator_forward.6} parent=39 // pred_region
        %p937 = scmp.lt.s32.totalorder %s15, 1
        %s938 = scalar_select %p937, %s15, 1
        %s939 = smul.addr %s938, 9
        %s940 = smul.addr %s939, 4
        %s941 = scalar_lea.vmem %s3, %s940
      $region44: #{latent_discriminator_forward.6} parent=39 // pred_fallthru
        _
    $region40: #{latent_discriminator_forward.6} parent=5 // pred_fallthru
      _
  $region6: #{latent_discriminator_forward.6} parent=0 // loop_footer
    %s13 = sadd.s32 1, %s9
  $region7: #{latent_discriminator_forward.6} parent=0 // loop_footer_branch
    %8 = sbr.rel target = $region3
  $region8: #{latent_discriminator_forward.6} parent=0 // loop_exit
    _

// kernel: latent_discriminator_forward.7
$region0: #{latent_discriminator_forward.7}
  #allocation0 [shape = 'u32[]', space=smem, size = 0x4, offset = 0x4, fixed_abs, tag = 'smem constant byte address 0x4 - core index']
  #allocation1 [shape = 'u32[144,128]{1,0:T(1,128)}', space=vmem, size = 0x12000, scoped, tag = 'internal scratch']
  %s0 = inlined_call_operand.vmem [shape: bf16[64,128], index: 0, kind: input, shape index: {}]
  %s1 = inlined_call_operand.vmem [shape: bf16[4,128,128], index: 1, kind: input, shape index: {}]
  %s2 = inlined_call_operand.vmem [shape: f32[1,128], index: 2, kind: input, shape index: {}]
  %s3 = inlined_call_operand.vmem [shape: bf16[2,24,128], index: 3, kind: output, shape index: {}]
  %s4 = sld [smem:[#allocation0]]
  $region45: #{latent_discriminator_forward.7} parent=0
    _
  %s6 = ssub.s32 1, %s4
  %s7 = scalar_select 0, %s6, %s4
  loop: start=0, step=1, limit=4
  $region2: #{latent_discriminator_forward.7} parent=0 // loop_pre_header
    _
  $region3: #{latent_discriminator_forward.7} parent=0 // loop_header
    %s9 = sphi 0, %s13
    %p10 = scmp.ge.s32.totalorder %s9, 4
    %s19 = sphi 0, %s21
    %s22 = sphi 0, %s19
    %s23 = sphi 0, %s22
    %s39 = sphi 0, %s23
    %s43 = sphi 0, %s43
    %s45 = sphi 0, %s43
    %s46 = sphi 0, %s45
    %s60 = sphi 0, %s46
    %s64 = sphi 0, %s64
    %s66 = sphi 0, %s64
    %s67 = sphi 0, %s66
    %s81 = sphi 0, %s67
    %s87 = sphi 0, %s89
    %s90 = sphi 0, %s87
    %s91 = sphi 0, %s90
    %s107 = sphi 0, %s91
  $region4: #{latent_discriminator_forward.7} parent=0 // loop_header_branch
    %12 = sbr.rel (%p10) target = $region8
  $region5: #{latent_discriminator_forward.7} parent=0 // loop_body
    %s14 = ssub.s32 %s9, 1
    %s15 = ssub.s32 %s9, 2
    %s16 = sadd.s32 %s9, 1
    %s17 = ssub.s32 %s9, %s16
    %p18 = scmp.eq.s32.totalorder %s17, 0
    %s20 = sadd.s32 %s19, 1
    %s21 = scalar_select %p18, %s19, %s20
    %p24 = pneg %p18
    %p25 = scmp.eq.s32.totalorder %s9, 1
    %p26 = por %p24, %p25
    %p27 = scmp.ne.s32.totalorder %s19, %s22
    %p28 = scmp.eq.s32.totalorder %s9, 0
    %p29 = por %p27, %p28
    %p30 = scmp.ne.s32.totalorder %s19, %s22
    %p31 = scmp.eq.s32.totalorder %s14, 1
    %p32 = por %p30, %p31
    %p33 = scmp.ne.s32.totalorder %s22, %s23
    %p34 = scmp.eq.s32.totalorder %s14, 0
    %p35 = por %p33, %p34
    %p36 = scmp.ne.s32.totalorder %s22, %s23
    %p37 = scmp.eq.s32.totalorder %s15, 1
    %p38 = por %p36, %p37
    %p40 = scmp.ne.s32.totalorder %s23, %s39
    %p41 = scmp.eq.s32.totalorder %s15, 0
    %p42 = por %p40, %p41
    %s44 = sadd.s32 %s43, 1
    %p47 = scmp.eq.s32.totalorder %s9, 1
    %p48 = scmp.ne.s32.totalorder %s43, %s45
    %p49 = scmp.eq.s32.totalorder %s9, 0
    %p50 = por %p48, %p49
    %p51 = scmp.ne.s32.totalorder %s43, %s45
    %p52 = scmp.eq.s32.totalorder %s14, 1
    %p53 = por %p51, %p52
    %p54 = scmp.ne.s32.totalorder %s45, %s46
    %p55 = scmp.eq.s32.totalorder %s14, 0
    %p56 = por %p54, %p55
    %p57 = scmp.ne.s32.totalorder %s45, %s46
    %p58 = scmp.eq.s32.totalorder %s15, 1
    %p59 = por %p57, %p58
    %p61 = scmp.ne.s32.totalorder %s46, %s60
    %p62 = scmp.eq.s32.totalorder %s15, 0
    %p63 = por %p61, %p62
    %s65 = sadd.s32 %s64, 1
    %p68 = scmp.eq.s32.totalorder %s9, 1
    %p69 = scmp.ne.s32.totalorder %s64, %s66
    %p70 = scmp.eq.s32.totalorder %s9, 0
    %p71 = por %p69, %p70
    %p72 = scmp.ne.s32.totalorder %s64, %s66
    %p73 = scmp.eq.s32.totalorder %s14, 1
    %p74 = por %p72, %p73
    %p75 = scmp.ne.s32.totalorder %s66, %s67
    %p76 = scmp.eq.s32.totalorder %s14, 0
    %p77 = por %p75, %p76
    %p78 = scmp.ne.s32.totalorder %s66, %s67
    %p79 = scmp.eq.s32.totalorder %s15, 1
    %p80 = por %p78, %p79
    %p82 = scmp.ne.s32.totalorder %s67, %s81
    %p83 = scmp.eq.s32.totalorder %s15, 0
    %p84 = por %p82, %p83
    %s85 = ssub.s32 %s9, %s16
    %p86 = scmp.eq.s32.totalorder %s85, 0
    %s88 = sadd.s32 %s87, 1
    %s89 = scalar_select %p86, %s87, %s88
    %p92 = pneg %p86
    %p93 = scmp.eq.s32.totalorder %s9, 1
    %p94 = por %p92, %p93
    %p95 = scmp.ne.s32.totalorder %s87, %s90
    %p96 = scmp.eq.s32.totalorder %s9, 0
    %p97 = por %p95, %p96
    %p98 = scmp.ne.s32.totalorder %s87, %s90
    %p99 = scmp.eq.s32.totalorder %s14, 1
    %p100 = por %p98, %p99
    %p101 = scmp.ne.s32.totalorder %s90, %s91
    %p102 = scmp.eq.s32.totalorder %s14, 0
    %p103 = por %p101, %p102
    %p104 = scmp.ne.s32.totalorder %s90, %s91
    %p105 = scmp.eq.s32.totalorder %s15, 1
    %p106 = por %p104, %p105
    %p108 = scmp.ne.s32.totalorder %s91, %s107
    %p109 = scmp.eq.s32.totalorder %s15, 0
    %p110 = por %p108, %p109
    %p111 = scmp.le.s32.totalorder 1, %s9
    %p112 = scmp.lt.s32.totalorder %s9, 3
    %p113 = pnand %p111, %p112
    %p114 = pneg %p113
    // Predicated region
    $region9: #{latent_discriminator_forward.7} parent=5 // pred_check
      _
    $region10: #{latent_discriminator_forward.7} parent=5 // pred_check_branch
      %116 = sbr.rel (%p113) target = $region12
    $region11: #{latent_discriminator_forward.7} parent=5 // pred_region
      %s117 = ssub.s32 %s9, 1
      // Predicated region
      $region13: #{latent_discriminator_forward.7} parent=11 // pred_check
        %p118 = pneg %p56
      $region14: #{latent_discriminator_forward.7} parent=11 // pred_check_branch
        %120 = sbr.rel (%p118) target = $region16
      $region15: #{latent_discriminator_forward.7} parent=11 // pred_region
        _
      $region16: #{latent_discriminator_forward.7} parent=11 // pred_fallthru
        _
      // Predicated region
      $region17: #{latent_discriminator_forward.7} parent=11 // pred_check
        %p121 = pneg %p77
      $region18: #{latent_discriminator_forward.7} parent=11 // pred_check_branch
        %123 = sbr.rel (%p121) target = $region20
      $region19: #{latent_discriminator_forward.7} parent=11 // pred_region
        _
      $region20: #{latent_discriminator_forward.7} parent=11 // pred_fallthru
        _
    $region12: #{latent_discriminator_forward.7} parent=5 // pred_fallthru
      _
    %p124 = scmp.lt.s32.totalorder %s9, 2
    // Predicated region
    $region21: #{latent_discriminator_forward.7} parent=5 // pred_check
      %p125 = pneg %p124
    $region22: #{latent_discriminator_forward.7} parent=5 // pred_check_branch
      %127 = sbr.rel (%p125) target = $region24
    $region23: #{latent_discriminator_forward.7} parent=5 // pred_region
      // Predicated region
      $region25: #{latent_discriminator_forward.7} parent=23 // pred_check
        %p128 = pneg %p29
      $region26: #{latent_discriminator_forward.7} parent=23 // pred_check_branch
        %130 = sbr.rel (%p128) target = $region28
      $region27: #{latent_discriminator_forward.7} parent=23 // pred_region
        %s131 = smul.u32 4, %s9
        %p132 = scmp.lt.s32.totalorder %s131, 7
        %s133 = scalar_select %p132, %s131, 7
        %s134 = smul.addr %s133, 4
        %s135 = scalar_lea.vmem %s0, %s134
        %s136 = smul.u32 4, %s9
      $region28: #{latent_discriminator_forward.7} parent=23 // pred_fallthru
        _
    $region24: #{latent_discriminator_forward.7} parent=5 // pred_fallthru
      _
    %p137 = scmp.le.s32.totalorder 1, %s9
    %p138 = scmp.lt.s32.totalorder %s9, 3
    %p139 = pnand %p137, %p138
    %p140 = pneg %p139
    // Predicated region
    $region29: #{latent_discriminator_forward.7} parent=5 // pred_check
      _
    $region30: #{latent_discriminator_forward.7} parent=5 // pred_check_branch
      %142 = sbr.rel (%p139) target = $region32
    $region31: #{latent_discriminator_forward.7} parent=5 // pred_region
      %s143 = ssub.s32 %s9, 1
      %s144 = smul.u32 4, %s14
      %p145 = scmp.lt.s32.totalorder %s144, 7
      %s146 = scalar_select %p145, %s144, 7
      %s147 = smul.addr %s146, 4
      %s148 = scalar_lea.vmem %s0, %s147
      %p149 = pneg %p35
      %p150 = pneg %p32
      %p151 = pneg %p56
      %p152 = pneg %p53
      %p153 = pneg %p77
      %p154 = pneg %p74
      %p155 = pneg %p103
      %p156 = pneg %p100
      %p157 = scmp.lt.s32.totalorder %s14, 1
      %s158 = scalar_select %p157, %s14, 1
      %s159 = smul.addr %s158, 3
      %s160 = smul.addr %s159, 4
      %s161 = scalar_lea.vmem %s3, %s160
      %s162 = smul.u32 4, %s14
      %p163 = scmp.lt.s32.totalorder %s162, 7
      %s164 = scalar_select %p163, %s162, 7
      %s165 = smul.addr %s164, 4
      %s166 = scalar_lea.vmem %s0, %s165
      %s167 = smul.u32 4, %s14
      %p168 = scmp.lt.s32.totalorder %s14, 1
      %s169 = scalar_select %p168, %s14, 1
      %s170 = smul.addr %s169, 3
      %s171 = smul.addr %s170, 4
      %s172 = scalar_lea.vmem %s3, %s171
      %v174 = vld [vmem:[%s166] sm:$0xf]
      %v175 = vld [vmem:[%s166 + $0x4] sm:$0xf]
      %v176 = vld [vmem:[%s166 + $0x8] sm:$0xf]
      %v177 = vld [vmem:[%s1] sm:$0xf]
      %v178 = vld [vmem:[%s1 + $0x4] sm:$0xf]
      %v179 = vld [vmem:[%s1 + $0x8] sm:$0xf]
      %v180 = vld [vmem:[%s1 + $0xc] sm:$0xf]
      %v181 = vld [vmem:[%s1 + $0x10] sm:$0xf]
      %v182 = vld [vmem:[%s1 + $0x14] sm:$0xf]
      %v183 = vld [vmem:[%s1 + $0x18] sm:$0xf]
      %v184 = vld [vmem:[%s1 + $0x1c] sm:$0xf]
      %v185 = vld [vmem:[%s1 + $0x20] sm:$0xf]
      %v186 = vld [vmem:[%s1 + $0x24] sm:$0xf]
      %v187 = vld [vmem:[%s1 + $0x28] sm:$0xf]
      %v188 = vld [vmem:[%s1 + $0x2c] sm:$0xf]
      %v189 = vld [vmem:[%s1 + $0x30] sm:$0xf]
      %v190 = vld [vmem:[%s1 + $0x34] sm:$0xf]
      %v191 = vld [vmem:[%s1 + $0x38] sm:$0xf]
      %v192 = vld [vmem:[%s1 + $0x3c] sm:$0xf]
      %v193 = vld [vmem:[%s166] sm:$0xf]
      %v194 = vld [vmem:[%s166 + $0x4] sm:$0xf]
      %v195 = vld [vmem:[%s166 + $0x8] sm:$0xf]
      %v196 = vld [vmem:[%s166 + $0xc] sm:$0x1]
      %s197 = scalar_lea.vmem %s1, 64
      %v198 = vld [vmem:[%s197] sm:$0xf]
      %v199 = vld [vmem:[%s197 + $0x4] sm:$0xf]
      %v200 = vld [vmem:[%s197 + $0x8] sm:$0xf]
      %v201 = vld [vmem:[%s197 + $0xc] sm:$0xf]
      %v202 = vld [vmem:[%s197 + $0x10] sm:$0xf]
      %v203 = vld [vmem:[%s197 + $0x14] sm:$0xf]
      %v204 = vld [vmem:[%s197 + $0x18] sm:$0xf]
      %v205 = vld [vmem:[%s197 + $0x1c] sm:$0xf]
      %v206 = vld [vmem:[%s197 + $0x20] sm:$0xf]
      %v207 = vld [vmem:[%s197 + $0x24] sm:$0xf]
      %v208 = vld [vmem:[%s197 + $0x28] sm:$0xf]
      %v209 = vld [vmem:[%s197 + $0x2c] sm:$0xf]
      %v210 = vld [vmem:[%s197 + $0x30] sm:$0xf]
      %v211 = vld [vmem:[%s197 + $0x34] sm:$0xf]
      %v212 = vld [vmem:[%s197 + $0x38] sm:$0xf]
      %v213 = vld [vmem:[%s197 + $0x3c] sm:$0xf]
      %v218 = vunpack.c.l.b16 %v193
      %v219 = vunpack.c.l.b16 %v194
      %v220 = vunpack.c.l.b16 %v195
      %v221 = vunpack.c.l.b16 %v196
      %v222 = vpack.c.b16 %v219, %v218
      %v223 = vpack.c.b16 %v221, %v220
      %vm224 = vsmask.f32 7424
      %v226 = vshrl.u32 %v222, 16
      %v228 = vshll.u32 %v222, 16
      %v230 = vrot.slane %v228, 1
      %v231 = vor.u32 %v226, %v230
      %v233 = vshll.u32 %v223, 16
      %v235 = vrot.slane %v233, 1
      %v236 = vsel %vm224, %v231, %v235
      %v237 = vshrl.u32 %v223, 16
      %v239 = vor.u32 %v237, %v235
      %v258 = vunpack.c.l.b16 %v198
      %v259 = vunpack.c.l.b16 %v199
      %v260 = vunpack.c.l.b16 %v200
      %v261 = vunpack.c.l.b16 %v201
      %v262 = vunpack.c.l.b16 %v202
      %v263 = vunpack.c.l.b16 %v203
      %v264 = vunpack.c.l.b16 %v204
      %v265 = vunpack.c.l.b16 %v205
      %v266 = vunpack.c.l.b16 %v206
      %v267 = vunpack.c.l.b16 %v207
      %v268 = vunpack.c.l.b16 %v208
      %v269 = vunpack.c.l.b16 %v209
      %v270 = vunpack.c.l.b16 %v210
      %v271 = vunpack.c.l.b16 %v211
      %v272 = vunpack.c.l.b16 %v212
      %v273 = vunpack.c.l.b16 %v213
      %v274 = vpack.c.b16 %v259, %v258
      %v275 = vpack.c.b16 %v261, %v260
      %v276 = vpack.c.b16 %v263, %v262
      %v277 = vpack.c.b16 %v265, %v264
      %v278 = vpack.c.b16 %v267, %v266
      %v279 = vpack.c.b16 %v269, %v268
      %v280 = vpack.c.b16 %v271, %v270
      %v281 = vpack.c.b16 %v273, %v272
      %290 = vmatprep.subr.bf16.mxu0 0
      %291 = vmatpush1.bf16.msra.mxu0 %v274
      %292 = vmatprep.subr.bf16.mxu0 0
      %293 = vmatpush1.bf16.msra.mxu0 %v275
      %294 = vmatprep.subr.bf16.mxu0 0
      %295 = vmatpush1.bf16.msra.mxu0 %v276
      %296 = vmatprep.subr.bf16.mxu0 0
      %297 = vmatpush1.bf16.msra.mxu0 %v277
      %298 = vmatprep.subr.bf16.mxu0 0
      %299 = vmatpush1.bf16.msra.mxu0 %v278
      %300 = vmatprep.subr.bf16.mxu0 0
      %301 = vmatpush1.bf16.msra.mxu0 %v279
      %302 = vmatprep.subr.bf16.mxu0 0
      %303 = vmatpush1.bf16.msra.mxu0 %v280
      %304 = vmatprep.subr.bf16.mxu0 0
      %305 = vmatpush1.bf16.msra.mxu0 %v281
      %306 = vmatprep.subr.bf16.mxu0 0
      %307 = vmatpush1.bf16.msra.mxu0 0
      %308 = vmatprep.subr.bf16.mxu0 0
      %309 = vmatpush1.bf16.msra.mxu0 0
      %310 = vmatprep.subr.bf16.mxu0 0
      %311 = vmatpush1.bf16.msra.mxu0 0
      %312 = vmatprep.subr.bf16.mxu0 0
      %313 = vmatpush1.bf16.msra.mxu0 0
      %314 = vmatprep.subr.bf16.mxu0 0
      %315 = vmatpush1.bf16.msra.mxu0 0
      %316 = vmatprep.subr.bf16.mxu0 0
      %317 = vmatpush1.bf16.msra.mxu0 0
      %318 = vmatprep.subr.bf16.mxu0 0
      %319 = vmatpush1.bf16.msra.mxu0 0
      %320 = vmatprep.subr.bf16.mxu0 0
      %321 = vmatpush1.bf16.msra.mxu0 0
      %322 = vmatprep.mubr.bf16.mxu0 0
      %323 = vmatmul.mubr.bf16.gmra.mrb[0].mxu0 %v236
      %v324 = vpop.f32.mrb[0].mxu0
      %v325 = vadd.f32 0.0, %v324
      %v326 = vpop.f32.mrb[0].mxu0
      %v327 = vpop.f32.mrb[0].mxu0
      %v328 = vadd.f32 0.0, %v327
      %v329 = vpop.f32.mrb[0].mxu0
      %330 = vmatprep.mubr.bf16.mxu0 0
      %331 = vmatmul.mubr.bf16.gmra.mrb[0].mxu0 %v239
      %v332 = vpop.f32.mrb[0].mxu0
      %v333 = vadd.f32 0.0, %v332
      %v334 = vpop.f32.mrb[0].mxu0
      %v335 = vpop.f32.mrb[0].mxu0
      %v336 = vpop.f32.mrb[0].mxu0
      %337 = vdwg.mxu0
      %v341 = vunpack.c.l.b16 %v174
      %v342 = vunpack.c.l.b16 %v175
      %v343 = vunpack.c.l.b16 %v176
      %v344 = vpack.c.b16 %v342, %v341
      %v345 = vpack.c.b16 %v343, %v343
      %v364 = vunpack.c.l.b16 %v177
      %v365 = vunpack.c.l.b16 %v178
      %v366 = vunpack.c.l.b16 %v179
      %v367 = vunpack.c.l.b16 %v180
      %v368 = vunpack.c.l.b16 %v181
      %v369 = vunpack.c.l.b16 %v182
      %v370 = vunpack.c.l.b16 %v183
      %v371 = vunpack.c.l.b16 %v184
      %v372 = vunpack.c.l.b16 %v185
      %v373 = vunpack.c.l.b16 %v186
      %v374 = vunpack.c.l.b16 %v187
      %v375 = vunpack.c.l.b16 %v188
      %v376 = vunpack.c.l.b16 %v189
      %v377 = vunpack.c.l.b16 %v190
      %v378 = vunpack.c.l.b16 %v191
      %v379 = vunpack.c.l.b16 %v192
      %v380 = vpack.c.b16 %v365, %v364
      %v381 = vpack.c.b16 %v367, %v366
      %v382 = vpack.c.b16 %v369, %v368
      %v383 = vpack.c.b16 %v371, %v370
      %v384 = vpack.c.b16 %v373, %v372
      %v385 = vpack.c.b16 %v375, %v374
      %v386 = vpack.c.b16 %v377, %v376
      %v387 = vpack.c.b16 %v379, %v378
      %396 = vmatprep.subr.bf16.mxu0 0
      %397 = vmatpush1.bf16.msra.mxu0 %v380
      %398 = vmatprep.subr.bf16.mxu0 0
      %399 = vmatpush1.bf16.msra.mxu0 %v381
      %400 = vmatprep.subr.bf16.mxu0 0
      %401 = vmatpush1.bf16.msra.mxu0 %v382
      %402 = vmatprep.subr.bf16.mxu0 0
      %403 = vmatpush1.bf16.msra.mxu0 %v383
      %404 = vmatprep.subr.bf16.mxu0 0
      %405 = vmatpush1.bf16.msra.mxu0 %v384
      %406 = vmatprep.subr.bf16.mxu0 0
      %407 = vmatpush1.bf16.msra.mxu0 %v385
      %408 = vmatprep.subr.bf16.mxu0 0
      %409 = vmatpush1.bf16.msra.mxu0 %v386
      %410 = vmatprep.subr.bf16.mxu0 0
      %411 = vmatpush1.bf16.msra.mxu0 %v387
      %412 = vmatprep.subr.bf16.mxu0 0
      %413 = vmatpush1.bf16.msra.mxu0 0
      %414 = vmatprep.subr.bf16.mxu0 0
      %415 = vmatpush1.bf16.msra.mxu0 0
      %416 = vmatprep.subr.bf16.mxu0 0
      %417 = vmatpush1.bf16.msra.mxu0 0
      %418 = vmatprep.subr.bf16.mxu0 0
      %419 = vmatpush1.bf16.msra.mxu0 0
      %420 = vmatprep.subr.bf16.mxu0 0
      %421 = vmatpush1.bf16.msra.mxu0 0
      %422 = vmatprep.subr.bf16.mxu0 0
      %423 = vmatpush1.bf16.msra.mxu0 0
      %424 = vmatprep.subr.bf16.mxu0 0
      %425 = vmatpush1.bf16.msra.mxu0 0
      %426 = vmatprep.subr.bf16.mxu0 0
      %427 = vmatpush1.bf16.msra.mxu0 0
      %428 = vmatprep.mubr.bf16.mxu0 0
      %429 = vmatmul.mubr.bf16.gmra.mrb[0].mxu0 %v344
      %v430 = vpop.f32.mrb[0].mxu0
      %v431 = vadd.f32 %v325, %v430
      %v432 = vpop.f32.mrb[0].mxu0
      %v433 = vpop.f32.mrb[0].mxu0
      %v434 = vadd.f32 %v328, %v433
      %v435 = vpop.f32.mrb[0].mxu0
      %436 = vmatprep.mubr.bf16.mxu0 0
      %437 = vmatmul.mubr.bf16.gmra.mrb[0].mxu0 %v345
      %v438 = vpop.f32.mrb[0].mxu0
      %v439 = vadd.f32 %v333, %v438
      %v440 = vpop.f32.mrb[0].mxu0
      %v441 = vpop.f32.mrb[0].mxu0
      %v442 = vpop.f32.mrb[0].mxu0
      %443 = vdwg.mxu0
      %v444 = vld [vmem:[%s166] sm:$0xc]
      %v445 = vld [vmem:[%s166 + $0xc] sm:$0x7]
      %s446 = scalar_lea.vmem %s1, 128
      %v447 = vld [vmem:[%s446] sm:$0xf]
      %v448 = vld [vmem:[%s446 + $0x4] sm:$0xf]
      %v449 = vld [vmem:[%s446 + $0x8] sm:$0xf]
      %v450 = vld [vmem:[%s446 + $0xc] sm:$0xf]
      %v451 = vld [vmem:[%s446 + $0x10] sm:$0xf]
      %v452 = vld [vmem:[%s446 + $0x14] sm:$0xf]
      %v453 = vld [vmem:[%s446 + $0x18] sm:$0xf]
      %v454 = vld [vmem:[%s446 + $0x1c] sm:$0xf]
      %v455 = vld [vmem:[%s446 + $0x20] sm:$0xf]
      %v456 = vld [vmem:[%s446 + $0x24] sm:$0xf]
      %v457 = vld [vmem:[%s446 + $0x28] sm:$0xf]
      %v458 = vld [vmem:[%s446 + $0x2c] sm:$0xf]
      %v459 = vld [vmem:[%s446 + $0x30] sm:$0xf]
      %v460 = vld [vmem:[%s446 + $0x34] sm:$0xf]
      %v461 = vld [vmem:[%s446 + $0x38] sm:$0xf]
      %v462 = vld [vmem:[%s446 + $0x3c] sm:$0xf]
      %v465 = vunpack.c.l.b16 %v444
      %v466 = vunpack.c.l.b16 %v445
      %v467 = vpack.c.b16 %v219, %v465
      %v468 = vpack.c.b16 %v466, %v220
      %vm469 = vsmask.f32 5376
      %v471 = vshrl.u32 %v467, 16
      %v473 = vrot.slane %v471, 2
      %v474 = vshll.u32 %v467, 16
      %v476 = vrot.slane %v474, 3
      %v477 = vor.u32 %v473, %v476
      %v479 = vshrl.u32 %v468, 16
      %v481 = vrot.slane %v479, 2
      %v482 = vshll.u32 %v468, 16
      %v484 = vrot.slane %v482, 3
      %v485 = vor.u32 %v481, %v484
      %v486 = vsel %vm469, %v477, %v485
      %v505 = vunpack.c.l.b16 %v447
      %v506 = vunpack.c.l.b16 %v448
      %v507 = vunpack.c.l.b16 %v449
      %v508 = vunpack.c.l.b16 %v450
      %v509 = vunpack.c.l.b16 %v451
      %v510 = vunpack.c.l.b16 %v452
      %v511 = vunpack.c.l.b16 %v453
      %v512 = vunpack.c.l.b16 %v454
      %v513 = vunpack.c.l.b16 %v455
      %v514 = vunpack.c.l.b16 %v456
      %v515 = vunpack.c.l.b16 %v457
      %v516 = vunpack.c.l.b16 %v458
      %v517 = vunpack.c.l.b16 %v459
      %v518 = vunpack.c.l.b16 %v460
      %v519 = vunpack.c.l.b16 %v461
      %v520 = vunpack.c.l.b16 %v462
      %v521 = vpack.c.b16 %v506, %v505
      %v522 = vpack.c.b16 %v508, %v507
      %v523 = vpack.c.b16 %v510, %v509
      %v524 = vpack.c.b16 %v512, %v511
      %v525 = vpack.c.b16 %v514, %v513
      %v526 = vpack.c.b16 %v516, %v515
      %v527 = vpack.c.b16 %v518, %v517
      %v528 = vpack.c.b16 %v520, %v519
      %537 = vmatprep.subr.bf16.mxu0 0
      %538 = vmatpush1.bf16.msra.mxu0 %v521
      %539 = vmatprep.subr.bf16.mxu0 0
      %540 = vmatpush1.bf16.msra.mxu0 %v522
      %541 = vmatprep.subr.bf16.mxu0 0
      %542 = vmatpush1.bf16.msra.mxu0 %v523
      %543 = vmatprep.subr.bf16.mxu0 0
      %544 = vmatpush1.bf16.msra.mxu0 %v524
      %545 = vmatprep.subr.bf16.mxu0 0
      %546 = vmatpush1.bf16.msra.mxu0 %v525
      %547 = vmatprep.subr.bf16.mxu0 0
      %548 = vmatpush1.bf16.msra.mxu0 %v526
      %549 = vmatprep.subr.bf16.mxu0 0
      %550 = vmatpush1.bf16.msra.mxu0 %v527
      %551 = vmatprep.subr.bf16.mxu0 0
      %552 = vmatpush1.bf16.msra.mxu0 %v528
      %553 = vmatprep.subr.bf16.mxu0 0
      %554 = vmatpush1.bf16.msra.mxu0 0
      %555 = vmatprep.subr.bf16.mxu0 0
      %556 = vmatpush1.bf16.msra.mxu0 0
      %557 = vmatprep.subr.bf16.mxu0 0
      %558 = vmatpush1.bf16.msra.mxu0 0
      %559 = vmatprep.subr.bf16.mxu0 0
      %560 = vmatpush1.bf16.msra.mxu0 0
      %561 = vmatprep.subr.bf16.mxu0 0
      %562 = vmatpush1.bf16.msra.mxu0 0
      %563 = vmatprep.subr.bf16.mxu0 0
      %564 = vmatpush1.bf16.msra.mxu0 0
      %565 = vmatprep.subr.bf16.mxu0 0
      %566 = vmatpush1.bf16.msra.mxu0 0
      %567 = vmatprep.subr.bf16.mxu0 0
      %568 = vmatpush1.bf16.msra.mxu0 0
      %569 = vmatprep.mubr.bf16.mxu0 0
      %570 = vmatmul.mubr.bf16.gmra.mrb[0].mxu0 %v486
      %v571 = vpop.f32.mrb[0].mxu0
      %v572 = vadd.f32 0.0, %v571
      %v573 = vpop.f32.mrb[0].mxu0
      %v574 = vpop.f32.mrb[0].mxu0
      %v575 = vadd.f32 0.0, %v574
      %v576 = vpop.f32.mrb[0].mxu0
      %577 = vmatprep.mubr.bf16.mxu0 0
      %578 = vmatmul.mubr.bf16.gmra.mrb[0].mxu0 %v485
      %v579 = vpop.f32.mrb[0].mxu0
      %v580 = vadd.f32 0.0, %v579
      %v581 = vpop.f32.mrb[0].mxu0
      %v582 = vpop.f32.mrb[0].mxu0
      %v583 = vpop.f32.mrb[0].mxu0
      %584 = vdwg.mxu0
      %v585 = vadd.f32 %v431, %v572
      %v586 = vadd.f32 %v434, %v575
      %v587 = vadd.f32 %v439, %v580
      %v588 = vld [vmem:[%s166] sm:$0x8]
      %s589 = scalar_lea.vmem %s1, 192
      %v590 = vld [vmem:[%s589] sm:$0xf]
      %v591 = vld [vmem:[%s589 + $0x4] sm:$0xf]
      %v592 = vld [vmem:[%s589 + $0x8] sm:$0xf]
      %v593 = vld [vmem:[%s589 + $0xc] sm:$0xf]
      %v594 = vld [vmem:[%s589 + $0x10] sm:$0xf]
      %v595 = vld [vmem:[%s589 + $0x14] sm:$0xf]
      %v596 = vld [vmem:[%s589 + $0x18] sm:$0xf]
      %v597 = vld [vmem:[%s589 + $0x1c] sm:$0xf]
      %v598 = vld [vmem:[%s589 + $0x20] sm:$0xf]
      %v599 = vld [vmem:[%s589 + $0x24] sm:$0xf]
      %v600 = vld [vmem:[%s589 + $0x28] sm:$0xf]
      %v601 = vld [vmem:[%s589 + $0x2c] sm:$0xf]
      %v602 = vld [vmem:[%s589 + $0x30] sm:$0xf]
      %v603 = vld [vmem:[%s589 + $0x34] sm:$0xf]
      %v604 = vld [vmem:[%s589 + $0x38] sm:$0xf]
      %v605 = vld [vmem:[%s589 + $0x3c] sm:$0xf]
      %v607 = vunpack.c.l.b16 %v588
      %v608 = vpack.c.b16 %v219, %v607
      %vm609 = vcmask 1044480
      %v610 = vrot.slane %v608, 3
      %v611 = vrot.slane %v468, 3
      %v612 = vsel %vm609, %v610, %v611
      %v631 = vunpack.c.l.b16 %v590
      %v632 = vunpack.c.l.b16 %v591
      %v633 = vunpack.c.l.b16 %v592
      %v634 = vunpack.c.l.b16 %v593
      %v635 = vunpack.c.l.b16 %v594
      %v636 = vunpack.c.l.b16 %v595
      %v637 = vunpack.c.l.b16 %v596
      %v638 = vunpack.c.l.b16 %v597
      %v639 = vunpack.c.l.b16 %v598
      %v640 = vunpack.c.l.b16 %v599
      %v641 = vunpack.c.l.b16 %v600
      %v642 = vunpack.c.l.b16 %v601
      %v643 = vunpack.c.l.b16 %v602
      %v644 = vunpack.c.l.b16 %v603
      %v645 = vunpack.c.l.b16 %v604
      %v646 = vunpack.c.l.b16 %v605
      %v647 = vpack.c.b16 %v632, %v631
      %v648 = vpack.c.b16 %v634, %v633
      %v649 = vpack.c.b16 %v636, %v635
      %v650 = vpack.c.b16 %v638, %v637
      %v651 = vpack.c.b16 %v640, %v639
      %v652 = vpack.c.b16 %v642, %v641
      %v653 = vpack.c.b16 %v644, %v643
      %v654 = vpack.c.b16 %v646, %v645
      %663 = vmatprep.subr.bf16.mxu0 0
      %664 = vmatpush1.bf16.msra.mxu0 %v647
      %665 = vmatprep.subr.bf16.mxu0 0
      %666 = vmatpush1.bf16.msra.mxu0 %v648
      %667 = vmatprep.subr.bf16.mxu0 0
      %668 = vmatpush1.bf16.msra.mxu0 %v649
      %669 = vmatprep.subr.bf16.mxu0 0
      %670 = vmatpush1.bf16.msra.mxu0 %v650
      %671 = vmatprep.subr.bf16.mxu0 0
      %672 = vmatpush1.bf16.msra.mxu0 %v651
      %673 = vmatprep.subr.bf16.mxu0 0
      %674 = vmatpush1.bf16.msra.mxu0 %v652
      %675 = vmatprep.subr.bf16.mxu0 0
      %676 = vmatpush1.bf16.msra.mxu0 %v653
      %677 = vmatprep.subr.bf16.mxu0 0
      %678 = vmatpush1.bf16.msra.mxu0 %v654
      %679 = vmatprep.subr.bf16.mxu0 0
      %680 = vmatpush1.bf16.msra.mxu0 0
      %681 = vmatprep.subr.bf16.mxu0 0
      %682 = vmatpush1.bf16.msra.mxu0 0
      %683 = vmatprep.subr.bf16.mxu0 0
      %684 = vmatpush1.bf16.msra.mxu0 0
      %685 = vmatprep.subr.bf16.mxu0 0
      %686 = vmatpush1.bf16.msra.mxu0 0
      %687 = vmatprep.subr.bf16.mxu0 0
      %688 = vmatpush1.bf16.msra.mxu0 0
      %689 = vmatprep.subr.bf16.mxu0 0
      %690 = vmatpush1.bf16.msra.mxu0 0
      %691 = vmatprep.subr.bf16.mxu0 0
      %692 = vmatpush1.bf16.msra.mxu0 0
      %693 = vmatprep.subr.bf16.mxu0 0
      %694 = vmatpush1.bf16.msra.mxu0 0
      %695 = vmatprep.mubr.bf16.mxu0 0
      %696 = vmatmul.mubr.bf16.gmra.mrb[0].mxu0 %v612
      %v697 = vpop.f32.mrb[0].mxu0
      %v698 = vadd.f32 0.0, %v697
      %v699 = vpop.f32.mrb[0].mxu0
      %v700 = vpop.f32.mrb[0].mxu0
      %v701 = vadd.f32 0.0, %v700
      %v702 = vpop.f32.mrb[0].mxu0
      %703 = vmatprep.mubr.bf16.mxu0 0
      %704 = vmatmul.mubr.bf16.gmra.mrb[0].mxu0 %v611
      %v705 = vpop.f32.mrb[0].mxu0
      %v706 = vadd.f32 0.0, %v705
      %v707 = vpop.f32.mrb[0].mxu0
      %v708 = vpop.f32.mrb[0].mxu0
      %v709 = vpop.f32.mrb[0].mxu0
      %710 = vdwg.mxu0
      %v711 = vadd.f32 %v585, %v698
      %v712 = vadd.f32 %v586, %v701
      %v713 = vadd.f32 %v587, %v706
      %v714 = vld [vmem:[%s2] sm:$0x1]
      %v716 = vlaneseq
      %v717 = vshrl.u32 %v716, 7
      %v718 = vsub.s32 0, %v717
      %v719 = vrot.slane %v714, %v718
      %v721 = vadd.f32 %v711, %v719
      %v722 = vadd.f32 %v712, %v719
      %v723 = vadd.f32 %v713, %v719
      %vm724 = vcmp.ge.f32.partialorder %v721, 0.0
      %vm725 = vcmp.ge.f32.partialorder %v722, 0.0
      %vm726 = vcmp.ge.f32.partialorder %v723, 0.0
      %v727 = vmul.f32 %v721, 0.2
      %v728 = vmul.f32 %v722, 0.2
      %v729 = vmul.f32 %v723, 0.2
      %v730 = vsel %vm724, %v721, %v727
      %v731 = vsel %vm725, %v722, %v728
      %v732 = vsel %vm726, %v723, %v729
      %v733 = vpack.c.bf16 %v731, %v730
      %v734 = vpack.c.bf16 %v732, %v732
      %v737 = vunpack.c.l.b16 %v733
      %v738 = vunpack.c.h.b16 %v733
      %v739 = vunpack.c.l.b16 %v734
      %v740 = vpack.c.b16 %v737, %v737
      %v741 = vpack.c.b16 %v738, %v738
      %v742 = vpack.c.b16 %v739, %v739
      %746 = vst [vmem:[%s172] sm:$0xf] %v740
      %747 = vst [vmem:[%s172 + $0x4] sm:$0xf] %v741
      %748 = vst [vmem:[%s172 + $0x8] sm:$0xf] %v742
      %p749 = scmp.lt.s32.totalorder %s14, 1
      %s750 = scalar_select %p749, %s14, 1
      %s751 = smul.addr %s750, 3
      %s752 = smul.addr %s751, 4
      %s753 = scalar_lea.vmem %s3, %s752
      // Predicated region
      $region33: #{latent_discriminator_forward.7} parent=31 // pred_check
        %p754 = pneg %p100
      $region34: #{latent_discriminator_forward.7} parent=31 // pred_check_branch
        %756 = sbr.rel (%p754) target = $region36
      $region35: #{latent_discriminator_forward.7} parent=31 // pred_region
        _
      $region36: #{latent_discriminator_forward.7} parent=31 // pred_fallthru
        _
    $region32: #{latent_discriminator_forward.7} parent=5 // pred_fallthru
      _
    %p757 = scmp.le.s32.totalorder 2, %s9
    // Predicated region
    $region37: #{latent_discriminator_forward.7} parent=5 // pred_check
      %p758 = pneg %p757
    $region38: #{latent_discriminator_forward.7} parent=5 // pred_check_branch
      %760 = sbr.rel (%p758) target = $region40
    $region39: #{latent_discriminator_forward.7} parent=5 // pred_region
      %s761 = ssub.s32 %s9, 2
      // Predicated region
      $region41: #{latent_discriminator_forward.7} parent=39 // pred_check
        %p762 = pneg %p106
      $region42: #{latent_discriminator_forward.7} parent=39 // pred_check_branch
        %764 = sbr.rel (%p762) target = $region44
      $region43: #{latent_discriminator_forward.7} parent=39 // pred_region
        %p765 = scmp.lt.s32.totalorder %s15, 1
        %s766 = scalar_select %p765, %s15, 1
        %s767 = smul.addr %s766, 3
        %s768 = smul.addr %s767, 4
        %s769 = scalar_lea.vmem %s3, %s768
      $region44: #{latent_discriminator_forward.7} parent=39 // pred_fallthru
        _
    $region40: #{latent_discriminator_forward.7} parent=5 // pred_fallthru
      _
  $region6: #{latent_discriminator_forward.7} parent=0 // loop_footer
    %s13 = sadd.s32 1, %s9
  $region7: #{latent_discriminator_forward.7} parent=0 // loop_footer_branch
    %8 = sbr.rel target = $region3
  $region8: #{latent_discriminator_forward.7} parent=0 // loop_exit
    _

// kernel: latent_discriminator_forward.8
$region0: #{latent_discriminator_forward.8}
  #allocation0 [shape = 'u32[]', space=smem, size = 0x4, offset = 0x4, fixed_abs, tag = 'smem constant byte address 0x4 - core index']
  #allocation1 [shape = 'u32[144,128]{1,0:T(1,128)}', space=vmem, size = 0x12000, scoped, tag = 'internal scratch']
  %s0 = inlined_call_operand.vmem [shape: bf16[32,256], index: 0, kind: input, shape index: {}]
  %s1 = inlined_call_operand.vmem [shape: bf16[4,256,128], index: 1, kind: input, shape index: {}]
  %s2 = inlined_call_operand.vmem [shape: f32[1,128], index: 2, kind: input, shape index: {}]
  %s3 = inlined_call_operand.vmem [shape: bf16[2,8,128], index: 3, kind: output, shape index: {}]
  %s4 = sld [smem:[#allocation0]]
  $region45: #{latent_discriminator_forward.8} parent=0
    _
  %s6 = ssub.s32 1, %s4
  %s7 = scalar_select 0, %s6, %s4
  loop: start=0, step=1, limit=4
  $region2: #{latent_discriminator_forward.8} parent=0 // loop_pre_header
    _
  $region3: #{latent_discriminator_forward.8} parent=0 // loop_header
    %s9 = sphi 0, %s13
    %p10 = scmp.ge.s32.totalorder %s9, 4
    %s19 = sphi 0, %s21
    %s22 = sphi 0, %s19
    %s23 = sphi 0, %s22
    %s39 = sphi 0, %s23
    %s43 = sphi 0, %s43
    %s45 = sphi 0, %s43
    %s46 = sphi 0, %s45
    %s60 = sphi 0, %s46
    %s64 = sphi 0, %s64
    %s66 = sphi 0, %s64
    %s67 = sphi 0, %s66
    %s81 = sphi 0, %s67
    %s87 = sphi 0, %s89
    %s90 = sphi 0, %s87
    %s91 = sphi 0, %s90
    %s107 = sphi 0, %s91
  $region4: #{latent_discriminator_forward.8} parent=0 // loop_header_branch
    %12 = sbr.rel (%p10) target = $region8
  $region5: #{latent_discriminator_forward.8} parent=0 // loop_body
    %s14 = ssub.s32 %s9, 1
    %s15 = ssub.s32 %s9, 2
    %s16 = sadd.s32 %s9, 1
    %s17 = ssub.s32 %s9, %s16
    %p18 = scmp.eq.s32.totalorder %s17, 0
    %s20 = sadd.s32 %s19, 1
    %s21 = scalar_select %p18, %s19, %s20
    %p24 = pneg %p18
    %p25 = scmp.eq.s32.totalorder %s9, 1
    %p26 = por %p24, %p25
    %p27 = scmp.ne.s32.totalorder %s19, %s22
    %p28 = scmp.eq.s32.totalorder %s9, 0
    %p29 = por %p27, %p28
    %p30 = scmp.ne.s32.totalorder %s19, %s22
    %p31 = scmp.eq.s32.totalorder %s14, 1
    %p32 = por %p30, %p31
    %p33 = scmp.ne.s32.totalorder %s22, %s23
    %p34 = scmp.eq.s32.totalorder %s14, 0
    %p35 = por %p33, %p34
    %p36 = scmp.ne.s32.totalorder %s22, %s23
    %p37 = scmp.eq.s32.totalorder %s15, 1
    %p38 = por %p36, %p37
    %p40 = scmp.ne.s32.totalorder %s23, %s39
    %p41 = scmp.eq.s32.totalorder %s15, 0
    %p42 = por %p40, %p41
    %s44 = sadd.s32 %s43, 1
    %p47 = scmp.eq.s32.totalorder %s9, 1
    %p48 = scmp.ne.s32.totalorder %s43, %s45
    %p49 = scmp.eq.s32.totalorder %s9, 0
    %p50 = por %p48, %p49
    %p51 = scmp.ne.s32.totalorder %s43, %s45
    %p52 = scmp.eq.s32.totalorder %s14, 1
    %p53 = por %p51, %p52
    %p54 = scmp.ne.s32.totalorder %s45, %s46
    %p55 = scmp.eq.s32.totalorder %s14, 0
    %p56 = por %p54, %p55
    %p57 = scmp.ne.s32.totalorder %s45, %s46
    %p58 = scmp.eq.s32.totalorder %s15, 1
    %p59 = por %p57, %p58
    %p61 = scmp.ne.s32.totalorder %s46, %s60
    %p62 = scmp.eq.s32.totalorder %s15, 0
    %p63 = por %p61, %p62
    %s65 = sadd.s32 %s64, 1
    %p68 = scmp.eq.s32.totalorder %s9, 1
    %p69 = scmp.ne.s32.totalorder %s64, %s66
    %p70 = scmp.eq.s32.totalorder %s9, 0
    %p71 = por %p69, %p70
    %p72 = scmp.ne.s32.totalorder %s64, %s66
    %p73 = scmp.eq.s32.totalorder %s14, 1
    %p74 = por %p72, %p73
    %p75 = scmp.ne.s32.totalorder %s66, %s67
    %p76 = scmp.eq.s32.totalorder %s14, 0
    %p77 = por %p75, %p76
    %p78 = scmp.ne.s32.totalorder %s66, %s67
    %p79 = scmp.eq.s32.totalorder %s15, 1
    %p80 = por %p78, %p79
    %p82 = scmp.ne.s32.totalorder %s67, %s81
    %p83 = scmp.eq.s32.totalorder %s15, 0
    %p84 = por %p82, %p83
    %s85 = ssub.s32 %s9, %s16
    %p86 = scmp.eq.s32.totalorder %s85, 0
    %s88 = sadd.s32 %s87, 1
    %s89 = scalar_select %p86, %s87, %s88
    %p92 = pneg %p86
    %p93 = scmp.eq.s32.totalorder %s9, 1
    %p94 = por %p92, %p93
    %p95 = scmp.ne.s32.totalorder %s87, %s90
    %p96 = scmp.eq.s32.totalorder %s9, 0
    %p97 = por %p95, %p96
    %p98 = scmp.ne.s32.totalorder %s87, %s90
    %p99 = scmp.eq.s32.totalorder %s14, 1
    %p100 = por %p98, %p99
    %p101 = scmp.ne.s32.totalorder %s90, %s91
    %p102 = scmp.eq.s32.totalorder %s14, 0
    %p103 = por %p101, %p102
    %p104 = scmp.ne.s32.totalorder %s90, %s91
    %p105 = scmp.eq.s32.totalorder %s15, 1
    %p106 = por %p104, %p105
    %p108 = scmp.ne.s32.totalorder %s91, %s107
    %p109 = scmp.eq.s32.totalorder %s15, 0
    %p110 = por %p108, %p109
    %p111 = scmp.le.s32.totalorder 1, %s9
    %p112 = scmp.lt.s32.totalorder %s9, 3
    %p113 = pnand %p111, %p112
    %p114 = pneg %p113
    // Predicated region
    $region9: #{latent_discriminator_forward.8} parent=5 // pred_check
      _
    $region10: #{latent_discriminator_forward.8} parent=5 // pred_check_branch
      %116 = sbr.rel (%p113) target = $region12
    $region11: #{latent_discriminator_forward.8} parent=5 // pred_region
      %s117 = ssub.s32 %s9, 1
      // Predicated region
      $region13: #{latent_discriminator_forward.8} parent=11 // pred_check
        %p118 = pneg %p56
      $region14: #{latent_discriminator_forward.8} parent=11 // pred_check_branch
        %120 = sbr.rel (%p118) target = $region16
      $region15: #{latent_discriminator_forward.8} parent=11 // pred_region
        _
      $region16: #{latent_discriminator_forward.8} parent=11 // pred_fallthru
        _
      // Predicated region
      $region17: #{latent_discriminator_forward.8} parent=11 // pred_check
        %p121 = pneg %p77
      $region18: #{latent_discriminator_forward.8} parent=11 // pred_check_branch
        %123 = sbr.rel (%p121) target = $region20
      $region19: #{latent_discriminator_forward.8} parent=11 // pred_region
        _
      $region20: #{latent_discriminator_forward.8} parent=11 // pred_fallthru
        _
    $region12: #{latent_discriminator_forward.8} parent=5 // pred_fallthru
      _
    %p124 = scmp.lt.s32.totalorder %s9, 2
    // Predicated region
    $region21: #{latent_discriminator_forward.8} parent=5 // pred_check
      %p125 = pneg %p124
    $region22: #{latent_discriminator_forward.8} parent=5 // pred_check_branch
      %127 = sbr.rel (%p125) target = $region24
    $region23: #{latent_discriminator_forward.8} parent=5 // pred_region
      // Predicated region
      $region25: #{latent_discriminator_forward.8} parent=23 // pred_check
        %p128 = pneg %p29
      $region26: #{latent_discriminator_forward.8} parent=23 // pred_check_branch
        %130 = sbr.rel (%p128) target = $region28
      $region27: #{latent_discriminator_forward.8} parent=23 // pred_region
        %s131 = smul.u32 2, %s9
        %p132 = scmp.lt.s32.totalorder %s131, 3
        %s133 = scalar_select %p132, %s131, 3
        %s134 = smul.addr %s133, 2
        %s135 = smul.addr %s134, 4
        %s136 = scalar_lea.vmem %s0, %s135
        %s137 = smul.u32 2, %s9
      $region28: #{latent_discriminator_forward.8} parent=23 // pred_fallthru
        _
    $region24: #{latent_discriminator_forward.8} parent=5 // pred_fallthru
      _
    %p138 = scmp.le.s32.totalorder 1, %s9
    %p139 = scmp.lt.s32.totalorder %s9, 3
    %p140 = pnand %p138, %p139
    %p141 = pneg %p140
    // Predicated region
    $region29: #{latent_discriminator_forward.8} parent=5 // pred_check
      _
    $region30: #{latent_discriminator_forward.8} parent=5 // pred_check_branch
      %143 = sbr.rel (%p140) target = $region32
    $region31: #{latent_discriminator_forward.8} parent=5 // pred_region
      %s144 = ssub.s32 %s9, 1
      %s145 = smul.u32 2, %s14
      %p146 = scmp.lt.s32.totalorder %s145, 3
      %s147 = scalar_select %p146, %s145, 3
      %s148 = smul.addr %s147, 2
      %s149 = smul.addr %s148, 4
      %s150 = scalar_lea.vmem %s0, %s149
      %p151 = pneg %p35
      %p152 = pneg %p32
      %p153 = pneg %p56
      %p154 = pneg %p53
      %p155 = pneg %p77
      %p156 = pneg %p74
      %p157 = pneg %p103
      %p158 = pneg %p100
      %p159 = scmp.lt.s32.totalorder %s14, 1
      %s160 = scalar_select %p159, %s14, 1
      %s161 = smul.addr %s160, 4
      %s162 = scalar_lea.vmem %s3, %s161
      %s163 = smul.u32 2, %s14
      %p164 = scmp.lt.s32.totalorder %s163, 3
      %s165 = scalar_select %p164, %s163, 3
      %s166 = smul.addr %s165, 2
      %s167 = smul.addr %s166, 4
      %s168 = scalar_lea.vmem %s0, %s167
      %s169 = smul.u32 2, %s14
      %p170 = scmp.lt.s32.totalorder %s14, 1
      %s171 = scalar_select %p170, %s14, 1
      %s172 = smul.addr %s171, 4
      %s173 = scalar_lea.vmem %s3, %s172
      %v175 = vld [vmem:[%s168] sm:$0xff]
      %v176 = vld [vmem:[%s1] sm:$0xf]
      %v177 = vld [vmem:[%s1 + $0x4] sm:$0xf]
      %v178 = vld [vmem:[%s1 + $0x8] sm:$0xf]
      %v179 = vld [vmem:[%s1 + $0xc] sm:$0xf]
      %v180 = vld [vmem:[%s1 + $0x10] sm:$0xf]
      %v181 = vld [vmem:[%s1 + $0x14] sm:$0xf]
      %v182 = vld [vmem:[%s1 + $0x18] sm:$0xf]
      %v183 = vld [vmem:[%s1 + $0x1c] sm:$0xf]
      %v184 = vld [vmem:[%s1 + $0x20] sm:$0xf]
      %v185 = vld [vmem:[%s1 + $0x24] sm:$0xf]
      %v186 = vld [vmem:[%s1 + $0x28] sm:$0xf]
      %v187 = vld [vmem:[%s1 + $0x2c] sm:$0xf]
      %v188 = vld [vmem:[%s1 + $0x30] sm:$0xf]
      %v189 = vld [vmem:[%s1 + $0x34] sm:$0xf]
      %v190 = vld [vmem:[%s1 + $0x38] sm:$0xf]
      %v191 = vld [vmem:[%s1 + $0x3c] sm:$0xf]
      %v192 = vld [vmem:[%s1 + $0x40] sm:$0xf]
      %v193 = vld [vmem:[%s1 + $0x44] sm:$0xf]
      %v194 = vld [vmem:[%s1 + $0x48] sm:$0xf]
      %v195 = vld [vmem:[%s1 + $0x4c] sm:$0xf]
      %v196 = vld [vmem:[%s1 + $0x50] sm:$0xf]
      %v197 = vld [vmem:[%s1 + $0x54] sm:$0xf]
      %v198 = vld [vmem:[%s1 + $0x58] sm:$0xf]
      %v199 = vld [vmem:[%s1 + $0x5c] sm:$0xf]
      %v200 = vld [vmem:[%s1 + $0x60] sm:$0xf]
      %v201 = vld [vmem:[%s1 + $0x64] sm:$0xf]
      %v202 = vld [vmem:[%s1 + $0x68] sm:$0xf]
      %v203 = vld [vmem:[%s1 + $0x6c] sm:$0xf]
      %v204 = vld [vmem:[%s1 + $0x70] sm:$0xf]
      %v205 = vld [vmem:[%s1 + $0x74] sm:$0xf]
      %v206 = vld [vmem:[%s1 + $0x78] sm:$0xf]
      %v207 = vld [vmem:[%s1 + $0x7c] sm:$0xf]
      %v208 = vld [vmem:[%s168] sm:$0xff]
      %v209 = vld [vmem:[%s168 + $0x8] sm:$0x11]
      %s210 = scalar_lea.vmem %s1, 128
      %v211 = vld [vmem:[%s210] sm:$0xf]
      %v212 = vld [vmem:[%s210 + $0x4] sm:$0xf]
      %v213 = vld [vmem:[%s210 + $0x8] sm:$0xf]
      %v214 = vld [vmem:[%s210 + $0xc] sm:$0xf]
      %v215 = vld [vmem:[%s210 + $0x10] sm:$0xf]
      %v216 = vld [vmem:[%s210 + $0x14] sm:$0xf]
      %v217 = vld [vmem:[%s210 + $0x18] sm:$0xf]
      %v218 = vld [vmem:[%s210 + $0x1c] sm:$0xf]
      %v219 = vld [vmem:[%s210 + $0x20] sm:$0xf]
      %v220 = vld [vmem:[%s210 + $0x24] sm:$0xf]
      %v221 = vld [vmem:[%s210 + $0x28] sm:$0xf]
      %v222 = vld [vmem:[%s210 + $0x2c] sm:$0xf]
      %v223 = vld [vmem:[%s210 + $0x30] sm:$0xf]
      %v224 = vld [vmem:[%s210 + $0x34] sm:$0xf]
      %v225 = vld [vmem:[%s210 + $0x38] sm:$0xf]
      %v226 = vld [vmem:[%s210 + $0x3c] sm:$0xf]
      %v227 = vld [vmem:[%s210 + $0x40] sm:$0xf]
      %v228 = vld [vmem:[%s210 + $0x44] sm:$0xf]
      %v229 = vld [vmem:[%s210 + $0x48] sm:$0xf]
      %v230 = vld [vmem:[%s210 + $0x4c] sm:$0xf]
      %v231 = vld [vmem:[%s210 + $0x50] sm:$0xf]
      %v232 = vld [vmem:[%s210 + $0x54] sm:$0xf]
      %v233 = vld [vmem:[%s210 + $0x58] sm:$0xf]
      %v234 = vld [vmem:[%s210 + $0x5c] sm:$0xf]
      %v235 = vld [vmem:[%s210 + $0x60] sm:$0xf]
      %v236 = vld [vmem:[%s210 + $0x64] sm:$0xf]
      %v237 = vld [vmem:[%s210 + $0x68] sm:$0xf]
      %v238 = vld [vmem:[%s210 + $0x6c] sm:$0xf]
      %v239 = vld [vmem:[%s210 + $0x70] sm:$0xf]
      %v240 = vld [vmem:[%s210 + $0x74] sm:$0xf]
      %v241 = vld [vmem:[%s210 + $0x78] sm:$0xf]
      %v242 = vld [vmem:[%s210 + $0x7c] sm:$0xf]
      %v245 = vunpack.c.l.b16 %v208
      %v246 = vunpack.c.h.b16 %v208
      %v247 = vunpack.c.l.b16 %v209
      %v248 = vunpack.c.h.b16 %v209
      %v249 = vpack.c.b16 %v247, %v245
      %v250 = vpack.c.b16 %v248, %v246
      %v252 = vshrl.u32 %v249, 16
      %v254 = vshll.u32 %v249, 16
      %v256 = vrot.slane %v254, 1
      %v257 = vor.u32 %v252, %v256
      %v259 = vshrl.u32 %v250, 16
      %v261 = vshll.u32 %v250, 16
      %v263 = vrot.slane %v261, 1
      %v264 = vor.u32 %v259, %v263
      %v299 = vunpack.c.l.b16 %v211
      %v300 = vunpack.c.l.b16 %v212
      %v301 = vunpack.c.l.b16 %v213
      %v302 = vunpack.c.l.b16 %v214
      %v303 = vunpack.c.l.b16 %v215
      %v304 = vunpack.c.l.b16 %v216
      %v305 = vunpack.c.l.b16 %v217
      %v306 = vunpack.c.l.b16 %v218
      %v307 = vunpack.c.l.b16 %v219
      %v308 = vunpack.c.l.b16 %v220
      %v309 = vunpack.c.l.b16 %v221
      %v310 = vunpack.c.l.b16 %v222
      %v311 = vunpack.c.l.b16 %v223
      %v312 = vunpack.c.l.b16 %v224
      %v313 = vunpack.c.l.b16 %v225
      %v314 = vunpack.c.l.b16 %v226
      %v315 = vunpack.c.l.b16 %v227
      %v316 = vunpack.c.l.b16 %v228
      %v317 = vunpack.c.l.b16 %v229
      %v318 = vunpack.c.l.b16 %v230
      %v319 = vunpack.c.l.b16 %v231
      %v320 = vunpack.c.l.b16 %v232
      %v321 = vunpack.c.l.b16 %v233
      %v322 = vunpack.c.l.b16 %v234
      %v323 = vunpack.c.l.b16 %v235
      %v324 = vunpack.c.l.b16 %v236
      %v325 = vunpack.c.l.b16 %v237
      %v326 = vunpack.c.l.b16 %v238
      %v327 = vunpack.c.l.b16 %v239
      %v328 = vunpack.c.l.b16 %v240
      %v329 = vunpack.c.l.b16 %v241
      %v330 = vunpack.c.l.b16 %v242
      %v331 = vpack.c.b16 %v300, %v299
      %v332 = vpack.c.b16 %v302, %v301
      %v333 = vpack.c.b16 %v304, %v303
      %v334 = vpack.c.b16 %v306, %v305
      %v335 = vpack.c.b16 %v308, %v307
      %v336 = vpack.c.b16 %v310, %v309
      %v337 = vpack.c.b16 %v312, %v311
      %v338 = vpack.c.b16 %v314, %v313
      %v339 = vpack.c.b16 %v316, %v315
      %v340 = vpack.c.b16 %v318, %v317
      %v341 = vpack.c.b16 %v320, %v319
      %v342 = vpack.c.b16 %v322, %v321
      %v343 = vpack.c.b16 %v324, %v323
      %v344 = vpack.c.b16 %v326, %v325
      %v345 = vpack.c.b16 %v328, %v327
      %v346 = vpack.c.b16 %v330, %v329
      %363 = vmatprep.subr.bf16.mxu0 0
      %364 = vmatpush1.bf16.msra.mxu0 %v331
      %365 = vmatprep.subr.bf16.mxu0 0
      %366 = vmatpush1.bf16.msra.mxu0 %v332
      %367 = vmatprep.subr.bf16.mxu0 0
      %368 = vmatpush1.bf16.msra.mxu0 %v333
      %369 = vmatprep.subr.bf16.mxu0 0
      %370 = vmatpush1.bf16.msra.mxu0 %v334
      %371 = vmatprep.subr.bf16.mxu0 0
      %372 = vmatpush1.bf16.msra.mxu0 %v335
      %373 = vmatprep.subr.bf16.mxu0 0
      %374 = vmatpush1.bf16.msra.mxu0 %v336
      %375 = vmatprep.subr.bf16.mxu0 0
      %376 = vmatpush1.bf16.msra.mxu0 %v337
      %377 = vmatprep.subr.bf16.mxu0 0
      %378 = vmatpush1.bf16.msra.mxu0 %v338
      %379 = vmatprep.subr.bf16.mxu0 0
      %380 = vmatpush1.bf16.msra.mxu0 %v339
      %381 = vmatprep.subr.bf16.mxu0 0
      %382 = vmatpush1.bf16.msra.mxu0 %v340
      %383 = vmatprep.subr.bf16.mxu0 0
      %384 = vmatpush1.bf16.msra.mxu0 %v341
      %385 = vmatprep.subr.bf16.mxu0 0
      %386 = vmatpush1.bf16.msra.mxu0 %v342
      %387 = vmatprep.subr.bf16.mxu0 0
      %388 = vmatpush1.bf16.msra.mxu0 %v343
      %389 = vmatprep.subr.bf16.mxu0 0
      %390 = vmatpush1.bf16.msra.mxu0 %v344
      %391 = vmatprep.subr.bf16.mxu0 0
      %392 = vmatpush1.bf16.msra.mxu0 %v345
      %393 = vmatprep.subr.bf16.mxu0 0
      %394 = vmatpush1.bf16.msra.mxu0 %v346
      %395 = vmatprep.mubr.bf16.mxu0 %v264
      %396 = vmatmul.mubr.bf16.gmra.mrb[0].mxu0 %v257
      %v397 = vpop.f32.mrb[0].mxu0
      %v398 = vadd.f32 0.0, %v397
      %v399 = vpop.f32.mrb[0].mxu0
      %v400 = vpop.f32.mrb[0].mxu0
      %v401 = vpop.f32.mrb[0].mxu0
      %402 = vdwg.mxu0
      %v404 = vunpack.c.l.b16 %v175
      %v405 = vunpack.c.h.b16 %v175
      %v406 = vpack.c.b16 %v404, %v404
      %v407 = vpack.c.b16 %v405, %v405
      %v442 = vunpack.c.l.b16 %v176
      %v443 = vunpack.c.l.b16 %v177
      %v444 = vunpack.c.l.b16 %v178
      %v445 = vunpack.c.l.b16 %v179
      %v446 = vunpack.c.l.b16 %v180
      %v447 = vunpack.c.l.b16 %v181
      %v448 = vunpack.c.l.b16 %v182
      %v449 = vunpack.c.l.b16 %v183
      %v450 = vunpack.c.l.b16 %v184
      %v451 = vunpack.c.l.b16 %v185
      %v452 = vunpack.c.l.b16 %v186
      %v453 = vunpack.c.l.b16 %v187
      %v454 = vunpack.c.l.b16 %v188
      %v455 = vunpack.c.l.b16 %v189
      %v456 = vunpack.c.l.b16 %v190
      %v457 = vunpack.c.l.b16 %v191
      %v458 = vunpack.c.l.b16 %v192
      %v459 = vunpack.c.l.b16 %v193
      %v460 = vunpack.c.l.b16 %v194
      %v461 = vunpack.c.l.b16 %v195
      %v462 = vunpack.c.l.b16 %v196
      %v463 = vunpack.c.l.b16 %v197
      %v464 = vunpack.c.l.b16 %v198
      %v465 = vunpack.c.l.b16 %v199
      %v466 = vunpack.c.l.b16 %v200
      %v467 = vunpack.c.l.b16 %v201
      %v468 = vunpack.c.l.b16 %v202
      %v469 = vunpack.c.l.b16 %v203
      %v470 = vunpack.c.l.b16 %v204
      %v471 = vunpack.c.l.b16 %v205
      %v472 = vunpack.c.l.b16 %v206
      %v473 = vunpack.c.l.b16 %v207
      %v474 = vpack.c.b16 %v443, %v442
      %v475 = vpack.c.b16 %v445, %v444
      %v476 = vpack.c.b16 %v447, %v446
      %v477 = vpack.c.b16 %v449, %v448
      %v478 = vpack.c.b16 %v451, %v450
      %v479 = vpack.c.b16 %v453, %v452
      %v480 = vpack.c.b16 %v455, %v454
      %v481 = vpack.c.b16 %v457, %v456
      %v482 = vpack.c.b16 %v459, %v458
      %v483 = vpack.c.b16 %v461, %v460
      %v484 = vpack.c.b16 %v463, %v462
      %v485 = vpack.c.b16 %v465, %v464
      %v486 = vpack.c.b16 %v467, %v466
      %v487 = vpack.c.b16 %v469, %v468
      %v488 = vpack.c.b16 %v471, %v470
      %v489 = vpack.c.b16 %v473, %v472
      %506 = vmatprep.subr.bf16.mxu0 0
      %507 = vmatpush1.bf16.msra.mxu0 %v474
      %508 = vmatprep.subr.bf16.mxu0 0
      %509 = vmatpush1.bf16.msra.mxu0 %v475
      %510 = vmatprep.subr.bf16.mxu0 0
      %511 = vmatpush1.bf16.msra.mxu0 %v476
      %512 = vmatprep.subr.bf16.mxu0 0
      %513 = vmatpush1.bf16.msra.mxu0 %v477
      %514 = vmatprep.subr.bf16.mxu0 0
      %515 = vmatpush1.bf16.msra.mxu0 %v478
      %516 = vmatprep.subr.bf16.mxu0 0
      %517 = vmatpush1.bf16.msra.mxu0 %v479
      %518 = vmatprep.subr.bf16.mxu0 0
      %519 = vmatpush1.bf16.msra.mxu0 %v480
      %520 = vmatprep.subr.bf16.mxu0 0
      %521 = vmatpush1.bf16.msra.mxu0 %v481
      %522 = vmatprep.subr.bf16.mxu0 0
      %523 = vmatpush1.bf16.msra.mxu0 %v482
      %524 = vmatprep.subr.bf16.mxu0 0
      %525 = vmatpush1.bf16.msra.mxu0 %v483
      %526 = vmatprep.subr.bf16.mxu0 0
      %527 = vmatpush1.bf16.msra.mxu0 %v484
      %528 = vmatprep.subr.bf16.mxu0 0
      %529 = vmatpush1.bf16.msra.mxu0 %v485
      %530 = vmatprep.subr.bf16.mxu0 0
      %531 = vmatpush1.bf16.msra.mxu0 %v486
      %532 = vmatprep.subr.bf16.mxu0 0
      %533 = vmatpush1.bf16.msra.mxu0 %v487
      %534 = vmatprep.subr.bf16.mxu0 0
      %535 = vmatpush1.bf16.msra.mxu0 %v488
      %536 = vmatprep.subr.bf16.mxu0 0
      %537 = vmatpush1.bf16.msra.mxu0 %v489
      %538 = vmatprep.mubr.bf16.mxu0 %v407
      %539 = vmatmul.mubr.bf16.gmra.mrb[0].mxu0 %v406
      %v540 = vpop.f32.mrb[0].mxu0
      %v541 = vadd.f32 %v398, %v540
      %v542 = vpop.f32.mrb[0].mxu0
      %v543 = vpop.f32.mrb[0].mxu0
      %v544 = vpop.f32.mrb[0].mxu0
      %545 = vdwg.mxu0
      %v546 = vld [vmem:[%s168] sm:$0xee]
      %v547 = vld [vmem:[%s168 + $0x8] sm:$0x33]
      %s548 = scalar_lea.vmem %s1, 256
      %v549 = vld [vmem:[%s548] sm:$0xf]
      %v550 = vld [vmem:[%s548 + $0x4] sm:$0xf]
      %v551 = vld [vmem:[%s548 + $0x8] sm:$0xf]
      %v552 = vld [vmem:[%s548 + $0xc] sm:$0xf]
      %v553 = vld [vmem:[%s548 + $0x10] sm:$0xf]
      %v554 = vld [vmem:[%s548 + $0x14] sm:$0xf]
      %v555 = vld [vmem:[%s548 + $0x18] sm:$0xf]
      %v556 = vld [vmem:[%s548 + $0x1c] sm:$0xf]
      %v557 = vld [vmem:[%s548 + $0x20] sm:$0xf]
      %v558 = vld [vmem:[%s548 + $0x24] sm:$0xf]
      %v559 = vld [vmem:[%s548 + $0x28] sm:$0xf]
      %v560 = vld [vmem:[%s548 + $0x2c] sm:$0xf]
      %v561 = vld [vmem:[%s548 + $0x30] sm:$0xf]
      %v562 = vld [vmem:[%s548 + $0x34] sm:$0xf]
      %v563 = vld [vmem:[%s548 + $0x38] sm:$0xf]
      %v564 = vld [vmem:[%s548 + $0x3c] sm:$0xf]
      %v565 = vld [vmem:[%s548 + $0x40] sm:$0xf]
      %v566 = vld [vmem:[%s548 + $0x44] sm:$0xf]
      %v567 = vld [vmem:[%s548 + $0x48] sm:$0xf]
      %v568 = vld [vmem:[%s548 + $0x4c] sm:$0xf]
      %v569 = vld [vmem:[%s548 + $0x50] sm:$0xf]
      %v570 = vld [vmem:[%s548 + $0x54] sm:$0xf]
      %v571 = vld [vmem:[%s548 + $0x58] sm:$0xf]
      %v572 = vld [vmem:[%s548 + $0x5c] sm:$0xf]
      %v573 = vld [vmem:[%s548 + $0x60] sm:$0xf]
      %v574 = vld [vmem:[%s548 + $0x64] sm:$0xf]
      %v575 = vld [vmem:[%s548 + $0x68] sm:$0xf]
      %v576 = vld [vmem:[%s548 + $0x6c] sm:$0xf]
      %v577 = vld [vmem:[%s548 + $0x70] sm:$0xf]
      %v578 = vld [vmem:[%s548 + $0x74] sm:$0xf]
      %v579 = vld [vmem:[%s548 + $0x78] sm:$0xf]
      %v580 = vld [vmem:[%s548 + $0x7c] sm:$0xf]
      %v583 = vunpack.c.l.b16 %v546
      %v584 = vunpack.c.h.b16 %v546
      %v585 = vunpack.c.l.b16 %v547
      %v586 = vunpack.c.h.b16 %v547
      %v587 = vpack.c.b16 %v585, %v583
      %v588 = vpack.c.b16 %v586, %v584
      %v590 = vshrl.u32 %v587, 16
      %v592 = vrot.slane %v590, 1
      %v593 = vshll.u32 %v587, 16
      %v595 = vrot.slane %v593, 2
      %v596 = vor.u32 %v592, %v595
      %v598 = vshrl.u32 %v588, 16
      %v600 = vrot.slane %v598, 1
      %v601 = vshll.u32 %v588, 16
      %v603 = vrot.slane %v601, 2
      %v604 = vor.u32 %v600, %v603
      %v639 = vunpack.c.l.b16 %v549
      %v640 = vunpack.c.l.b16 %v550
      %v641 = vunpack.c.l.b16 %v551
      %v642 = vunpack.c.l.b16 %v552
      %v643 = vunpack.c.l.b16 %v553
      %v644 = vunpack.c.l.b16 %v554
      %v645 = vunpack.c.l.b16 %v555
      %v646 = vunpack.c.l.b16 %v556
      %v647 = vunpack.c.l.b16 %v557
      %v648 = vunpack.c.l.b16 %v558
      %v649 = vunpack.c.l.b16 %v559
      %v650 = vunpack.c.l.b16 %v560
      %v651 = vunpack.c.l.b16 %v561
      %v652 = vunpack.c.l.b16 %v562
      %v653 = vunpack.c.l.b16 %v563
      %v654 = vunpack.c.l.b16 %v564
      %v655 = vunpack.c.l.b16 %v565
      %v656 = vunpack.c.l.b16 %v566
      %v657 = vunpack.c.l.b16 %v567
      %v658 = vunpack.c.l.b16 %v568
      %v659 = vunpack.c.l.b16 %v569
      %v660 = vunpack.c.l.b16 %v570
      %v661 = vunpack.c.l.b16 %v571
      %v662 = vunpack.c.l.b16 %v572
      %v663 = vunpack.c.l.b16 %v573
      %v664 = vunpack.c.l.b16 %v574
      %v665 = vunpack.c.l.b16 %v575
      %v666 = vunpack.c.l.b16 %v576
      %v667 = vunpack.c.l.b16 %v577
      %v668 = vunpack.c.l.b16 %v578
      %v669 = vunpack.c.l.b16 %v579
      %v670 = vunpack.c.l.b16 %v580
      %v671 = vpack.c.b16 %v640, %v639
      %v672 = vpack.c.b16 %v642, %v641
      %v673 = vpack.c.b16 %v644, %v643
      %v674 = vpack.c.b16 %v646, %v645
      %v675 = vpack.c.b16 %v648, %v647
      %v676 = vpack.c.b16 %v650, %v649
      %v677 = vpack.c.b16 %v652, %v651
      %v678 = vpack.c.b16 %v654, %v653
      %v679 = vpack.c.b16 %v656, %v655
      %v680 = vpack.c.b16 %v658, %v657
      %v681 = vpack.c.b16 %v660, %v659
      %v682 = vpack.c.b16 %v662, %v661
      %v683 = vpack.c.b16 %v664, %v663
      %v684 = vpack.c.b16 %v666, %v665
      %v685 = vpack.c.b16 %v668, %v667
      %v686 = vpack.c.b16 %v670, %v669
      %703 = vmatprep.subr.bf16.mxu0 0
      %704 = vmatpush1.bf16.msra.mxu0 %v671
      %705 = vmatprep.subr.bf16.mxu0 0
      %706 = vmatpush1.bf16.msra.mxu0 %v672
      %707 = vmatprep.subr.bf16.mxu0 0
      %708 = vmatpush1.bf16.msra.mxu0 %v673
      %709 = vmatprep.subr.bf16.mxu0 0
      %710 = vmatpush1.bf16.msra.mxu0 %v674
      %711 = vmatprep.subr.bf16.mxu0 0
      %712 = vmatpush1.bf16.msra.mxu0 %v675
      %713 = vmatprep.subr.bf16.mxu0 0
      %714 = vmatpush1.bf16.msra.mxu0 %v676
      %715 = vmatprep.subr.bf16.mxu0 0
      %716 = vmatpush1.bf16.msra.mxu0 %v677
      %717 = vmatprep.subr.bf16.mxu0 0
      %718 = vmatpush1.bf16.msra.mxu0 %v678
      %719 = vmatprep.subr.bf16.mxu0 0
      %720 = vmatpush1.bf16.msra.mxu0 %v679
      %721 = vmatprep.subr.bf16.mxu0 0
      %722 = vmatpush1.bf16.msra.mxu0 %v680
      %723 = vmatprep.subr.bf16.mxu0 0
      %724 = vmatpush1.bf16.msra.mxu0 %v681
      %725 = vmatprep.subr.bf16.mxu0 0
      %726 = vmatpush1.bf16.msra.mxu0 %v682
      %727 = vmatprep.subr.bf16.mxu0 0
      %728 = vmatpush1.bf16.msra.mxu0 %v683
      %729 = vmatprep.subr.bf16.mxu0 0
      %730 = vmatpush1.bf16.msra.mxu0 %v684
      %731 = vmatprep.subr.bf16.mxu0 0
      %732 = vmatpush1.bf16.msra.mxu0 %v685
      %733 = vmatprep.subr.bf16.mxu0 0
      %734 = vmatpush1.bf16.msra.mxu0 %v686
      %735 = vmatprep.mubr.bf16.mxu0 %v604
      %736 = vmatmul.mubr.bf16.gmra.mrb[0].mxu0 %v596
      %v737 = vpop.f32.mrb[0].mxu0
      %v738 = vadd.f32 0.0, %v737
      %v739 = vpop.f32.mrb[0].mxu0
      %v740 = vpop.f32.mrb[0].mxu0
      %v741 = vpop.f32.mrb[0].mxu0
      %742 = vdwg.mxu0
      %v743 = vadd.f32 %v541, %v738
      %v744 = vld [vmem:[%s168] sm:$0xcc]
      %s745 = scalar_lea.vmem %s1, 384
      %v746 = vld [vmem:[%s745] sm:$0xf]
      %v747 = vld [vmem:[%s745 + $0x4] sm:$0xf]
      %v748 = vld [vmem:[%s745 + $0x8] sm:$0xf]
      %v749 = vld [vmem:[%s745 + $0xc] sm:$0xf]
      %v750 = vld [vmem:[%s745 + $0x10] sm:$0xf]
      %v751 = vld [vmem:[%s745 + $0x14] sm:$0xf]
      %v752 = vld [vmem:[%s745 + $0x18] sm:$0xf]
      %v753 = vld [vmem:[%s745 + $0x1c] sm:$0xf]
      %v754 = vld [vmem:[%s745 + $0x20] sm:$0xf]
      %v755 = vld [vmem:[%s745 + $0x24] sm:$0xf]
      %v756 = vld [vmem:[%s745 + $0x28] sm:$0xf]
      %v757 = vld [vmem:[%s745 + $0x2c] sm:$0xf]
      %v758 = vld [vmem:[%s745 + $0x30] sm:$0xf]
      %v759 = vld [vmem:[%s745 + $0x34] sm:$0xf]
      %v760 = vld [vmem:[%s745 + $0x38] sm:$0xf]
      %v761 = vld [vmem:[%s745 + $0x3c] sm:$0xf]
      %v762 = vld [vmem:[%s745 + $0x40] sm:$0xf]
      %v763 = vld [vmem:[%s745 + $0x44] sm:$0xf]
      %v764 = vld [vmem:[%s745 + $0x48] sm:$0xf]
      %v765 = vld [vmem:[%s745 + $0x4c] sm:$0xf]
      %v766 = vld [vmem:[%s745 + $0x50] sm:$0xf]
      %v767 = vld [vmem:[%s745 + $0x54] sm:$0xf]
      %v768 = vld [vmem:[%s745 + $0x58] sm:$0xf]
      %v769 = vld [vmem:[%s745 + $0x5c] sm:$0xf]
      %v770 = vld [vmem:[%s745 + $0x60] sm:$0xf]
      %v771 = vld [vmem:[%s745 + $0x64] sm:$0xf]
      %v772 = vld [vmem:[%s745 + $0x68] sm:$0xf]
      %v773 = vld [vmem:[%s745 + $0x6c] sm:$0xf]
      %v774 = vld [vmem:[%s745 + $0x70] sm:$0xf]
      %v775 = vld [vmem:[%s745 + $0x74] sm:$0xf]
      %v776 = vld [vmem:[%s745 + $0x78] sm:$0xf]
      %v777 = vld [vmem:[%s745 + $0x7c] sm:$0xf]
      %v779 = vunpack.c.l.b16 %v744
      %v780 = vunpack.c.h.b16 %v744
      %v781 = vpack.c.b16 %v585, %v779
      %v782 = vpack.c.b16 %v586, %v780
      %v783 = vrot.slane %v781, 2
      %v784 = vrot.slane %v782, 2
      %v819 = vunpack.c.l.b16 %v746
      %v820 = vunpack.c.l.b16 %v747
      %v821 = vunpack.c.l.b16 %v748
      %v822 = vunpack.c.l.b16 %v749
      %v823 = vunpack.c.l.b16 %v750
      %v824 = vunpack.c.l.b16 %v751
      %v825 = vunpack.c.l.b16 %v752
      %v826 = vunpack.c.l.b16 %v753
      %v827 = vunpack.c.l.b16 %v754
      %v828 = vunpack.c.l.b16 %v755
      %v829 = vunpack.c.l.b16 %v756
      %v830 = vunpack.c.l.b16 %v757
      %v831 = vunpack.c.l.b16 %v758
      %v832 = vunpack.c.l.b16 %v759
      %v833 = vunpack.c.l.b16 %v760
      %v834 = vunpack.c.l.b16 %v761
      %v835 = vunpack.c.l.b16 %v762
      %v836 = vunpack.c.l.b16 %v763
      %v837 = vunpack.c.l.b16 %v764
      %v838 = vunpack.c.l.b16 %v765
      %v839 = vunpack.c.l.b16 %v766
      %v840 = vunpack.c.l.b16 %v767
      %v841 = vunpack.c.l.b16 %v768
      %v842 = vunpack.c.l.b16 %v769
      %v843 = vunpack.c.l.b16 %v770
      %v844 = vunpack.c.l.b16 %v771
      %v845 = vunpack.c.l.b16 %v772
      %v846 = vunpack.c.l.b16 %v773
      %v847 = vunpack.c.l.b16 %v774
      %v848 = vunpack.c.l.b16 %v775
      %v849 = vunpack.c.l.b16 %v776
      %v850 = vunpack.c.l.b16 %v777
      %v851 = vpack.c.b16 %v820, %v819
      %v852 = vpack.c.b16 %v822, %v821
      %v853 = vpack.c.b16 %v824, %v823
      %v854 = vpack.c.b16 %v826, %v825
      %v855 = vpack.c.b16 %v828, %v827
      %v856 = vpack.c.b16 %v830, %v829
      %v857 = vpack.c.b16 %v832, %v831
      %v858 = vpack.c.b16 %v834, %v833
      %v859 = vpack.c.b16 %v836, %v835
      %v860 = vpack.c.b16 %v838, %v837
      %v861 = vpack.c.b16 %v840, %v839
      %v862 = vpack.c.b16 %v842, %v841
      %v863 = vpack.c.b16 %v844, %v843
      %v864 = vpack.c.b16 %v846, %v845
      %v865 = vpack.c.b16 %v848, %v847
      %v866 = vpack.c.b16 %v850, %v849
      %883 = vmatprep.subr.bf16.mxu0 0
      %884 = vmatpush1.bf16.msra.mxu0 %v851
      %885 = vmatprep.subr.bf16.mxu0 0
      %886 = vmatpush1.bf16.msra.mxu0 %v852
      %887 = vmatprep.subr.bf16.mxu0 0
      %888 = vmatpush1.bf16.msra.mxu0 %v853
      %889 = vmatprep.subr.bf16.mxu0 0
      %890 = vmatpush1.bf16.msra.mxu0 %v854
      %891 = vmatprep.subr.bf16.mxu0 0
      %892 = vmatpush1.bf16.msra.mxu0 %v855
      %893 = vmatprep.subr.bf16.mxu0 0
      %894 = vmatpush1.bf16.msra.mxu0 %v856
      %895 = vmatprep.subr.bf16.mxu0 0
      %896 = vmatpush1.bf16.msra.mxu0 %v857
      %897 = vmatprep.subr.bf16.mxu0 0
      %898 = vmatpush1.bf16.msra.mxu0 %v858
      %899 = vmatprep.subr.bf16.mxu0 0
      %900 = vmatpush1.bf16.msra.mxu0 %v859
      %901 = vmatprep.subr.bf16.mxu0 0
      %902 = vmatpush1.bf16.msra.mxu0 %v860
      %903 = vmatprep.subr.bf16.mxu0 0
      %904 = vmatpush1.bf16.msra.mxu0 %v861
      %905 = vmatprep.subr.bf16.mxu0 0
      %906 = vmatpush1.bf16.msra.mxu0 %v862
      %907 = vmatprep.subr.bf16.mxu0 0
      %908 = vmatpush1.bf16.msra.mxu0 %v863
      %909 = vmatprep.subr.bf16.mxu0 0
      %910 = vmatpush1.bf16.msra.mxu0 %v864
      %911 = vmatprep.subr.bf16.mxu0 0
      %912 = vmatpush1.bf16.msra.mxu0 %v865
      %913 = vmatprep.subr.bf16.mxu0 0
      %914 = vmatpush1.bf16.msra.mxu0 %v866
      %915 = vmatprep.mubr.bf16.mxu0 %v784
      %916 = vmatmul.mubr.bf16.gmra.mrb[0].mxu0 %v783
      %v917 = vpop.f32.mrb[0].mxu0
      %v918 = vadd.f32 0.0, %v917
      %v919 = vpop.f32.mrb[0].mxu0
      %v920 = vpop.f32.mrb[0].mxu0
      %v921 = vpop.f32.mrb[0].mxu0
      %922 = vdwg.mxu0
      %v923 = vadd.f32 %v743, %v918
      %v924 = vld [vmem:[%s2] sm:$0x1]
      %v926 = vlaneseq
      %v927 = vshrl.u32 %v926, 7
      %v928 = vsub.s32 0, %v927
      %v929 = vrot.slane %v924, %v928
      %v931 = vadd.f32 %v923, %v929
      %vm932 = vcmp.ge.f32.partialorder %v931, 0.0
      %v933 = vmul.f32 %v931, 0.2
      %v934 = vsel %vm932, %v931, %v933
      %v935 = vpack.c.bf16 %v934, %v934
      %936 = vst [vmem:[%s173] sm:$0xf] %v935
      %p937 = scmp.lt.s32.totalorder %s14, 1
      %s938 = scalar_select %p937, %s14, 1
      %s939 = smul.addr %s938, 4
      %s940 = scalar_lea.vmem %s3, %s939
      // Predicated region
      $region33: #{latent_discriminator_forward.8} parent=31 // pred_check
        %p941 = pneg %p100
      $region34: #{latent_discriminator_forward.8} parent=31 // pred_check_branch
        %943 = sbr.rel (%p941) target = $region36
      $region35: #{latent_discriminator_forward.8} parent=31 // pred_region
        _
      $region36: #{latent_discriminator_forward.8} parent=31 // pred_fallthru
        _
    $region32: #{latent_discriminator_forward.8} parent=5 // pred_fallthru
      _
    %p944 = scmp.le.s32.totalorder 2, %s9
    // Predicated region
    $region37: #{latent_discriminator_forward.8} parent=5 // pred_check
      %p945 = pneg %p944
    $region38: #{latent_discriminator_forward.8} parent=5 // pred_check_branch
      %947 = sbr.rel (%p945) target = $region40
    $region39: #{latent_discriminator_forward.8} parent=5 // pred_region
      %s948 = ssub.s32 %s9, 2
      // Predicated region
      $region41: #{latent_discriminator_forward.8} parent=39 // pred_check
        %p949 = pneg %p106
      $region42: #{latent_discriminator_forward.8} parent=39 // pred_check_branch
        %951 = sbr.rel (%p949) target = $region44
      $region43: #{latent_discriminator_forward.8} parent=39 // pred_region
        %p952 = scmp.lt.s32.totalorder %s15, 1
        %s953 = scalar_select %p952, %s15, 1
        %s954 = smul.addr %s953, 4
        %s955 = scalar_lea.vmem %s3, %s954
      $region44: #{latent_discriminator_forward.8} parent=39 // pred_fallthru
        _
    $region40: #{latent_discriminator_forward.8} parent=5 // pred_fallthru
      _
  $region6: #{latent_discriminator_forward.8} parent=0 // loop_footer
    %s13 = sadd.s32 1, %s9
  $region7: #{latent_discriminator_forward.8} parent=0 // loop_footer_branch
    %8 = sbr.rel target = $region3
  $region8: #{latent_discriminator_forward.8} parent=0 // loop_exit
    _

// kernel: latent_discriminator_forward.9
$region0: #{latent_discriminator_forward.9}
  #allocation0 [shape = 'u32[]', space=smem, size = 0x4, offset = 0x4, fixed_abs, tag = 'smem constant byte address 0x4 - core index']
  #allocation1 [shape = 'u32[144,128]{1,0:T(1,128)}', space=vmem, size = 0x12000, scoped, tag = 'internal scratch']
  %s0 = inlined_call_operand.vmem [shape: bf16[32,512], index: 0, kind: input, shape index: {}]
  %s1 = inlined_call_operand.vmem [shape: bf16[4,512,128], index: 1, kind: input, shape index: {}]
  %s2 = inlined_call_operand.vmem [shape: f32[1,128], index: 2, kind: input, shape index: {}]
  %s3 = inlined_call_operand.vmem [shape: bf16[2,8,128], index: 3, kind: output, shape index: {}]
  %s4 = sld [smem:[#allocation0]]
  $region45: #{latent_discriminator_forward.9} parent=0
    _
  %s6 = ssub.s32 1, %s4
  %s7 = scalar_select 0, %s6, %s4
  loop: start=0, step=1, limit=4
  $region2: #{latent_discriminator_forward.9} parent=0 // loop_pre_header
    _
  $region3: #{latent_discriminator_forward.9} parent=0 // loop_header
    %s9 = sphi 0, %s13
    %p10 = scmp.ge.s32.totalorder %s9, 4
    %s19 = sphi 0, %s21
    %s22 = sphi 0, %s19
    %s23 = sphi 0, %s22
    %s39 = sphi 0, %s23
    %s43 = sphi 0, %s43
    %s45 = sphi 0, %s43
    %s46 = sphi 0, %s45
    %s60 = sphi 0, %s46
    %s64 = sphi 0, %s64
    %s66 = sphi 0, %s64
    %s67 = sphi 0, %s66
    %s81 = sphi 0, %s67
    %s87 = sphi 0, %s89
    %s90 = sphi 0, %s87
    %s91 = sphi 0, %s90
    %s107 = sphi 0, %s91
  $region4: #{latent_discriminator_forward.9} parent=0 // loop_header_branch
    %12 = sbr.rel (%p10) target = $region8
  $region5: #{latent_discriminator_forward.9} parent=0 // loop_body
    %s14 = ssub.s32 %s9, 1
    %s15 = ssub.s32 %s9, 2
    %s16 = sadd.s32 %s9, 1
    %s17 = ssub.s32 %s9, %s16
    %p18 = scmp.eq.s32.totalorder %s17, 0
    %s20 = sadd.s32 %s19, 1
    %s21 = scalar_select %p18, %s19, %s20
    %p24 = pneg %p18
    %p25 = scmp.eq.s32.totalorder %s9, 1
    %p26 = por %p24, %p25
    %p27 = scmp.ne.s32.totalorder %s19, %s22
    %p28 = scmp.eq.s32.totalorder %s9, 0
    %p29 = por %p27, %p28
    %p30 = scmp.ne.s32.totalorder %s19, %s22
    %p31 = scmp.eq.s32.totalorder %s14, 1
    %p32 = por %p30, %p31
    %p33 = scmp.ne.s32.totalorder %s22, %s23
    %p34 = scmp.eq.s32.totalorder %s14, 0
    %p35 = por %p33, %p34
    %p36 = scmp.ne.s32.totalorder %s22, %s23
    %p37 = scmp.eq.s32.totalorder %s15, 1
    %p38 = por %p36, %p37
    %p40 = scmp.ne.s32.totalorder %s23, %s39
    %p41 = scmp.eq.s32.totalorder %s15, 0
    %p42 = por %p40, %p41
    %s44 = sadd.s32 %s43, 1
    %p47 = scmp.eq.s32.totalorder %s9, 1
    %p48 = scmp.ne.s32.totalorder %s43, %s45
    %p49 = scmp.eq.s32.totalorder %s9, 0
    %p50 = por %p48, %p49
    %p51 = scmp.ne.s32.totalorder %s43, %s45
    %p52 = scmp.eq.s32.totalorder %s14, 1
    %p53 = por %p51, %p52
    %p54 = scmp.ne.s32.totalorder %s45, %s46
    %p55 = scmp.eq.s32.totalorder %s14, 0
    %p56 = por %p54, %p55
    %p57 = scmp.ne.s32.totalorder %s45, %s46
    %p58 = scmp.eq.s32.totalorder %s15, 1
    %p59 = por %p57, %p58
    %p61 = scmp.ne.s32.totalorder %s46, %s60
    %p62 = scmp.eq.s32.totalorder %s15, 0
    %p63 = por %p61, %p62
    %s65 = sadd.s32 %s64, 1
    %p68 = scmp.eq.s32.totalorder %s9, 1
    %p69 = scmp.ne.s32.totalorder %s64, %s66
    %p70 = scmp.eq.s32.totalorder %s9, 0
    %p71 = por %p69, %p70
    %p72 = scmp.ne.s32.totalorder %s64, %s66
    %p73 = scmp.eq.s32.totalorder %s14, 1
    %p74 = por %p72, %p73
    %p75 = scmp.ne.s32.totalorder %s66, %s67
    %p76 = scmp.eq.s32.totalorder %s14, 0
    %p77 = por %p75, %p76
    %p78 = scmp.ne.s32.totalorder %s66, %s67
    %p79 = scmp.eq.s32.totalorder %s15, 1
    %p80 = por %p78, %p79
    %p82 = scmp.ne.s32.totalorder %s67, %s81
    %p83 = scmp.eq.s32.totalorder %s15, 0
    %p84 = por %p82, %p83
    %s85 = ssub.s32 %s9, %s16
    %p86 = scmp.eq.s32.totalorder %s85, 0
    %s88 = sadd.s32 %s87, 1
    %s89 = scalar_select %p86, %s87, %s88
    %p92 = pneg %p86
    %p93 = scmp.eq.s32.totalorder %s9, 1
    %p94 = por %p92, %p93
    %p95 = scmp.ne.s32.totalorder %s87, %s90
    %p96 = scmp.eq.s32.totalorder %s9, 0
    %p97 = por %p95, %p96
    %p98 = scmp.ne.s32.totalorder %s87, %s90
    %p99 = scmp.eq.s32.totalorder %s14, 1
    %p100 = por %p98, %p99
    %p101 = scmp.ne.s32.totalorder %s90, %s91
    %p102 = scmp.eq.s32.totalorder %s14, 0
    %p103 = por %p101, %p102
    %p104 = scmp.ne.s32.totalorder %s90, %s91
    %p105 = scmp.eq.s32.totalorder %s15, 1
    %p106 = por %p104, %p105
    %p108 = scmp.ne.s32.totalorder %s91, %s107
    %p109 = scmp.eq.s32.totalorder %s15, 0
    %p110 = por %p108, %p109
    %p111 = scmp.le.s32.totalorder 1, %s9
    %p112 = scmp.lt.s32.totalorder %s9, 3
    %p113 = pnand %p111, %p112
    %p114 = pneg %p113
    // Predicated region
    $region9: #{latent_discriminator_forward.9} parent=5 // pred_check
      _
    $region10: #{latent_discriminator_forward.9} parent=5 // pred_check_branch
      %116 = sbr.rel (%p113) target = $region12
    $region11: #{latent_discriminator_forward.9} parent=5 // pred_region
      %s117 = ssub.s32 %s9, 1
      // Predicated region
      $region13: #{latent_discriminator_forward.9} parent=11 // pred_check
        %p118 = pneg %p56
      $region14: #{latent_discriminator_forward.9} parent=11 // pred_check_branch
        %120 = sbr.rel (%p118) target = $region16
      $region15: #{latent_discriminator_forward.9} parent=11 // pred_region
        _
      $region16: #{latent_discriminator_forward.9} parent=11 // pred_fallthru
        _
      // Predicated region
      $region17: #{latent_discriminator_forward.9} parent=11 // pred_check
        %p121 = pneg %p77
      $region18: #{latent_discriminator_forward.9} parent=11 // pred_check_branch
        %123 = sbr.rel (%p121) target = $region20
      $region19: #{latent_discriminator_forward.9} parent=11 // pred_region
        _
      $region20: #{latent_discriminator_forward.9} parent=11 // pred_fallthru
        _
    $region12: #{latent_discriminator_forward.9} parent=5 // pred_fallthru
      _
    %p124 = scmp.lt.s32.totalorder %s9, 2
    // Predicated region
    $region21: #{latent_discriminator_forward.9} parent=5 // pred_check
      %p125 = pneg %p124
    $region22: #{latent_discriminator_forward.9} parent=5 // pred_check_branch
      %127 = sbr.rel (%p125) target = $region24
    $region23: #{latent_discriminator_forward.9} parent=5 // pred_region
      // Predicated region
      $region25: #{latent_discriminator_forward.9} parent=23 // pred_check
        %p128 = pneg %p29
      $region26: #{latent_discriminator_forward.9} parent=23 // pred_check_branch
        %130 = sbr.rel (%p128) target = $region28
      $region27: #{latent_discriminator_forward.9} parent=23 // pred_region
        %s131 = smul.u32 2, %s9
        %p132 = scmp.lt.s32.totalorder %s131, 3
        %s133 = scalar_select %p132, %s131, 3
        %s134 = smul.addr %s133, 4
        %s135 = smul.addr %s134, 4
        %s136 = scalar_lea.vmem %s0, %s135
        %s137 = smul.u32 2, %s9
      $region28: #{latent_discriminator_forward.9} parent=23 // pred_fallthru
        _
    $region24: #{latent_discriminator_forward.9} parent=5 // pred_fallthru
      _
    %p138 = scmp.le.s32.totalorder 1, %s9
    %p139 = scmp.lt.s32.totalorder %s9, 3
    %p140 = pnand %p138, %p139
    %p141 = pneg %p140
    // Predicated region
    $region29: #{latent_discriminator_forward.9} parent=5 // pred_check
      _
    $region30: #{latent_discriminator_forward.9} parent=5 // pred_check_branch
      %143 = sbr.rel (%p140) target = $region32
    $region31: #{latent_discriminator_forward.9} parent=5 // pred_region
      %s144 = ssub.s32 %s9, 1
      %s145 = smul.u32 2, %s14
      %p146 = scmp.lt.s32.totalorder %s145, 3
      %s147 = scalar_select %p146, %s145, 3
      %s148 = smul.addr %s147, 4
      %s149 = smul.addr %s148, 4
      %s150 = scalar_lea.vmem %s0, %s149
      %p151 = pneg %p35
      %p152 = pneg %p32
      %p153 = pneg %p56
      %p154 = pneg %p53
      %p155 = pneg %p77
      %p156 = pneg %p74
      %p157 = pneg %p103
      %p158 = pneg %p100
      %p159 = scmp.lt.s32.totalorder %s14, 1
      %s160 = scalar_select %p159, %s14, 1
      %s161 = smul.addr %s160, 4
      %s162 = scalar_lea.vmem %s3, %s161
      %s163 = smul.u32 2, %s14
      %p164 = scmp.lt.s32.totalorder %s163, 3
      %s165 = scalar_select %p164, %s163, 3
      %s166 = smul.addr %s165, 4
      %s167 = smul.addr %s166, 4
      %s168 = scalar_lea.vmem %s0, %s167
      %s169 = smul.u32 2, %s14
      %p170 = scmp.lt.s32.totalorder %s14, 1
      %s171 = scalar_select %p170, %s14, 1
      %s172 = smul.addr %s171, 4
      %s173 = scalar_lea.vmem %s3, %s172
      %v175 = vld [vmem:[%s168] sm:$0xff]
      %v176 = vld [vmem:[%s168 + $0x8] sm:$0xff]
      %v177 = vld [vmem:[%s1] sm:$0xf]
      %v178 = vld [vmem:[%s1 + $0x4] sm:$0xf]
      %v179 = vld [vmem:[%s1 + $0x8] sm:$0xf]
      %v180 = vld [vmem:[%s1 + $0xc] sm:$0xf]
      %v181 = vld [vmem:[%s1 + $0x10] sm:$0xf]
      %v182 = vld [vmem:[%s1 + $0x14] sm:$0xf]
      %v183 = vld [vmem:[%s1 + $0x18] sm:$0xf]
      %v184 = vld [vmem:[%s1 + $0x1c] sm:$0xf]
      %v185 = vld [vmem:[%s1 + $0x20] sm:$0xf]
      %v186 = vld [vmem:[%s1 + $0x24] sm:$0xf]
      %v187 = vld [vmem:[%s1 + $0x28] sm:$0xf]
      %v188 = vld [vmem:[%s1 + $0x2c] sm:$0xf]
      %v189 = vld [vmem:[%s1 + $0x30] sm:$0xf]
      %v190 = vld [vmem:[%s1 + $0x34] sm:$0xf]
      %v191 = vld [vmem:[%s1 + $0x38] sm:$0xf]
      %v192 = vld [vmem:[%s1 + $0x3c] sm:$0xf]
      %v193 = vld [vmem:[%s1 + $0x40] sm:$0xf]
      %v194 = vld [vmem:[%s1 + $0x44] sm:$0xf]
      %v195 = vld [vmem:[%s1 + $0x48] sm:$0xf]
      %v196 = vld [vmem:[%s1 + $0x4c] sm:$0xf]
      %v197 = vld [vmem:[%s1 + $0x50] sm:$0xf]
      %v198 = vld [vmem:[%s1 + $0x54] sm:$0xf]
      %v199 = vld [vmem:[%s1 + $0x58] sm:$0xf]
      %v200 = vld [vmem:[%s1 + $0x5c] sm:$0xf]
      %v201 = vld [vmem:[%s1 + $0x60] sm:$0xf]
      %v202 = vld [vmem:[%s1 + $0x64] sm:$0xf]
      %v203 = vld [vmem:[%s1 + $0x68] sm:$0xf]
      %v204 = vld [vmem:[%s1 + $0x6c] sm:$0xf]
      %v205 = vld [vmem:[%s1 + $0x70] sm:$0xf]
      %v206 = vld [vmem:[%s1 + $0x74] sm:$0xf]
      %v207 = vld [vmem:[%s1 + $0x78] sm:$0xf]
      %v208 = vld [vmem:[%s1 + $0x7c] sm:$0xf]
      %v209 = vld [vmem:[%s1 + $0x80] sm:$0xf]
      %v210 = vld [vmem:[%s1 + $0x84] sm:$0xf]
      %v211 = vld [vmem:[%s1 + $0x88] sm:$0xf]
      %v212 = vld [vmem:[%s1 + $0x8c] sm:$0xf]
      %v213 = vld [vmem:[%s1 + $0x90] sm:$0xf]
      %v214 = vld [vmem:[%s1 + $0x94] sm:$0xf]
      %v215 = vld [vmem:[%s1 + $0x98] sm:$0xf]
      %v216 = vld [vmem:[%s1 + $0x9c] sm:$0xf]
      %v217 = vld [vmem:[%s1 + $0xa0] sm:$0xf]
      %v218 = vld [vmem:[%s1 + $0xa4] sm:$0xf]
      %v219 = vld [vmem:[%s1 + $0xa8] sm:$0xf]
      %v220 = vld [vmem:[%s1 + $0xac] sm:$0xf]
      %v221 = vld [vmem:[%s1 + $0xb0] sm:$0xf]
      %v222 = vld [vmem:[%s1 + $0xb4] sm:$0xf]
      %v223 = vld [vmem:[%s1 + $0xb8] sm:$0xf]
      %v224 = vld [vmem:[%s1 + $0xbc] sm:$0xf]
      %v225 = vld [vmem:[%s1 + $0xc0] sm:$0xf]
      %v226 = vld [vmem:[%s1 + $0xc4] sm:$0xf]
      %v227 = vld [vmem:[%s1 + $0xc8] sm:$0xf]
      %v228 = vld [vmem:[%s1 + $0xcc] sm:$0xf]
      %v229 = vld [vmem:[%s1 + $0xd0] sm:$0xf]
      %v230 = vld [vmem:[%s1 + $0xd4] sm:$0xf]
      %v231 = vld [vmem:[%s1 + $0xd8] sm:$0xf]
      %v232 = vld [vmem:[%s1 + $0xdc] sm:$0xf]
      %v233 = vld [vmem:[%s1 + $0xe0] sm:$0xf]
      %v234 = vld [vmem:[%s1 + $0xe4] sm:$0xf]
      %v235 = vld [vmem:[%s1 + $0xe8] sm:$0xf]
      %v236 = vld [vmem:[%s1 + $0xec] sm:$0xf]
      %v237 = vld [vmem:[%s1 + $0xf0] sm:$0xf]
      %v238 = vld [vmem:[%s1 + $0xf4] sm:$0xf]
      %v239 = vld [vmem:[%s1 + $0xf8] sm:$0xf]
      %v240 = vld [vmem:[%s1 + $0xfc] sm:$0xf]
      %v241 = vld [vmem:[%s168] sm:$0xff]
      %v242 = vld [vmem:[%s168 + $0x8] sm:$0xff]
      %v243 = vld [vmem:[%s168 + $0x10] sm:$0x11]
      %v244 = vld [vmem:[%s168 + $0x18] sm:$0x11]
      %s245 = scalar_lea.vmem %s1, 256
      %v246 = vld [vmem:[%s245] sm:$0xf]
      %v247 = vld [vmem:[%s245 + $0x4] sm:$0xf]
      %v248 = vld [vmem:[%s245 + $0x8] sm:$0xf]
      %v249 = vld [vmem:[%s245 + $0xc] sm:$0xf]
      %v250 = vld [vmem:[%s245 + $0x10] sm:$0xf]
      %v251 = vld [vmem:[%s245 + $0x14] sm:$0xf]
      %v252 = vld [vmem:[%s245 + $0x18] sm:$0xf]
      %v253 = vld [vmem:[%s245 + $0x1c] sm:$0xf]
      %v254 = vld [vmem:[%s245 + $0x20] sm:$0xf]
      %v255 = vld [vmem:[%s245 + $0x24] sm:$0xf]
      %v256 = vld [vmem:[%s245 + $0x28] sm:$0xf]
      %v257 = vld [vmem:[%s245 + $0x2c] sm:$0xf]
      %v258 = vld [vmem:[%s245 + $0x30] sm:$0xf]
      %v259 = vld [vmem:[%s245 + $0x34] sm:$0xf]
      %v260 = vld [vmem:[%s245 + $0x38] sm:$0xf]
      %v261 = vld [vmem:[%s245 + $0x3c] sm:$0xf]
      %v262 = vld [vmem:[%s245 + $0x40] sm:$0xf]
      %v263 = vld [vmem:[%s245 + $0x44] sm:$0xf]
      %v264 = vld [vmem:[%s245 + $0x48] sm:$0xf]
      %v265 = vld [vmem:[%s245 + $0x4c] sm:$0xf]
      %v266 = vld [vmem:[%s245 + $0x50] sm:$0xf]
      %v267 = vld [vmem:[%s245 + $0x54] sm:$0xf]
      %v268 = vld [vmem:[%s245 + $0x58] sm:$0xf]
      %v269 = vld [vmem:[%s245 + $0x5c] sm:$0xf]
      %v270 = vld [vmem:[%s245 + $0x60] sm:$0xf]
      %v271 = vld [vmem:[%s245 + $0x64] sm:$0xf]
      %v272 = vld [vmem:[%s245 + $0x68] sm:$0xf]
      %v273 = vld [vmem:[%s245 + $0x6c] sm:$0xf]
      %v274 = vld [vmem:[%s245 + $0x70] sm:$0xf]
      %v275 = vld [vmem:[%s245 + $0x74] sm:$0xf]
      %v276 = vld [vmem:[%s245 + $0x78] sm:$0xf]
      %v277 = vld [vmem:[%s245 + $0x7c] sm:$0xf]
      %v278 = vld [vmem:[%s245 + $0x80] sm:$0xf]
      %v279 = vld [vmem:[%s245 + $0x84] sm:$0xf]
      %v280 = vld [vmem:[%s245 + $0x88] sm:$0xf]
      %v281 = vld [vmem:[%s245 + $0x8c] sm:$0xf]
      %v282 = vld [vmem:[%s245 + $0x90] sm:$0xf]
      %v283 = vld [vmem:[%s245 + $0x94] sm:$0xf]
      %v284 = vld [vmem:[%s245 + $0x98] sm:$0xf]
      %v285 = vld [vmem:[%s245 + $0x9c] sm:$0xf]
      %v286 = vld [vmem:[%s245 + $0xa0] sm:$0xf]
      %v287 = vld [vmem:[%s245 + $0xa4] sm:$0xf]
      %v288 = vld [vmem:[%s245 + $0xa8] sm:$0xf]
      %v289 = vld [vmem:[%s245 + $0xac] sm:$0xf]
      %v290 = vld [vmem:[%s245 + $0xb0] sm:$0xf]
      %v291 = vld [vmem:[%s245 + $0xb4] sm:$0xf]
      %v292 = vld [vmem:[%s245 + $0xb8] sm:$0xf]
      %v293 = vld [vmem:[%s245 + $0xbc] sm:$0xf]
      %v294 = vld [vmem:[%s245 + $0xc0] sm:$0xf]
      %v295 = vld [vmem:[%s245 + $0xc4] sm:$0xf]
      %v296 = vld [vmem:[%s245 + $0xc8] sm:$0xf]
      %v297 = vld [vmem:[%s245 + $0xcc] sm:$0xf]
      %v298 = vld [vmem:[%s245 + $0xd0] sm:$0xf]
      %v299 = vld [vmem:[%s245 + $0xd4] sm:$0xf]
      %v300 = vld [vmem:[%s245 + $0xd8] sm:$0xf]
      %v301 = vld [vmem:[%s245 + $0xdc] sm:$0xf]
      %v302 = vld [vmem:[%s245 + $0xe0] sm:$0xf]
      %v303 = vld [vmem:[%s245 + $0xe4] sm:$0xf]
      %v304 = vld [vmem:[%s245 + $0xe8] sm:$0xf]
      %v305 = vld [vmem:[%s245 + $0xec] sm:$0xf]
      %v306 = vld [vmem:[%s245 + $0xf0] sm:$0xf]
      %v307 = vld [vmem:[%s245 + $0xf4] sm:$0xf]
      %v308 = vld [vmem:[%s245 + $0xf8] sm:$0xf]
      %v309 = vld [vmem:[%s245 + $0xfc] sm:$0xf]
      %v314 = vunpack.c.l.b16 %v241
      %v315 = vunpack.c.h.b16 %v241
      %v316 = vunpack.c.l.b16 %v242
      %v317 = vunpack.c.h.b16 %v242
      %v318 = vunpack.c.l.b16 %v243
      %v319 = vunpack.c.h.b16 %v243
      %v320 = vunpack.c.l.b16 %v244
      %v321 = vunpack.c.h.b16 %v244
      %v322 = vpack.c.b16 %v318, %v314
      %v323 = vpack.c.b16 %v319, %v315
      %v324 = vpack.c.b16 %v320, %v316
      %v325 = vpack.c.b16 %v321, %v317
      %v327 = vshrl.u32 %v322, 16
      %v329 = vshll.u32 %v322, 16
      %v331 = vrot.slane %v329, 1
      %v332 = vor.u32 %v327, %v331
      %v334 = vshrl.u32 %v323, 16
      %v336 = vshll.u32 %v323, 16
      %v338 = vrot.slane %v336, 1
      %v339 = vor.u32 %v334, %v338
      %v341 = vshrl.u32 %v324, 16
      %v343 = vshll.u32 %v324, 16
      %v345 = vrot.slane %v343, 1
      %v346 = vor.u32 %v341, %v345
      %v348 = vshrl.u32 %v325, 16
      %v350 = vshll.u32 %v325, 16
      %v352 = vrot.slane %v350, 1
      %v353 = vor.u32 %v348, %v352
      %v422 = vunpack.c.l.b16 %v246
      %v423 = vunpack.c.l.b16 %v247
      %v424 = vunpack.c.l.b16 %v248
      %v425 = vunpack.c.l.b16 %v249
      %v426 = vunpack.c.l.b16 %v250
      %v427 = vunpack.c.l.b16 %v251
      %v428 = vunpack.c.l.b16 %v252
      %v429 = vunpack.c.l.b16 %v253
      %v430 = vunpack.c.l.b16 %v254
      %v431 = vunpack.c.l.b16 %v255
      %v432 = vunpack.c.l.b16 %v256
      %v433 = vunpack.c.l.b16 %v257
      %v434 = vunpack.c.l.b16 %v258
      %v435 = vunpack.c.l.b16 %v259
      %v436 = vunpack.c.l.b16 %v260
      %v437 = vunpack.c.l.b16 %v261
      %v438 = vunpack.c.l.b16 %v262
      %v439 = vunpack.c.l.b16 %v263
      %v440 = vunpack.c.l.b16 %v264
      %v441 = vunpack.c.l.b16 %v265
      %v442 = vunpack.c.l.b16 %v266
      %v443 = vunpack.c.l.b16 %v267
      %v444 = vunpack.c.l.b16 %v268
      %v445 = vunpack.c.l.b16 %v269
      %v446 = vunpack.c.l.b16 %v270
      %v447 = vunpack.c.l.b16 %v271
      %v448 = vunpack.c.l.b16 %v272
      %v449 = vunpack.c.l.b16 %v273
      %v450 = vunpack.c.l.b16 %v274
      %v451 = vunpack.c.l.b16 %v275
      %v452 = vunpack.c.l.b16 %v276
      %v453 = vunpack.c.l.b16 %v277
      %v454 = vunpack.c.l.b16 %v278
      %v455 = vunpack.c.l.b16 %v279
      %v456 = vunpack.c.l.b16 %v280
      %v457 = vunpack.c.l.b16 %v281
      %v458 = vunpack.c.l.b16 %v282
      %v459 = vunpack.c.l.b16 %v283
      %v460 = vunpack.c.l.b16 %v284
      %v461 = vunpack.c.l.b16 %v285
      %v462 = vunpack.c.l.b16 %v286
      %v463 = vunpack.c.l.b16 %v287
      %v464 = vunpack.c.l.b16 %v288
      %v465 = vunpack.c.l.b16 %v289
      %v466 = vunpack.c.l.b16 %v290
      %v467 = vunpack.c.l.b16 %v291
      %v468 = vunpack.c.l.b16 %v292
      %v469 = vunpack.c.l.b16 %v293
      %v470 = vunpack.c.l.b16 %v294
      %v471 = vunpack.c.l.b16 %v295
      %v472 = vunpack.c.l.b16 %v296
      %v473 = vunpack.c.l.b16 %v297
      %v474 = vunpack.c.l.b16 %v298
      %v475 = vunpack.c.l.b16 %v299
      %v476 = vunpack.c.l.b16 %v300
      %v477 = vunpack.c.l.b16 %v301
      %v478 = vunpack.c.l.b16 %v302
      %v479 = vunpack.c.l.b16 %v303
      %v480 = vunpack.c.l.b16 %v304
      %v481 = vunpack.c.l.b16 %v305
      %v482 = vunpack.c.l.b16 %v306
      %v483 = vunpack.c.l.b16 %v307
      %v484 = vunpack.c.l.b16 %v308
      %v485 = vunpack.c.l.b16 %v309
      %v486 = vpack.c.b16 %v423, %v422
      %v487 = vpack.c.b16 %v425, %v424
      %v488 = vpack.c.b16 %v427, %v426
      %v489 = vpack.c.b16 %v429, %v428
      %v490 = vpack.c.b16 %v431, %v430
      %v491 = vpack.c.b16 %v433, %v432
      %v492 = vpack.c.b16 %v435, %v434
      %v493 = vpack.c.b16 %v437, %v436
      %v494 = vpack.c.b16 %v439, %v438
      %v495 = vpack.c.b16 %v441, %v440
      %v496 = vpack.c.b16 %v443, %v442
      %v497 = vpack.c.b16 %v445, %v444
      %v498 = vpack.c.b16 %v447, %v446
      %v499 = vpack.c.b16 %v449, %v448
      %v500 = vpack.c.b16 %v451, %v450
      %v501 = vpack.c.b16 %v453, %v452
      %v502 = vpack.c.b16 %v455, %v454
      %v503 = vpack.c.b16 %v457, %v456
      %v504 = vpack.c.b16 %v459, %v458
      %v505 = vpack.c.b16 %v461, %v460
      %v506 = vpack.c.b16 %v463, %v462
      %v507 = vpack.c.b16 %v465, %v464
      %v508 = vpack.c.b16 %v467, %v466
      %v509 = vpack.c.b16 %v469, %v468
      %v510 = vpack.c.b16 %v471, %v470
      %v511 = vpack.c.b16 %v473, %v472
      %v512 = vpack.c.b16 %v475, %v474
      %v513 = vpack.c.b16 %v477, %v476
      %v514 = vpack.c.b16 %v479, %v478
      %v515 = vpack.c.b16 %v481, %v480
      %v516 = vpack.c.b16 %v483, %v482
      %v517 = vpack.c.b16 %v485, %v484
      %550 = vmatprep.subr.bf16.mxu0 0
      %551 = vmatpush1.bf16.msra.mxu0 %v486
      %552 = vmatprep.subr.bf16.mxu0 0
      %553 = vmatpush1.bf16.msra.mxu0 %v487
      %554 = vmatprep.subr.bf16.mxu0 0
      %555 = vmatpush1.bf16.msra.mxu0 %v488
      %556 = vmatprep.subr.bf16.mxu0 0
      %557 = vmatpush1.bf16.msra.mxu0 %v489
      %558 = vmatprep.subr.bf16.mxu0 0
      %559 = vmatpush1.bf16.msra.mxu0 %v490
      %560 = vmatprep.subr.bf16.mxu0 0
      %561 = vmatpush1.bf16.msra.mxu0 %v491
      %562 = vmatprep.subr.bf16.mxu0 0
      %563 = vmatpush1.bf16.msra.mxu0 %v492
      %564 = vmatprep.subr.bf16.mxu0 0
      %565 = vmatpush1.bf16.msra.mxu0 %v493
      %566 = vmatprep.subr.bf16.mxu0 0
      %567 = vmatpush1.bf16.msra.mxu0 %v494
      %568 = vmatprep.subr.bf16.mxu0 0
      %569 = vmatpush1.bf16.msra.mxu0 %v495
      %570 = vmatprep.subr.bf16.mxu0 0
      %571 = vmatpush1.bf16.msra.mxu0 %v496
      %572 = vmatprep.subr.bf16.mxu0 0
      %573 = vmatpush1.bf16.msra.mxu0 %v497
      %574 = vmatprep.subr.bf16.mxu0 0
      %575 = vmatpush1.bf16.msra.mxu0 %v498
      %576 = vmatprep.subr.bf16.mxu0 0
      %577 = vmatpush1.bf16.msra.mxu0 %v499
      %578 = vmatprep.subr.bf16.mxu0 0
      %579 = vmatpush1.bf16.msra.mxu0 %v500
      %580 = vmatprep.subr.bf16.mxu0 0
      %581 = vmatpush1.bf16.msra.mxu0 %v501
      %582 = vmatprep.mubr.bf16.mxu0 %v339
      %583 = vmatmul.mubr.bf16.gmra.mrb[0].mxu0 %v332
      %v584 = vpop.f32.mrb[0].mxu0
      %v585 = vadd.f32 0.0, %v584
      %v586 = vpop.f32.mrb[0].mxu0
      %v587 = vpop.f32.mrb[0].mxu0
      %v588 = vpop.f32.mrb[0].mxu0
      %589 = vdwg.mxu0
      %590 = vmatprep.subr.bf16.mxu0 0
      %591 = vmatpush1.bf16.msra.mxu0 %v502
      %592 = vmatprep.subr.bf16.mxu0 0
      %593 = vmatpush1.bf16.msra.mxu0 %v503
      %594 = vmatprep.subr.bf16.mxu0 0
      %595 = vmatpush1.bf16.msra.mxu0 %v504
      %596 = vmatprep.subr.bf16.mxu0 0
      %597 = vmatpush1.bf16.msra.mxu0 %v505
      %598 = vmatprep.subr.bf16.mxu0 0
      %599 = vmatpush1.bf16.msra.mxu0 %v506
      %600 = vmatprep.subr.bf16.mxu0 0
      %601 = vmatpush1.bf16.msra.mxu0 %v507
      %602 = vmatprep.subr.bf16.mxu0 0
      %603 = vmatpush1.bf16.msra.mxu0 %v508
      %604 = vmatprep.subr.bf16.mxu0 0
      %605 = vmatpush1.bf16.msra.mxu0 %v509
      %606 = vmatprep.subr.bf16.mxu0 0
      %607 = vmatpush1.bf16.msra.mxu0 %v510
      %608 = vmatprep.subr.bf16.mxu0 0
      %609 = vmatpush1.bf16.msra.mxu0 %v511
      %610 = vmatprep.subr.bf16.mxu0 0
      %611 = vmatpush1.bf16.msra.mxu0 %v512
      %612 = vmatprep.subr.bf16.mxu0 0
      %613 = vmatpush1.bf16.msra.mxu0 %v513
      %614 = vmatprep.subr.bf16.mxu0 0
      %615 = vmatpush1.bf16.msra.mxu0 %v514
      %616 = vmatprep.subr.bf16.mxu0 0
      %617 = vmatpush1.bf16.msra.mxu0 %v515
      %618 = vmatprep.subr.bf16.mxu0 0
      %619 = vmatpush1.bf16.msra.mxu0 %v516
      %620 = vmatprep.subr.bf16.mxu0 0
      %621 = vmatpush1.bf16.msra.mxu0 %v517
      %622 = vmatprep.mubr.bf16.mxu0 %v353
      %623 = vmatmul.mubr.bf16.gmra.mrb[0].mxu0 %v346
      %v624 = vpop.f32.mrb[0].mxu0
      %v625 = vadd.f32 %v585, %v624
      %v626 = vpop.f32.mrb[0].mxu0
      %v627 = vpop.f32.mrb[0].mxu0
      %v628 = vpop.f32.mrb[0].mxu0
      %629 = vdwg.mxu0
      %v632 = vunpack.c.l.b16 %v175
      %v633 = vunpack.c.h.b16 %v175
      %v634 = vunpack.c.l.b16 %v176
      %v635 = vunpack.c.h.b16 %v176
      %v636 = vpack.c.b16 %v632, %v632
      %v637 = vpack.c.b16 %v633, %v633
      %v638 = vpack.c.b16 %v634, %v634
      %v639 = vpack.c.b16 %v635, %v635
      %v708 = vunpack.c.l.b16 %v177
      %v709 = vunpack.c.l.b16 %v178
      %v710 = vunpack.c.l.b16 %v179
      %v711 = vunpack.c.l.b16 %v180
      %v712 = vunpack.c.l.b16 %v181
      %v713 = vunpack.c.l.b16 %v182
      %v714 = vunpack.c.l.b16 %v183
      %v715 = vunpack.c.l.b16 %v184
      %v716 = vunpack.c.l.b16 %v185
      %v717 = vunpack.c.l.b16 %v186
      %v718 = vunpack.c.l.b16 %v187
      %v719 = vunpack.c.l.b16 %v188
      %v720 = vunpack.c.l.b16 %v189
      %v721 = vunpack.c.l.b16 %v190
      %v722 = vunpack.c.l.b16 %v191
      %v723 = vunpack.c.l.b16 %v192
      %v724 = vunpack.c.l.b16 %v193
      %v725 = vunpack.c.l.b16 %v194
      %v726 = vunpack.c.l.b16 %v195
      %v727 = vunpack.c.l.b16 %v196
      %v728 = vunpack.c.l.b16 %v197
      %v729 = vunpack.c.l.b16 %v198
      %v730 = vunpack.c.l.b16 %v199
      %v731 = vunpack.c.l.b16 %v200
      %v732 = vunpack.c.l.b16 %v201
      %v733 = vunpack.c.l.b16 %v202
      %v734 = vunpack.c.l.b16 %v203
      %v735 = vunpack.c.l.b16 %v204
      %v736 = vunpack.c.l.b16 %v205
      %v737 = vunpack.c.l.b16 %v206
      %v738 = vunpack.c.l.b16 %v207
      %v739 = vunpack.c.l.b16 %v208
      %v740 = vunpack.c.l.b16 %v209
      %v741 = vunpack.c.l.b16 %v210
      %v742 = vunpack.c.l.b16 %v211
      %v743 = vunpack.c.l.b16 %v212
      %v744 = vunpack.c.l.b16 %v213
      %v745 = vunpack.c.l.b16 %v214
      %v746 = vunpack.c.l.b16 %v215
      %v747 = vunpack.c.l.b16 %v216
      %v748 = vunpack.c.l.b16 %v217
      %v749 = vunpack.c.l.b16 %v218
      %v750 = vunpack.c.l.b16 %v219
      %v751 = vunpack.c.l.b16 %v220
      %v752 = vunpack.c.l.b16 %v221
      %v753 = vunpack.c.l.b16 %v222
      %v754 = vunpack.c.l.b16 %v223
      %v755 = vunpack.c.l.b16 %v224
      %v756 = vunpack.c.l.b16 %v225
      %v757 = vunpack.c.l.b16 %v226
      %v758 = vunpack.c.l.b16 %v227
      %v759 = vunpack.c.l.b16 %v228
      %v760 = vunpack.c.l.b16 %v229
      %v761 = vunpack.c.l.b16 %v230
      %v762 = vunpack.c.l.b16 %v231
      %v763 = vunpack.c.l.b16 %v232
      %v764 = vunpack.c.l.b16 %v233
      %v765 = vunpack.c.l.b16 %v234
      %v766 = vunpack.c.l.b16 %v235
      %v767 = vunpack.c.l.b16 %v236
      %v768 = vunpack.c.l.b16 %v237
      %v769 = vunpack.c.l.b16 %v238
      %v770 = vunpack.c.l.b16 %v239
      %v771 = vunpack.c.l.b16 %v240
      %v772 = vpack.c.b16 %v709, %v708
      %v773 = vpack.c.b16 %v711, %v710
      %v774 = vpack.c.b16 %v713, %v712
      %v775 = vpack.c.b16 %v715, %v714
      %v776 = vpack.c.b16 %v717, %v716
      %v777 = vpack.c.b16 %v719, %v718
      %v778 = vpack.c.b16 %v721, %v720
      %v779 = vpack.c.b16 %v723, %v722
      %v780 = vpack.c.b16 %v725, %v724
      %v781 = vpack.c.b16 %v727, %v726
      %v782 = vpack.c.b16 %v729, %v728
      %v783 = vpack.c.b16 %v731, %v730
      %v784 = vpack.c.b16 %v733, %v732
      %v785 = vpack.c.b16 %v735, %v734
      %v786 = vpack.c.b16 %v737, %v736
      %v787 = vpack.c.b16 %v739, %v738
      %v788 = vpack.c.b16 %v741, %v740
      %v789 = vpack.c.b16 %v743, %v742
      %v790 = vpack.c.b16 %v745, %v744
      %v791 = vpack.c.b16 %v747, %v746
      %v792 = vpack.c.b16 %v749, %v748
      %v793 = vpack.c.b16 %v751, %v750
      %v794 = vpack.c.b16 %v753, %v752
      %v795 = vpack.c.b16 %v755, %v754
      %v796 = vpack.c.b16 %v757, %v756
      %v797 = vpack.c.b16 %v759, %v758
      %v798 = vpack.c.b16 %v761, %v760
      %v799 = vpack.c.b16 %v763, %v762
      %v800 = vpack.c.b16 %v765, %v764
      %v801 = vpack.c.b16 %v767, %v766
      %v802 = vpack.c.b16 %v769, %v768
      %v803 = vpack.c.b16 %v771, %v770
      %836 = vmatprep.subr.bf16.mxu0 0
      %837 = vmatpush1.bf16.msra.mxu0 %v772
      %838 = vmatprep.subr.bf16.mxu0 0
      %839 = vmatpush1.bf16.msra.mxu0 %v773
      %840 = vmatprep.subr.bf16.mxu0 0
      %841 = vmatpush1.bf16.msra.mxu0 %v774
      %842 = vmatprep.subr.bf16.mxu0 0
      %843 = vmatpush1.bf16.msra.mxu0 %v775
      %844 = vmatprep.subr.bf16.mxu0 0
      %845 = vmatpush1.bf16.msra.mxu0 %v776
      %846 = vmatprep.subr.bf16.mxu0 0
      %847 = vmatpush1.bf16.msra.mxu0 %v777
      %848 = vmatprep.subr.bf16.mxu0 0
      %849 = vmatpush1.bf16.msra.mxu0 %v778
      %850 = vmatprep.subr.bf16.mxu0 0
      %851 = vmatpush1.bf16.msra.mxu0 %v779
      %852 = vmatprep.subr.bf16.mxu0 0
      %853 = vmatpush1.bf16.msra.mxu0 %v780
      %854 = vmatprep.subr.bf16.mxu0 0
      %855 = vmatpush1.bf16.msra.mxu0 %v781
      %856 = vmatprep.subr.bf16.mxu0 0
      %857 = vmatpush1.bf16.msra.mxu0 %v782
      %858 = vmatprep.subr.bf16.mxu0 0
      %859 = vmatpush1.bf16.msra.mxu0 %v783
      %860 = vmatprep.subr.bf16.mxu0 0
      %861 = vmatpush1.bf16.msra.mxu0 %v784
      %862 = vmatprep.subr.bf16.mxu0 0
      %863 = vmatpush1.bf16.msra.mxu0 %v785
      %864 = vmatprep.subr.bf16.mxu0 0
      %865 = vmatpush1.bf16.msra.mxu0 %v786
      %866 = vmatprep.subr.bf16.mxu0 0
      %867 = vmatpush1.bf16.msra.mxu0 %v787
      %868 = vmatprep.mubr.bf16.mxu0 %v637
      %869 = vmatmul.mubr.bf16.gmra.mrb[0].mxu0 %v636
      %v870 = vpop.f32.mrb[0].mxu0
      %v871 = vadd.f32 %v625, %v870
      %v872 = vpop.f32.mrb[0].mxu0
      %v873 = vpop.f32.mrb[0].mxu0
      %v874 = vpop.f32.mrb[0].mxu0
      %875 = vdwg.mxu0
      %876 = vmatprep.subr.bf16.mxu0 0
      %877 = vmatpush1.bf16.msra.mxu0 %v788
      %878 = vmatprep.subr.bf16.mxu0 0
      %879 = vmatpush1.bf16.msra.mxu0 %v789
      %880 = vmatprep.subr.bf16.mxu0 0
      %881 = vmatpush1.bf16.msra.mxu0 %v790
      %882 = vmatprep.subr.bf16.mxu0 0
      %883 = vmatpush1.bf16.msra.mxu0 %v791
      %884 = vmatprep.subr.bf16.mxu0 0
      %885 = vmatpush1.bf16.msra.mxu0 %v792
      %886 = vmatprep.subr.bf16.mxu0 0
      %887 = vmatpush1.bf16.msra.mxu0 %v793
      %888 = vmatprep.subr.bf16.mxu0 0
      %889 = vmatpush1.bf16.msra.mxu0 %v794
      %890 = vmatprep.subr.bf16.mxu0 0
      %891 = vmatpush1.bf16.msra.mxu0 %v795
      %892 = vmatprep.subr.bf16.mxu0 0
      %893 = vmatpush1.bf16.msra.mxu0 %v796
      %894 = vmatprep.subr.bf16.mxu0 0
      %895 = vmatpush1.bf16.msra.mxu0 %v797
      %896 = vmatprep.subr.bf16.mxu0 0
      %897 = vmatpush1.bf16.msra.mxu0 %v798
      %898 = vmatprep.subr.bf16.mxu0 0
      %899 = vmatpush1.bf16.msra.mxu0 %v799
      %900 = vmatprep.subr.bf16.mxu0 0
      %901 = vmatpush1.bf16.msra.mxu0 %v800
      %902 = vmatprep.subr.bf16.mxu0 0
      %903 = vmatpush1.bf16.msra.mxu0 %v801
      %904 = vmatprep.subr.bf16.mxu0 0
      %905 = vmatpush1.bf16.msra.mxu0 %v802
      %906 = vmatprep.subr.bf16.mxu0 0
      %907 = vmatpush1.bf16.msra.mxu0 %v803
      %908 = vmatprep.mubr.bf16.mxu0 %v639
      %909 = vmatmul.mubr.bf16.gmra.mrb[0].mxu0 %v638
      %v910 = vpop.f32.mrb[0].mxu0
      %v911 = vadd.f32 %v871, %v910
      %v912 = vpop.f32.mrb[0].mxu0
      %v913 = vpop.f32.mrb[0].mxu0
      %v914 = vpop.f32.mrb[0].mxu0
      %915 = vdwg.mxu0
      %v916 = vld [vmem:[%s168] sm:$0xee]
      %v917 = vld [vmem:[%s168 + $0x8] sm:$0xee]
      %s918 = scalar_lea.vmem %s1, 512
      %v919 = vld [vmem:[%s918] sm:$0xf]
      %v920 = vld [vmem:[%s918 + $0x4] sm:$0xf]
      %v921 = vld [vmem:[%s918 + $0x8] sm:$0xf]
      %v922 = vld [vmem:[%s918 + $0xc] sm:$0xf]
      %v923 = vld [vmem:[%s918 + $0x10] sm:$0xf]
      %v924 = vld [vmem:[%s918 + $0x14] sm:$0xf]
      %v925 = vld [vmem:[%s918 + $0x18] sm:$0xf]
      %v926 = vld [vmem:[%s918 + $0x1c] sm:$0xf]
      %v927 = vld [vmem:[%s918 + $0x20] sm:$0xf]
      %v928 = vld [vmem:[%s918 + $0x24] sm:$0xf]
      %v929 = vld [vmem:[%s918 + $0x28] sm:$0xf]
      %v930 = vld [vmem:[%s918 + $0x2c] sm:$0xf]
      %v931 = vld [vmem:[%s918 + $0x30] sm:$0xf]
      %v932 = vld [vmem:[%s918 + $0x34] sm:$0xf]
      %v933 = vld [vmem:[%s918 + $0x38] sm:$0xf]
      %v934 = vld [vmem:[%s918 + $0x3c] sm:$0xf]
      %v935 = vld [vmem:[%s918 + $0x40] sm:$0xf]
      %v936 = vld [vmem:[%s918 + $0x44] sm:$0xf]
      %v937 = vld [vmem:[%s918 + $0x48] sm:$0xf]
      %v938 = vld [vmem:[%s918 + $0x4c] sm:$0xf]
      %v939 = vld [vmem:[%s918 + $0x50] sm:$0xf]
      %v940 = vld [vmem:[%s918 + $0x54] sm:$0xf]
      %v941 = vld [vmem:[%s918 + $0x58] sm:$0xf]
      %v942 = vld [vmem:[%s918 + $0x5c] sm:$0xf]
      %v943 = vld [vmem:[%s918 + $0x60] sm:$0xf]
      %v944 = vld [vmem:[%s918 + $0x64] sm:$0xf]
      %v945 = vld [vmem:[%s918 + $0x68] sm:$0xf]
      %v946 = vld [vmem:[%s918 + $0x6c] sm:$0xf]
      %v947 = vld [vmem:[%s918 + $0x70] sm:$0xf]
      %v948 = vld [vmem:[%s918 + $0x74] sm:$0xf]
      %v949 = vld [vmem:[%s918 + $0x78] sm:$0xf]
      %v950 = vld [vmem:[%s918 + $0x7c] sm:$0xf]
      %v951 = vld [vmem:[%s918 + $0x80] sm:$0xf]
      %v952 = vld [vmem:[%s918 + $0x84] sm:$0xf]
      %v953 = vld [vmem:[%s918 + $0x88] sm:$0xf]
      %v954 = vld [vmem:[%s918 + $0x8c] sm:$0xf]
      %v955 = vld [vmem:[%s918 + $0x90] sm:$0xf]
      %v956 = vld [vmem:[%s918 + $0x94] sm:$0xf]
      %v957 = vld [vmem:[%s918 + $0x98] sm:$0xf]
      %v958 = vld [vmem:[%s918 + $0x9c] sm:$0xf]
      %v959 = vld [vmem:[%s918 + $0xa0] sm:$0xf]
      %v960 = vld [vmem:[%s918 + $0xa4] sm:$0xf]
      %v961 = vld [vmem:[%s918 + $0xa8] sm:$0xf]
      %v962 = vld [vmem:[%s918 + $0xac] sm:$0xf]
      %v963 = vld [vmem:[%s918 + $0xb0] sm:$0xf]
      %v964 = vld [vmem:[%s918 + $0xb4] sm:$0xf]
      %v965 = vld [vmem:[%s918 + $0xb8] sm:$0xf]
      %v966 = vld [vmem:[%s918 + $0xbc] sm:$0xf]
      %v967 = vld [vmem:[%s918 + $0xc0] sm:$0xf]
      %v968 = vld [vmem:[%s918 + $0xc4] sm:$0xf]
      %v969 = vld [vmem:[%s918 + $0xc8] sm:$0xf]
      %v970 = vld [vmem:[%s918 + $0xcc] sm:$0xf]
      %v971 = vld [vmem:[%s918 + $0xd0] sm:$0xf]
      %v972 = vld [vmem:[%s918 + $0xd4] sm:$0xf]
      %v973 = vld [vmem:[%s918 + $0xd8] sm:$0xf]
      %v974 = vld [vmem:[%s918 + $0xdc] sm:$0xf]
      %v975 = vld [vmem:[%s918 + $0xe0] sm:$0xf]
      %v976 = vld [vmem:[%s918 + $0xe4] sm:$0xf]
      %v977 = vld [vmem:[%s918 + $0xe8] sm:$0xf]
      %v978 = vld [vmem:[%s918 + $0xec] sm:$0xf]
      %v979 = vld [vmem:[%s918 + $0xf0] sm:$0xf]
      %v980 = vld [vmem:[%s918 + $0xf4] sm:$0xf]
      %v981 = vld [vmem:[%s918 + $0xf8] sm:$0xf]
      %v982 = vld [vmem:[%s918 + $0xfc] sm:$0xf]
      %v985 = vunpack.c.l.b16 %v916
      %v986 = vunpack.c.h.b16 %v916
      %v987 = vunpack.c.l.b16 %v917
      %v988 = vunpack.c.h.b16 %v917
      %v989 = vpack.c.b16 %v318, %v985
      %v990 = vpack.c.b16 %v319, %v986
      %v991 = vpack.c.b16 %v320, %v987
      %v992 = vpack.c.b16 %v321, %v988
      %v993 = vrot.slane %v989, 1
      %v994 = vrot.slane %v990, 1
      %v995 = vrot.slane %v991, 1
      %v996 = vrot.slane %v992, 1
      %v1065 = vunpack.c.l.b16 %v919
      %v1066 = vunpack.c.l.b16 %v920
      %v1067 = vunpack.c.l.b16 %v921
      %v1068 = vunpack.c.l.b16 %v922
      %v1069 = vunpack.c.l.b16 %v923
      %v1070 = vunpack.c.l.b16 %v924
      %v1071 = vunpack.c.l.b16 %v925
      %v1072 = vunpack.c.l.b16 %v926
      %v1073 = vunpack.c.l.b16 %v927
      %v1074 = vunpack.c.l.b16 %v928
      %v1075 = vunpack.c.l.b16 %v929
      %v1076 = vunpack.c.l.b16 %v930
      %v1077 = vunpack.c.l.b16 %v931
      %v1078 = vunpack.c.l.b16 %v932
      %v1079 = vunpack.c.l.b16 %v933
      %v1080 = vunpack.c.l.b16 %v934
      %v1081 = vunpack.c.l.b16 %v935
      %v1082 = vunpack.c.l.b16 %v936
      %v1083 = vunpack.c.l.b16 %v937
      %v1084 = vunpack.c.l.b16 %v938
      %v1085 = vunpack.c.l.b16 %v939
      %v1086 = vunpack.c.l.b16 %v940
      %v1087 = vunpack.c.l.b16 %v941
      %v1088 = vunpack.c.l.b16 %v942
      %v1089 = vunpack.c.l.b16 %v943
      %v1090 = vunpack.c.l.b16 %v944
      %v1091 = vunpack.c.l.b16 %v945
      %v1092 = vunpack.c.l.b16 %v946
      %v1093 = vunpack.c.l.b16 %v947
      %v1094 = vunpack.c.l.b16 %v948
      %v1095 = vunpack.c.l.b16 %v949
      %v1096 = vunpack.c.l.b16 %v950
      %v1097 = vunpack.c.l.b16 %v951
      %v1098 = vunpack.c.l.b16 %v952
      %v1099 = vunpack.c.l.b16 %v953
      %v1100 = vunpack.c.l.b16 %v954
      %v1101 = vunpack.c.l.b16 %v955
      %v1102 = vunpack.c.l.b16 %v956
      %v1103 = vunpack.c.l.b16 %v957
      %v1104 = vunpack.c.l.b16 %v958
      %v1105 = vunpack.c.l.b16 %v959
      %v1106 = vunpack.c.l.b16 %v960
      %v1107 = vunpack.c.l.b16 %v961
      %v1108 = vunpack.c.l.b16 %v962
      %v1109 = vunpack.c.l.b16 %v963
      %v1110 = vunpack.c.l.b16 %v964
      %v1111 = vunpack.c.l.b16 %v965
      %v1112 = vunpack.c.l.b16 %v966
      %v1113 = vunpack.c.l.b16 %v967
      %v1114 = vunpack.c.l.b16 %v968
      %v1115 = vunpack.c.l.b16 %v969
      %v1116 = vunpack.c.l.b16 %v970
      %v1117 = vunpack.c.l.b16 %v971
      %v1118 = vunpack.c.l.b16 %v972
      %v1119 = vunpack.c.l.b16 %v973
      %v1120 = vunpack.c.l.b16 %v974
      %v1121 = vunpack.c.l.b16 %v975
      %v1122 = vunpack.c.l.b16 %v976
      %v1123 = vunpack.c.l.b16 %v977
      %v1124 = vunpack.c.l.b16 %v978
      %v1125 = vunpack.c.l.b16 %v979
      %v1126 = vunpack.c.l.b16 %v980
      %v1127 = vunpack.c.l.b16 %v981
      %v1128 = vunpack.c.l.b16 %v982
      %v1129 = vpack.c.b16 %v1066, %v1065
      %v1130 = vpack.c.b16 %v1068, %v1067
      %v1131 = vpack.c.b16 %v1070, %v1069
      %v1132 = vpack.c.b16 %v1072, %v1071
      %v1133 = vpack.c.b16 %v1074, %v1073
      %v1134 = vpack.c.b16 %v1076, %v1075
      %v1135 = vpack.c.b16 %v1078, %v1077
      %v1136 = vpack.c.b16 %v1080, %v1079
      %v1137 = vpack.c.b16 %v1082, %v1081
      %v1138 = vpack.c.b16 %v1084, %v1083
      %v1139 = vpack.c.b16 %v1086, %v1085
      %v1140 = vpack.c.b16 %v1088, %v1087
      %v1141 = vpack.c.b16 %v1090, %v1089
      %v1142 = vpack.c.b16 %v1092, %v1091
      %v1143 = vpack.c.b16 %v1094, %v1093
      %v1144 = vpack.c.b16 %v1096, %v1095
      %v1145 = vpack.c.b16 %v1098, %v1097
      %v1146 = vpack.c.b16 %v1100, %v1099
      %v1147 = vpack.c.b16 %v1102, %v1101
      %v1148 = vpack.c.b16 %v1104, %v1103
      %v1149 = vpack.c.b16 %v1106, %v1105
      %v1150 = vpack.c.b16 %v1108, %v1107
      %v1151 = vpack.c.b16 %v1110, %v1109
      %v1152 = vpack.c.b16 %v1112, %v1111
      %v1153 = vpack.c.b16 %v1114, %v1113
      %v1154 = vpack.c.b16 %v1116, %v1115
      %v1155 = vpack.c.b16 %v1118, %v1117
      %v1156 = vpack.c.b16 %v1120, %v1119
      %v1157 = vpack.c.b16 %v1122, %v1121
      %v1158 = vpack.c.b16 %v1124, %v1123
      %v1159 = vpack.c.b16 %v1126, %v1125
      %v1160 = vpack.c.b16 %v1128, %v1127
      %1193 = vmatprep.subr.bf16.mxu0 0
      %1194 = vmatpush1.bf16.msra.mxu0 %v1129
      %1195 = vmatprep.subr.bf16.mxu0 0
      %1196 = vmatpush1.bf16.msra.mxu0 %v1130
      %1197 = vmatprep.subr.bf16.mxu0 0
      %1198 = vmatpush1.bf16.msra.mxu0 %v1131
      %1199 = vmatprep.subr.bf16.mxu0 0
      %1200 = vmatpush1.bf16.msra.mxu0 %v1132
      %1201 = vmatprep.subr.bf16.mxu0 0
      %1202 = vmatpush1.bf16.msra.mxu0 %v1133
      %1203 = vmatprep.subr.bf16.mxu0 0
      %1204 = vmatpush1.bf16.msra.mxu0 %v1134
      %1205 = vmatprep.subr.bf16.mxu0 0
      %1206 = vmatpush1.bf16.msra.mxu0 %v1135
      %1207 = vmatprep.subr.bf16.mxu0 0
      %1208 = vmatpush1.bf16.msra.mxu0 %v1136
      %1209 = vmatprep.subr.bf16.mxu0 0
      %1210 = vmatpush1.bf16.msra.mxu0 %v1137
      %1211 = vmatprep.subr.bf16.mxu0 0
      %1212 = vmatpush1.bf16.msra.mxu0 %v1138
      %1213 = vmatprep.subr.bf16.mxu0 0
      %1214 = vmatpush1.bf16.msra.mxu0 %v1139
      %1215 = vmatprep.subr.bf16.mxu0 0
      %1216 = vmatpush1.bf16.msra.mxu0 %v1140
      %1217 = vmatprep.subr.bf16.mxu0 0
      %1218 = vmatpush1.bf16.msra.mxu0 %v1141
      %1219 = vmatprep.subr.bf16.mxu0 0
      %1220 = vmatpush1.bf16.msra.mxu0 %v1142
      %1221 = vmatprep.subr.bf16.mxu0 0
      %1222 = vmatpush1.bf16.msra.mxu0 %v1143
      %1223 = vmatprep.subr.bf16.mxu0 0
      %1224 = vmatpush1.bf16.msra.mxu0 %v1144
      %1225 = vmatprep.mubr.bf16.mxu0 %v994
      %1226 = vmatmul.mubr.bf16.gmra.mrb[0].mxu0 %v993
      %v1227 = vpop.f32.mrb[0].mxu0
      %v1228 = vadd.f32 0.0, %v1227
      %v1229 = vpop.f32.mrb[0].mxu0
      %v1230 = vpop.f32.mrb[0].mxu0
      %v1231 = vpop.f32.mrb[0].mxu0
      %1232 = vdwg.mxu0
      %1233 = vmatprep.subr.bf16.mxu0 0
      %1234 = vmatpush1.bf16.msra.mxu0 %v1145
      %1235 = vmatprep.subr.bf16.mxu0 0
      %1236 = vmatpush1.bf16.msra.mxu0 %v1146
      %1237 = vmatprep.subr.bf16.mxu0 0
      %1238 = vmatpush1.bf16.msra.mxu0 %v1147
      %1239 = vmatprep.subr.bf16.mxu0 0
      %1240 = vmatpush1.bf16.msra.mxu0 %v1148
      %1241 = vmatprep.subr.bf16.mxu0 0
      %1242 = vmatpush1.bf16.msra.mxu0 %v1149
      %1243 = vmatprep.subr.bf16.mxu0 0
      %1244 = vmatpush1.bf16.msra.mxu0 %v1150
      %1245 = vmatprep.subr.bf16.mxu0 0
      %1246 = vmatpush1.bf16.msra.mxu0 %v1151
      %1247 = vmatprep.subr.bf16.mxu0 0
      %1248 = vmatpush1.bf16.msra.mxu0 %v1152
      %1249 = vmatprep.subr.bf16.mxu0 0
      %1250 = vmatpush1.bf16.msra.mxu0 %v1153
      %1251 = vmatprep.subr.bf16.mxu0 0
      %1252 = vmatpush1.bf16.msra.mxu0 %v1154
      %1253 = vmatprep.subr.bf16.mxu0 0
      %1254 = vmatpush1.bf16.msra.mxu0 %v1155
      %1255 = vmatprep.subr.bf16.mxu0 0
      %1256 = vmatpush1.bf16.msra.mxu0 %v1156
      %1257 = vmatprep.subr.bf16.mxu0 0
      %1258 = vmatpush1.bf16.msra.mxu0 %v1157
      %1259 = vmatprep.subr.bf16.mxu0 0
      %1260 = vmatpush1.bf16.msra.mxu0 %v1158
      %1261 = vmatprep.subr.bf16.mxu0 0
      %1262 = vmatpush1.bf16.msra.mxu0 %v1159
      %1263 = vmatprep.subr.bf16.mxu0 0
      %1264 = vmatpush1.bf16.msra.mxu0 %v1160
      %1265 = vmatprep.mubr.bf16.mxu0 %v996
      %1266 = vmatmul.mubr.bf16.gmra.mrb[0].mxu0 %v995
      %v1267 = vpop.f32.mrb[0].mxu0
      %v1268 = vadd.f32 %v1228, %v1267
      %v1269 = vpop.f32.mrb[0].mxu0
      %v1270 = vpop.f32.mrb[0].mxu0
      %v1271 = vpop.f32.mrb[0].mxu0
      %1272 = vdwg.mxu0
      %v1273 = vadd.f32 %v911, %v1268
      %v1274 = vld [vmem:[%s168 + $0x10] sm:$0x33]
      %v1275 = vld [vmem:[%s168 + $0x18] sm:$0x33]
      %s1276 = scalar_lea.vmem %s1, 768
      %v1277 = vld [vmem:[%s1276] sm:$0xf]
      %v1278 = vld [vmem:[%s1276 + $0x4] sm:$0xf]
      %v1279 = vld [vmem:[%s1276 + $0x8] sm:$0xf]
      %v1280 = vld [vmem:[%s1276 + $0xc] sm:$0xf]
      %v1281 = vld [vmem:[%s1276 + $0x10] sm:$0xf]
      %v1282 = vld [vmem:[%s1276 + $0x14] sm:$0xf]
      %v1283 = vld [vmem:[%s1276 + $0x18] sm:$0xf]
      %v1284 = vld [vmem:[%s1276 + $0x1c] sm:$0xf]
      %v1285 = vld [vmem:[%s1276 + $0x20] sm:$0xf]
      %v1286 = vld [vmem:[%s1276 + $0x24] sm:$0xf]
      %v1287 = vld [vmem:[%s1276 + $0x28] sm:$0xf]
      %v1288 = vld [vmem:[%s1276 + $0x2c] sm:$0xf]
      %v1289 = vld [vmem:[%s1276 + $0x30] sm:$0xf]
      %v1290 = vld [vmem:[%s1276 + $0x34] sm:$0xf]
      %v1291 = vld [vmem:[%s1276 + $0x38] sm:$0xf]
      %v1292 = vld [vmem:[%s1276 + $0x3c] sm:$0xf]
      %v1293 = vld [vmem:[%s1276 + $0x40] sm:$0xf]
      %v1294 = vld [vmem:[%s1276 + $0x44] sm:$0xf]
      %v1295 = vld [vmem:[%s1276 + $0x48] sm:$0xf]
      %v1296 = vld [vmem:[%s1276 + $0x4c] sm:$0xf]
      %v1297 = vld [vmem:[%s1276 + $0x50] sm:$0xf]
      %v1298 = vld [vmem:[%s1276 + $0x54] sm:$0xf]
      %v1299 = vld [vmem:[%s1276 + $0x58] sm:$0xf]
      %v1300 = vld [vmem:[%s1276 + $0x5c] sm:$0xf]
      %v1301 = vld [vmem:[%s1276 + $0x60] sm:$0xf]
      %v1302 = vld [vmem:[%s1276 + $0x64] sm:$0xf]
      %v1303 = vld [vmem:[%s1276 + $0x68] sm:$0xf]
      %v1304 = vld [vmem:[%s1276 + $0x6c] sm:$0xf]
      %v1305 = vld [vmem:[%s1276 + $0x70] sm:$0xf]
      %v1306 = vld [vmem:[%s1276 + $0x74] sm:$0xf]
      %v1307 = vld [vmem:[%s1276 + $0x78] sm:$0xf]
      %v1308 = vld [vmem:[%s1276 + $0x7c] sm:$0xf]
      %v1309 = vld [vmem:[%s1276 + $0x80] sm:$0xf]
      %v1310 = vld [vmem:[%s1276 + $0x84] sm:$0xf]
      %v1311 = vld [vmem:[%s1276 + $0x88] sm:$0xf]
      %v1312 = vld [vmem:[%s1276 + $0x8c] sm:$0xf]
      %v1313 = vld [vmem:[%s1276 + $0x90] sm:$0xf]
      %v1314 = vld [vmem:[%s1276 + $0x94] sm:$0xf]
      %v1315 = vld [vmem:[%s1276 + $0x98] sm:$0xf]
      %v1316 = vld [vmem:[%s1276 + $0x9c] sm:$0xf]
      %v1317 = vld [vmem:[%s1276 + $0xa0] sm:$0xf]
      %v1318 = vld [vmem:[%s1276 + $0xa4] sm:$0xf]
      %v1319 = vld [vmem:[%s1276 + $0xa8] sm:$0xf]
      %v1320 = vld [vmem:[%s1276 + $0xac] sm:$0xf]
      %v1321 = vld [vmem:[%s1276 + $0xb0] sm:$0xf]
      %v1322 = vld [vmem:[%s1276 + $0xb4] sm:$0xf]
      %v1323 = vld [vmem:[%s1276 + $0xb8] sm:$0xf]
      %v1324 = vld [vmem:[%s1276 + $0xbc] sm:$0xf]
      %v1325 = vld [vmem:[%s1276 + $0xc0] sm:$0xf]
      %v1326 = vld [vmem:[%s1276 + $0xc4] sm:$0xf]
      %v1327 = vld [vmem:[%s1276 + $0xc8] sm:$0xf]
      %v1328 = vld [vmem:[%s1276 + $0xcc] sm:$0xf]
      %v1329 = vld [vmem:[%s1276 + $0xd0] sm:$0xf]
      %v1330 = vld [vmem:[%s1276 + $0xd4] sm:$0xf]
      %v1331 = vld [vmem:[%s1276 + $0xd8] sm:$0xf]
      %v1332 = vld [vmem:[%s1276 + $0xdc] sm:$0xf]
      %v1333 = vld [vmem:[%s1276 + $0xe0] sm:$0xf]
      %v1334 = vld [vmem:[%s1276 + $0xe4] sm:$0xf]
      %v1335 = vld [vmem:[%s1276 + $0xe8] sm:$0xf]
      %v1336 = vld [vmem:[%s1276 + $0xec] sm:$0xf]
      %v1337 = vld [vmem:[%s1276 + $0xf0] sm:$0xf]
      %v1338 = vld [vmem:[%s1276 + $0xf4] sm:$0xf]
      %v1339 = vld [vmem:[%s1276 + $0xf8] sm:$0xf]
      %v1340 = vld [vmem:[%s1276 + $0xfc] sm:$0xf]
      %v1343 = vunpack.c.l.b16 %v1274
      %v1344 = vunpack.c.h.b16 %v1274
      %v1345 = vunpack.c.l.b16 %v1275
      %v1346 = vunpack.c.h.b16 %v1275
      %v1347 = vpack.c.b16 %v1343, %v985
      %v1348 = vpack.c.b16 %v1344, %v986
      %v1349 = vpack.c.b16 %v1345, %v987
      %v1350 = vpack.c.b16 %v1346, %v988
      %v1352 = vshrl.u32 %v1347, 16
      %v1354 = vrot.slane %v1352, 1
      %v1355 = vshll.u32 %v1347, 16
      %v1357 = vrot.slane %v1355, 2
      %v1358 = vor.u32 %v1354, %v1357
      %v1360 = vshrl.u32 %v1348, 16
      %v1362 = vrot.slane %v1360, 1
      %v1363 = vshll.u32 %v1348, 16
      %v1365 = vrot.slane %v1363, 2
      %v1366 = vor.u32 %v1362, %v1365
      %v1368 = vshrl.u32 %v1349, 16
      %v1370 = vrot.slane %v1368, 1
      %v1371 = vshll.u32 %v1349, 16
      %v1373 = vrot.slane %v1371, 2
      %v1374 = vor.u32 %v1370, %v1373
      %v1376 = vshrl.u32 %v1350, 16
      %v1378 = vrot.slane %v1376, 1
      %v1379 = vshll.u32 %v1350, 16
      %v1381 = vrot.slane %v1379, 2
      %v1382 = vor.u32 %v1378, %v1381
      %v1451 = vunpack.c.l.b16 %v1277
      %v1452 = vunpack.c.l.b16 %v1278
      %v1453 = vunpack.c.l.b16 %v1279
      %v1454 = vunpack.c.l.b16 %v1280
      %v1455 = vunpack.c.l.b16 %v1281
      %v1456 = vunpack.c.l.b16 %v1282
      %v1457 = vunpack.c.l.b16 %v1283
      %v1458 = vunpack.c.l.b16 %v1284
      %v1459 = vunpack.c.l.b16 %v1285
      %v1460 = vunpack.c.l.b16 %v1286
      %v1461 = vunpack.c.l.b16 %v1287
      %v1462 = vunpack.c.l.b16 %v1288
      %v1463 = vunpack.c.l.b16 %v1289
      %v1464 = vunpack.c.l.b16 %v1290
      %v1465 = vunpack.c.l.b16 %v1291
      %v1466 = vunpack.c.l.b16 %v1292
      %v1467 = vunpack.c.l.b16 %v1293
      %v1468 = vunpack.c.l.b16 %v1294
      %v1469 = vunpack.c.l.b16 %v1295
      %v1470 = vunpack.c.l.b16 %v1296
      %v1471 = vunpack.c.l.b16 %v1297
      %v1472 = vunpack.c.l.b16 %v1298
      %v1473 = vunpack.c.l.b16 %v1299
      %v1474 = vunpack.c.l.b16 %v1300
      %v1475 = vunpack.c.l.b16 %v1301
      %v1476 = vunpack.c.l.b16 %v1302
      %v1477 = vunpack.c.l.b16 %v1303
      %v1478 = vunpack.c.l.b16 %v1304
      %v1479 = vunpack.c.l.b16 %v1305
      %v1480 = vunpack.c.l.b16 %v1306
      %v1481 = vunpack.c.l.b16 %v1307
      %v1482 = vunpack.c.l.b16 %v1308
      %v1483 = vunpack.c.l.b16 %v1309
      %v1484 = vunpack.c.l.b16 %v1310
      %v1485 = vunpack.c.l.b16 %v1311
      %v1486 = vunpack.c.l.b16 %v1312
      %v1487 = vunpack.c.l.b16 %v1313
      %v1488 = vunpack.c.l.b16 %v1314
      %v1489 = vunpack.c.l.b16 %v1315
      %v1490 = vunpack.c.l.b16 %v1316
      %v1491 = vunpack.c.l.b16 %v1317
      %v1492 = vunpack.c.l.b16 %v1318
      %v1493 = vunpack.c.l.b16 %v1319
      %v1494 = vunpack.c.l.b16 %v1320
      %v1495 = vunpack.c.l.b16 %v1321
      %v1496 = vunpack.c.l.b16 %v1322
      %v1497 = vunpack.c.l.b16 %v1323
      %v1498 = vunpack.c.l.b16 %v1324
      %v1499 = vunpack.c.l.b16 %v1325
      %v1500 = vunpack.c.l.b16 %v1326
      %v1501 = vunpack.c.l.b16 %v1327
      %v1502 = vunpack.c.l.b16 %v1328
      %v1503 = vunpack.c.l.b16 %v1329
      %v1504 = vunpack.c.l.b16 %v1330
      %v1505 = vunpack.c.l.b16 %v1331
      %v1506 = vunpack.c.l.b16 %v1332
      %v1507 = vunpack.c.l.b16 %v1333
      %v1508 = vunpack.c.l.b16 %v1334
      %v1509 = vunpack.c.l.b16 %v1335
      %v1510 = vunpack.c.l.b16 %v1336
      %v1511 = vunpack.c.l.b16 %v1337
      %v1512 = vunpack.c.l.b16 %v1338
      %v1513 = vunpack.c.l.b16 %v1339
      %v1514 = vunpack.c.l.b16 %v1340
      %v1515 = vpack.c.b16 %v1452, %v1451
      %v1516 = vpack.c.b16 %v1454, %v1453
      %v1517 = vpack.c.b16 %v1456, %v1455
      %v1518 = vpack.c.b16 %v1458, %v1457
      %v1519 = vpack.c.b16 %v1460, %v1459
      %v1520 = vpack.c.b16 %v1462, %v1461
      %v1521 = vpack.c.b16 %v1464, %v1463
      %v1522 = vpack.c.b16 %v1466, %v1465
      %v1523 = vpack.c.b16 %v1468, %v1467
      %v1524 = vpack.c.b16 %v1470, %v1469
      %v1525 = vpack.c.b16 %v1472, %v1471
      %v1526 = vpack.c.b16 %v1474, %v1473
      %v1527 = vpack.c.b16 %v1476, %v1475
      %v1528 = vpack.c.b16 %v1478, %v1477
      %v1529 = vpack.c.b16 %v1480, %v1479
      %v1530 = vpack.c.b16 %v1482, %v1481
      %v1531 = vpack.c.b16 %v1484, %v1483
      %v1532 = vpack.c.b16 %v1486, %v1485
      %v1533 = vpack.c.b16 %v1488, %v1487
      %v1534 = vpack.c.b16 %v1490, %v1489
      %v1535 = vpack.c.b16 %v1492, %v1491
      %v1536 = vpack.c.b16 %v1494, %v1493
      %v1537 = vpack.c.b16 %v1496, %v1495
      %v1538 = vpack.c.b16 %v1498, %v1497
      %v1539 = vpack.c.b16 %v1500, %v1499
      %v1540 = vpack.c.b16 %v1502, %v1501
      %v1541 = vpack.c.b16 %v1504, %v1503
      %v1542 = vpack.c.b16 %v1506, %v1505
      %v1543 = vpack.c.b16 %v1508, %v1507
      %v1544 = vpack.c.b16 %v1510, %v1509
      %v1545 = vpack.c.b16 %v1512, %v1511
      %v1546 = vpack.c.b16 %v1514, %v1513
      %1579 = vmatprep.subr.bf16.mxu0 0
      %1580 = vmatpush1.bf16.msra.mxu0 %v1515
      %1581 = vmatprep.subr.bf16.mxu0 0
      %1582 = vmatpush1.bf16.msra.mxu0 %v1516
      %1583 = vmatprep.subr.bf16.mxu0 0
      %1584 = vmatpush1.bf16.msra.mxu0 %v1517
      %1585 = vmatprep.subr.bf16.mxu0 0
      %1586 = vmatpush1.bf16.msra.mxu0 %v1518
      %1587 = vmatprep.subr.bf16.mxu0 0
      %1588 = vmatpush1.bf16.msra.mxu0 %v1519
      %1589 = vmatprep.subr.bf16.mxu0 0
      %1590 = vmatpush1.bf16.msra.mxu0 %v1520
      %1591 = vmatprep.subr.bf16.mxu0 0
      %1592 = vmatpush1.bf16.msra.mxu0 %v1521
      %1593 = vmatprep.subr.bf16.mxu0 0
      %1594 = vmatpush1.bf16.msra.mxu0 %v1522
      %1595 = vmatprep.subr.bf16.mxu0 0
      %1596 = vmatpush1.bf16.msra.mxu0 %v1523
      %1597 = vmatprep.subr.bf16.mxu0 0
      %1598 = vmatpush1.bf16.msra.mxu0 %v1524
      %1599 = vmatprep.subr.bf16.mxu0 0
      %1600 = vmatpush1.bf16.msra.mxu0 %v1525
      %1601 = vmatprep.subr.bf16.mxu0 0
      %1602 = vmatpush1.bf16.msra.mxu0 %v1526
      %1603 = vmatprep.subr.bf16.mxu0 0
      %1604 = vmatpush1.bf16.msra.mxu0 %v1527
      %1605 = vmatprep.subr.bf16.mxu0 0
      %1606 = vmatpush1.bf16.msra.mxu0 %v1528
      %1607 = vmatprep.subr.bf16.mxu0 0
      %1608 = vmatpush1.bf16.msra.mxu0 %v1529
      %1609 = vmatprep.subr.bf16.mxu0 0
      %1610 = vmatpush1.bf16.msra.mxu0 %v1530
      %1611 = vmatprep.mubr.bf16.mxu0 %v1366
      %1612 = vmatmul.mubr.bf16.gmra.mrb[0].mxu0 %v1358
      %v1613 = vpop.f32.mrb[0].mxu0
      %v1614 = vadd.f32 0.0, %v1613
      %v1615 = vpop.f32.mrb[0].mxu0
      %v1616 = vpop.f32.mrb[0].mxu0
      %v1617 = vpop.f32.mrb[0].mxu0
      %1618 = vdwg.mxu0
      %1619 = vmatprep.subr.bf16.mxu0 0
      %1620 = vmatpush1.bf16.msra.mxu0 %v1531
      %1621 = vmatprep.subr.bf16.mxu0 0
      %1622 = vmatpush1.bf16.msra.mxu0 %v1532
      %1623 = vmatprep.subr.bf16.mxu0 0
      %1624 = vmatpush1.bf16.msra.mxu0 %v1533
      %1625 = vmatprep.subr.bf16.mxu0 0
      %1626 = vmatpush1.bf16.msra.mxu0 %v1534
      %1627 = vmatprep.subr.bf16.mxu0 0
      %1628 = vmatpush1.bf16.msra.mxu0 %v1535
      %1629 = vmatprep.subr.bf16.mxu0 0
      %1630 = vmatpush1.bf16.msra.mxu0 %v1536
      %1631 = vmatprep.subr.bf16.mxu0 0
      %1632 = vmatpush1.bf16.msra.mxu0 %v1537
      %1633 = vmatprep.subr.bf16.mxu0 0
      %1634 = vmatpush1.bf16.msra.mxu0 %v1538
      %1635 = vmatprep.subr.bf16.mxu0 0
      %1636 = vmatpush1.bf16.msra.mxu0 %v1539
      %1637 = vmatprep.subr.bf16.mxu0 0
      %1638 = vmatpush1.bf16.msra.mxu0 %v1540
      %1639 = vmatprep.subr.bf16.mxu0 0
      %1640 = vmatpush1.bf16.msra.mxu0 %v1541
      %1641 = vmatprep.subr.bf16.mxu0 0
      %1642 = vmatpush1.bf16.msra.mxu0 %v1542
      %1643 = vmatprep.subr.bf16.mxu0 0
      %1644 = vmatpush1.bf16.msra.mxu0 %v1543
      %1645 = vmatprep.subr.bf16.mxu0 0
      %1646 = vmatpush1.bf16.msra.mxu0 %v1544
      %1647 = vmatprep.subr.bf16.mxu0 0
      %1648 = vmatpush1.bf16.msra.mxu0 %v1545
      %1649 = vmatprep.subr.bf16.mxu0 0
      %1650 = vmatpush1.bf16.msra.mxu0 %v1546
      %1651 = vmatprep.mubr.bf16.mxu0 %v1382
      %1652 = vmatmul.mubr.bf16.gmra.mrb[0].mxu0 %v1374
      %v1653 = vpop.f32.mrb[0].mxu0
      %v1654 = vadd.f32 %v1614, %v1653
      %v1655 = vpop.f32.mrb[0].mxu0
      %v1656 = vpop.f32.mrb[0].mxu0
      %v1657 = vpop.f32.mrb[0].mxu0
      %1658 = vdwg.mxu0
      %v1659 = vadd.f32 %v1273, %v1654
      %v1660 = vld [vmem:[%s2] sm:$0x1]
      %v1662 = vlaneseq
      %v1663 = vshrl.u32 %v1662, 7
      %v1664 = vsub.s32 0, %v1663
      %v1665 = vrot.slane %v1660, %v1664
      %v1667 = vadd.f32 %v1659, %v1665
      %v1668 = vpack.c.bf16 %v1667, %v1667
      %1669 = vst [vmem:[%s173] sm:$0xf] %v1668
      %p1670 = scmp.lt.s32.totalorder %s14, 1
      %s1671 = scalar_select %p1670, %s14, 1
      %s1672 = smul.addr %s1671, 4
      %s1673 = scalar_lea.vmem %s3, %s1672
      // Predicated region
      $region33: #{latent_discriminator_forward.9} parent=31 // pred_check
        %p1674 = pneg %p100
      $region34: #{latent_discriminator_forward.9} parent=31 // pred_check_branch
        %1676 = sbr.rel (%p1674) target = $region36
      $region35: #{latent_discriminator_forward.9} parent=31 // pred_region
        _
      $region36: #{latent_discriminator_forward.9} parent=31 // pred_fallthru
        _
    $region32: #{latent_discriminator_forward.9} parent=5 // pred_fallthru
      _
    %p1677 = scmp.le.s32.totalorder 2, %s9
    // Predicated region
    $region37: #{latent_discriminator_forward.9} parent=5 // pred_check
      %p1678 = pneg %p1677
    $region38: #{latent_discriminator_forward.9} parent=5 // pred_check_branch
      %1680 = sbr.rel (%p1678) target = $region40
    $region39: #{latent_discriminator_forward.9} parent=5 // pred_region
      %s1681 = ssub.s32 %s9, 2
      // Predicated region
      $region41: #{latent_discriminator_forward.9} parent=39 // pred_check
        %p1682 = pneg %p106
      $region42: #{latent_discriminator_forward.9} parent=39 // pred_check_branch
        %1684 = sbr.rel (%p1682) target = $region44
      $region43: #{latent_discriminator_forward.9} parent=39 // pred_region
        %p1685 = scmp.lt.s32.totalorder %s15, 1
        %s1686 = scalar_select %p1685, %s15, 1
        %s1687 = smul.addr %s1686, 4
        %s1688 = scalar_lea.vmem %s3, %s1687
      $region44: #{latent_discriminator_forward.9} parent=39 // pred_fallthru
        _
    $region40: #{latent_discriminator_forward.9} parent=5 // pred_fallthru
      _
  $region6: #{latent_discriminator_forward.9} parent=0 // loop_footer
    %s13 = sadd.s32 1, %s9
  $region7: #{latent_discriminator_forward.9} parent=0 // loop_footer_branch
    %8 = sbr.rel target = $region3
  $region8: #{latent_discriminator_forward.9} parent=0 // loop_exit
    _

</llo_original>
